<compile_context>
chip_gen: v7x
topology: tpu7x:2x2x1
jax: 0.10.0
libtpu: 0.0.40
codegen_flags: <defaults>
</compile_context>

<pallas_src>
import functools

import jax
import jax.numpy as jnp
from jax.experimental import pallas as pl
from jax.experimental.pallas import tpu as pltpu

_INV_SQRT2 = 0.7071067811865476


def _vmem_budget_bytes():
    """Generation-aware VMEM budget: ~75% of physical (96 MiB on v5e/v6e,
    48 MiB on v7x), conservative fallback if the query is unavailable."""
    try:
        cap = int(pltpu.get_tpu_info().vmem_capacity_bytes)
    except Exception:
        cap = 64 * 1024 * 1024
    return min(int(cap * 3 // 4), 100 * 1024 * 1024)


def _pick_tile(dim, target, multiple):
    """Largest tile <= target that divides `dim` and is a multiple of
    `multiple`; falls back to the full dim (always layout-legal)."""
    if dim <= target:
        return dim
    for t in range(min(target, dim), 0, -1):
        if dim % t == 0 and t % multiple == 0:
            return t
    return dim  # NOTE: full-dim fallback; VMEM fit is re-checked by callers


# ---------------------------------------------------------------------------
# Kernel 1: fused LayerNorm1 -> single (E, 3*NH) QKV projection
# ---------------------------------------------------------------------------
def _ln_qkv_kernel(x_ref, g_ref, b_ref, w_ref, bias_ref,
                   q_ref, k_ref, v_ref, *, nh, eps):
    x = x_ref[...].astype(jnp.float32)
    mean = jnp.mean(x, axis=-1, keepdims=True)
    xc = x - mean
    var = jnp.mean(xc * xc, axis=-1, keepdims=True)
    xn = xc * jax.lax.rsqrt(var + eps) * g_ref[...] + b_ref[...]
    qkv = jnp.dot(xn.astype(w_ref.dtype), w_ref[...],
                  preferred_element_type=jnp.float32) + bias_ref[...]
    q_ref[...] = qkv[:, :nh].astype(q_ref.dtype)          # already * 1/sqrt(H)
    k_ref[...] = qkv[:, nh:2 * nh].astype(k_ref.dtype)
    v_ref[...] = qkv[:, 2 * nh:].astype(v_ref.dtype)


def qkv_project(x, ln1_w, ln1_b, w_qkv, b_qkv, *, nh, eps, vmem_limit):
    B, S, E = x.shape
    M = B * S
    tm = _pick_tile(M, 512 if vmem_limit >= 80 * 2**20 else 256, 8)
    x2 = x.reshape(M, E)
    kernel = functools.partial(_ln_qkv_kernel, nh=nh, eps=eps)
    const = lambda i: (0, 0)

    q2, k2, v2 = pl.pallas_call(
        kernel,
        out_shape=tuple(jax.ShapeDtypeStruct((M, nh), x.dtype) for _ in range(3)),
        grid_spec=pltpu.PrefetchScalarGridSpec(
            num_scalar_prefetch=0,
            grid=(M // tm,),
            in_specs=[
                pl.BlockSpec((tm, E), lambda i: (i, 0)),   # x rows
                pl.BlockSpec((1, E), const),               # ln1 gamma
                pl.BlockSpec((1, E), const),               # ln1 beta
                pl.BlockSpec((E, 3 * nh), const),          # fused W_qkv
                pl.BlockSpec((1, 3 * nh), const),          # fused b_qkv
            ],
            out_specs=(pl.BlockSpec((tm, nh), lambda i: (i, 0)),
                       pl.BlockSpec((tm, nh), lambda i: (i, 0)),
                       pl.BlockSpec((tm, nh), lambda i: (i, 0))),
        ),
        compiler_params=pltpu.CompilerParams(
            dimension_semantics=("parallel",),
            vmem_limit_bytes=vmem_limit),
        cost_estimate=pl.CostEstimate(
            flops=int(6 * M * E * nh),
            transcendentals=int(M),
            bytes_accessed=int(4 * (M * E + 3 * M * nh + 3 * E * nh))),
    )(x2, ln1_w, ln1_b, w_qkv, b_qkv)
    return q2.reshape(B, S, nh), k2.reshape(B, S, nh), v2.reshape(B, S, nh)


# ---------------------------------------------------------------------------
# Kernel 2: flash-style causal attention + hoisted W_O + residual add
#   grid = (B, q-tiles, k-tiles); k-tile axis is the reduction ("arbitrary").
# ---------------------------------------------------------------------------
def _flash_attn_kernel(q_ref, k_ref, v_ref, x_ref, wo_ref, bo_ref, o_ref,
                       m_ref, l_ref, z_ref, *, n_heads, d_head, tq, tk):
    ki = pl.program_id(2)
    q_start = pl.program_id(1) * tq
    k_start = ki * tk

    @pl.when(ki == 0)
    def _init():
        m_ref[...] = jnp.full_like(m_ref, -1e30)
        l_ref[...] = jnp.zeros_like(l_ref)
        z_ref[...] = jnp.zeros_like(z_ref)

    # Fully-masked k tiles (strictly above the causal diagonal) contribute
    # nothing to the online softmax; skip their compute entirely.
    @pl.when(k_start <= q_start + (tq - 1))
    def _compute():
        q_pos = q_start + jax.lax.broadcasted_iota(jnp.int32, (tq, tk), 0)
        k_pos = k_start + jax.lax.broadcasted_iota(jnp.int32, (tq, tk), 1)
        # additive causal bias, matches `scores - 1e9 * (1 - tril)` exactly
        mask_bias = jnp.where(k_pos > q_pos, jnp.float32(-1e9), jnp.float32(0.0))
        dn = (((1,), (1,)), ((), ()))          # contract last dims; no k transpose
        for n in range(n_heads):               # static unroll over heads
            lo = n * d_head
            hi = lo + d_head
            q_h = q_ref[0, :, lo:hi].astype(jnp.float32)   # pre-scaled by 1/sqrt(H)
            k_h = k_ref[0, :, lo:hi].astype(jnp.float32)
            v_h = v_ref[0, :, lo:hi].astype(jnp.float32)
            s = jax.lax.dot_general(q_h, k_h, dn,
                                    preferred_element_type=jnp.float32)
            s = s + mask_bias
            m_prev = m_ref[n]                                   # (tq, 1)
            m_new = jnp.maximum(m_prev, jnp.max(s, axis=-1, keepdims=True))
            alpha = jnp.exp(m_prev - m_new)
            p = jnp.exp(s - m_new)
            l_ref[n] = alpha * l_ref[n] + jnp.sum(p, axis=-1, keepdims=True)
            z_ref[:, lo:hi] = alpha * z_ref[:, lo:hi] + jnp.dot(
                p, v_h, preferred_element_type=jnp.float32)
            m_ref[n] = m_new

    @pl.when(ki == pl.num_programs(2) - 1)
    def _finalize():
        parts = []
        for n in range(n_heads):
            lo = n * d_head
            inv_l = pl.reciprocal(l_ref[n], approx=True)        # EUP, not VALU
            parts.append(z_ref[:, lo:lo + d_head] * inv_l)
        z_all = jnp.concatenate(parts, axis=-1)                 # (tq, NH)
        out = jnp.dot(z_all.astype(wo_ref.dtype), wo_ref[...],  # one NH-deep matmul
                      preferred_element_type=jnp.float32)
        out = out + bo_ref[...] + x_ref[0].astype(jnp.float32)  # + b_O + residual
        o_ref[0] = out.astype(o_ref.dtype)


def attention_core(q, k, v, resid_pre, w_o, b_o, *, n_heads, d_head, vmem_limit):
    B, S, NH = q.shape
    E = resid_pre.shape[-1]
    tile_target = 512 if vmem_limit >= 80 * 2**20 else 256
    tq = _pick_tile(S, tile_target, 8)
    tk = _pick_tile(S, tile_target, 8)

    kernel = functools.partial(_flash_attn_kernel, n_heads=n_heads,
                               d_head=d_head, tq=tq, tk=tk)
    const = lambda b, i, j: (0, 0)
    cost = pl.CostEstimate(
        flops=int(B * (4 * S * S * NH + 2 * S * NH * E)),
        transcendentals=int(B * n_heads * S * S),
        bytes_accessed=int(4 * (3 * B * S * NH + 2 * B * S * E + NH * E)))

    return pl.pallas_call(
        kernel,
        out_shape=jax.ShapeDtypeStruct((B, S, E), resid_pre.dtype),
        grid_spec=pltpu.PrefetchScalarGridSpec(
            num_scalar_prefetch=0,
            grid=(B, S // tq, S // tk),
            in_specs=[
                pl.BlockSpec((1, tq, NH), lambda b, i, j: (b, i, 0)),  # Q tile
                pl.BlockSpec((1, tk, NH), lambda b, i, j: (b, j, 0)),  # K tile
                pl.BlockSpec((1, tk, NH), lambda b, i, j: (b, j, 0)),  # V tile
                pl.BlockSpec((1, tq, E), lambda b, i, j: (b, i, 0)),   # residual
                pl.BlockSpec((NH, E), const),                          # W_O
                pl.BlockSpec((1, E), const),                           # b_O
            ],
            out_specs=pl.BlockSpec((1, tq, E), lambda b, i, j: (b, i, 0)),
            scratch_shapes=[
                pltpu.VMEM((n_heads, tq, 1), jnp.float32),  # running max m
                pltpu.VMEM((n_heads, tq, 1), jnp.float32),  # running sum l
                pltpu.VMEM((tq, NH), jnp.float32),          # z accumulator
            ],
        ),
        compiler_params=pltpu.CompilerParams(
            dimension_semantics=("parallel", "parallel", "arbitrary"),
            vmem_limit_bytes=vmem_limit),
        cost_estimate=cost,
    )(q, k, v, resid_pre, w_o, b_o)


# ---------------------------------------------------------------------------
# Kernel 3: fused LayerNorm2 -> MLP (erf GELU) -> residual add
#   grid = (M // tm, F // tf); F reduction axis with f32 VMEM accumulator.
# ---------------------------------------------------------------------------
def _ln_mlp_residual_kernel(x_ref, g_ref, b_ref, w_in_ref, b_in_ref,
                            w_out_ref, b_out_ref, o_ref,
                            xn_ref, acc_ref, *, eps):
    f = pl.program_id(1)

    @pl.when(f == 0)
    def _():
        x = x_ref[...].astype(jnp.float32)
        mean = jnp.mean(x, axis=-1, keepdims=True)
        xc = x - mean
        var = jnp.mean(xc * xc, axis=-1, keepdims=True)
        xn = xc * jax.lax.rsqrt(var + eps) * g_ref[...] + b_ref[...]
        xn_ref[...] = xn.astype(xn_ref.dtype)   # cast once, cached in matmul dtype
        acc_ref[...] = jnp.zeros_like(acc_ref)

    h = jnp.dot(xn_ref[...], w_in_ref[...],
                preferred_element_type=jnp.float32) + b_in_ref[...]
    h = 0.5 * h * (1.0 + jax.lax.erf(h * _INV_SQRT2))        # exact erf GELU
    acc_ref[...] += jnp.dot(h.astype(w_out_ref.dtype), w_out_ref[...],
                            preferred_element_type=jnp.float32)

    @pl.when(f == pl.num_programs(1) - 1)
    def _():
        out = acc_ref[...] + b_out_ref[...] + x_ref[...].astype(jnp.float32)
        o_ref[...] = out.astype(o_ref.dtype)


def mlp_block(x, ln2_w, ln2_b, W_in, b_in, W_out, b_out, *, eps, vmem_limit):
    B, S, E = x.shape
    F = W_in.shape[1]
    M = B * S
    if vmem_limit >= 80 * 2**20:          # 128 MiB parts (v5e / v6e)
        tm_target, tf_target = 512, 1024
    else:                                 # 64 MiB parts (v7x)
        tm_target, tf_target = 256, 256
    tm = _pick_tile(M, tm_target, 8)
    tf = _pick_tile(F, tf_target, 128)

    def est(tm_, tf_):  # double-buffered inputs/outputs + scratch, f32
        return 4 * (2 * tm_ * E + 2 * E * tf_ + 2 * tf_ * E
                    + 2 * tm_ * E + 2 * tm_ * E + 2 * tf_ + 6 * E)

    for _ in range(8):                    # shrink if the working set is too big
        if est(tm, tf) <= int(0.9 * vmem_limit):
            break
        new_tf = _pick_tile(F, max(tf // 2, 128), 128)
        new_tm = _pick_tile(M, max(tm // 2, 8), 8)
        if new_tf < tf:
            tf = new_tf
        elif new_tm < tm:
            tm = new_tm
        else:
            break

    x2 = x.reshape(M, E)
    kernel = functools.partial(_ln_mlp_residual_kernel, eps=eps)
    cost = pl.CostEstimate(
        flops=int(4 * M * E * F),
        transcendentals=int(M * F),
        bytes_accessed=int(4 * (2 * M * E + 2 * E * F + F + E)))

    out2 = pl.pallas_call(
        kernel,
        out_shape=jax.ShapeDtypeStruct((M, E), x.dtype),
        grid_spec=pltpu.PrefetchScalarGridSpec(
            num_scalar_prefetch=0,
            grid=(M // tm, F // tf),
            in_specs=[
                pl.BlockSpec((tm, E), lambda i, f: (i, 0)),  # rows (resident over f)
                pl.BlockSpec((1, E), lambda i, f: (0, 0)),   # ln2 gamma
                pl.BlockSpec((1, E), lambda i, f: (0, 0)),   # ln2 beta
                pl.BlockSpec((E, tf), lambda i, f: (0, f)),  # W_in column tile
                pl.BlockSpec((1, tf), lambda i, f: (0, f)),  # b_in tile
                pl.BlockSpec((tf, E), lambda i, f: (f, 0)),  # W_out row tile
                pl.BlockSpec((1, E), lambda i, f: (0, 0)),   # b_out
            ],
            out_specs=pl.BlockSpec((tm, E), lambda i, f: (i, 0)),
            scratch_shapes=[pltpu.VMEM((tm, E), W_in.dtype),    # ln2 output cache
                            pltpu.VMEM((tm, E), jnp.float32)],  # f32 accumulator
        ),
        compiler_params=pltpu.CompilerParams(
            dimension_semantics=("parallel", "arbitrary"),
            vmem_limit_bytes=vmem_limit),
        cost_estimate=cost,
    )(x2, ln2_w, ln2_b, W_in, b_in, W_out, b_out)
    return out2.reshape(B, S, E)


# ---------------------------------------------------------------------------
# One-time weight prep (layout transposes, QKV fusion, 1/sqrt(H) folding)
# ---------------------------------------------------------------------------
def prepare_params(p):
    N, E, H = p["W_Q"].shape
    NH = N * H
    F = p["W_in"].shape[1]
    scale = 1.0 / (H ** 0.5)
    wq = jnp.transpose(p["W_Q"], (1, 0, 2)).reshape(E, NH) * scale
    wk = jnp.transpose(p["W_K"], (1, 0, 2)).reshape(E, NH)
    wv = jnp.transpose(p["W_V"], (1, 0, 2)).reshape(E, NH)
    b_qkv = jnp.concatenate([p["b_Q"].reshape(NH) * scale,
                             p["b_K"].reshape(NH),
                             p["b_V"].reshape(NH)]).reshape(1, 3 * NH)
    return dict(
        ln1_w=p["ln1_w"].reshape(1, E), ln1_b=p["ln1_b"].reshape(1, E),
        w_qkv=jnp.concatenate([wq, wk, wv], axis=1), b_qkv=b_qkv,
        w_o=p["W_O"].reshape(NH, E), b_o=p["b_O"].reshape(1, E),
        ln2_w=p["ln2_w"].reshape(1, E), ln2_b=p["ln2_b"].reshape(1, E),
        W_in=p["W_in"], b_in=p["b_in"].reshape(1, F),
        W_out=p["W_out"], b_out=p["b_out"].reshape(1, E),
    )


def transformer_block_forward(resid_pre, prep, *, n_heads, d_head, eps):
    vmem_limit = _vmem_budget_bytes()
    nh = n_heads * d_head
    q, k, v = qkv_project(resid_pre, prep["ln1_w"], prep["ln1_b"],
                          prep["w_qkv"], prep["b_qkv"],
                          nh=nh, eps=eps, vmem_limit=vmem_limit)
    mid = attention_core(q, k, v, resid_pre, prep["w_o"], prep["b_o"],
                         n_heads=n_heads, d_head=d_head, vmem_limit=vmem_limit)
    return mlp_block(mid, prep["ln2_w"], prep["ln2_b"],
                     prep["W_in"], prep["b_in"], prep["W_out"], prep["b_out"],
                     eps=eps, vmem_limit=vmem_limit)


# ---------------------------------------------------------------------------
# Pure-JAX reference (mirrors the PyTorch module op-for-op)
# ---------------------------------------------------------------------------
def _reference(x, p, eps):
    def ln(v, w, b):
        m = jnp.mean(v, axis=-1, keepdims=True)
        var = jnp.mean((v - m) ** 2, axis=-1, keepdims=True)
        return (v - m) / jnp.sqrt(var + eps) * w + b

    n1 = ln(x, p["ln1_w"], p["ln1_b"])
    k = jnp.einsum("neh,bse->bsnh", p["W_K"], n1) + p["b_K"]
    q = jnp.einsum("neh,bse->bsnh", p["W_Q"], n1) + p["b_Q"]
    v = jnp.einsum("neh,bse->bsnh", p["W_V"], n1) + p["b_V"]
    d_head = p["W_Q"].shape[-1]
    dp = jnp.einsum("bknh,bqnh->bnqk", k, q) / (d_head ** 0.5)
    S = x.shape[1]
    mask = jnp.tril(jnp.ones((S, S), x.dtype))
    dp = dp - 1e9 * (1.0 - mask)
    a = jax.nn.softmax(dp, axis=-1)
    z = jnp.einsum("bknh,bnqk->bqnh", v, a)
    attn_out = jnp.einsum("bqnh,nhe->bqe", z, p["W_O"]) + p["b_O"]
    mid = attn_out + x
    n2 = ln(mid, p["ln2_w"], p["ln2_b"])
    h = jnp.einsum("bse,ef->bsf", n2, p["W_in"]) + p["b_in"]
    h = 0.5 * h * (1.0 + jax.lax.erf(h / jnp.sqrt(2.0)))
    return jnp.einsum("bsf,fe->bse", h, p["W_out"]) + p["b_out"] + mid


if __name__ == "__main__":
    # Small but lane-dense config (scaled-down Config): n_heads*d_head == d_model
    batch, posn = 2, 16
    d_model, n_heads, d_head, d_mlp = 128, 4, 32, 256
    eps = 1e-5
    init_range = 0.02
    f32 = jnp.float32

    key = jax.random.PRNGKey(0)
    ks = jax.random.split(key, 14)

    params = dict(
        ln1_w=1.0 + 0.1 * jax.random.normal(ks[0], (d_model,), f32),
        ln1_b=0.1 * jax.random.normal(ks[1], (d_model,), f32),
        ln2_w=1.0 + 0.1 * jax.random.normal(ks[2], (d_model,), f32),
        ln2_b=0.1 * jax.random.normal(ks[3], (d_model,), f32),
        W_Q=init_range * jax.random.normal(ks[4], (n_heads, d_model, d_head), f32),
        W_K=init_range * jax.random.normal(ks[5], (n_heads, d_model, d_head), f32),
        W_V=init_range * jax.random.normal(ks[6], (n_heads, d_model, d_head), f32),
        W_O=init_range * jax.random.normal(ks[7], (n_heads, d_head, d_model), f32),
        b_Q=0.01 * jax.random.normal(ks[8], (n_heads, d_head), f32),
        b_K=0.01 * jax.random.normal(ks[9], (n_heads, d_head), f32),
        b_V=0.01 * jax.random.normal(ks[10], (n_heads, d_head), f32),
        b_O=0.01 * jax.random.normal(ks[11], (d_model,), f32),
        W_in=init_range * jax.random.normal(ks[12], (d_model, d_mlp), f32),
        b_in=jnp.zeros((d_mlp,), f32),
        W_out=init_range * jax.random.normal(ks[13], (d_mlp, d_model), f32),
        b_out=jnp.zeros((d_model,), f32),
    )

    x = jax.random.normal(jax.random.PRNGKey(1), (batch, posn, d_model), f32)

    prep = prepare_params(params)   # one-time weight prep, outside the jitted fwd
    fwd = jax.jit(functools.partial(transformer_block_forward,
                                    n_heads=n_heads, d_head=d_head, eps=eps))
    y = jax.block_until_ready(fwd(x, prep))

    ref = _reference(x, params, eps)
    assert y.shape == ref.shape
    max_err = float(jnp.max(jnp.abs(y - ref)))
    assert jnp.allclose(y, ref, atol=1e-3, rtol=2e-3), f"mismatch, max abs err={max_err}"

    print("KERNEL_OK")
</pallas_src>

<mosaic_0001>
module attributes {stable_mosaic.version = 11 : i64} {
  func.func @_ln_mlp_residual_kernel(%arg0: i32, %arg1: i32, %arg2: memref<32x128xf32, #tpu.memory_space<vmem>>, %arg3: memref<1x128xf32, #tpu.memory_space<vmem>>, %arg4: memref<1x128xf32, #tpu.memory_space<vmem>>, %arg5: memref<128x256xf32, #tpu.memory_space<vmem>>, %arg6: memref<1x256xf32, #tpu.memory_space<vmem>>, %arg7: memref<256x128xf32, #tpu.memory_space<vmem>>, %arg8: memref<1x128xf32, #tpu.memory_space<vmem>>, %arg9: memref<32x128xf32, #tpu.memory_space<vmem>>, %arg10: memref<32x128xf32, #tpu.memory_space<vmem>>, %arg11: memref<32x128xf32, #tpu.memory_space<vmem>>) attributes {dimension_semantics = [#tpu.dimension_semantics<parallel>, #tpu.dimension_semantics<arbitrary>], iteration_bounds = array<i64: 1, 1>, scalar_prefetch = 0 : i64, scratch_operands = 2 : i64, tpu.core_type = #tpu.core_type<tc>, window_params = [{transform_indices = @transform_0, window_bounds = array<i64: 32, 128>}, {pipeline_mode = #tpu.pipeline_mode<synchronous>, transform_indices = @transform_1, window_bounds = array<i64: 1, 128>}, {pipeline_mode = #tpu.pipeline_mode<synchronous>, transform_indices = @transform_2, window_bounds = array<i64: 1, 128>}, {transform_indices = @transform_3, window_bounds = array<i64: 128, 256>}, {transform_indices = @transform_4, window_bounds = array<i64: 1, 256>}, {transform_indices = @transform_5, window_bounds = array<i64: 256, 128>}, {pipeline_mode = #tpu.pipeline_mode<synchronous>, transform_indices = @transform_6, window_bounds = array<i64: 1, 128>}, {transform_indices = @transform_7, window_bounds = array<i64: 32, 128>}]} {
    %c0_i32 = arith.constant 0 : i32
    %0 = arith.cmpi eq, %arg1, %c0_i32 : i32
    %1 = arith.extui %0 : i1 to i32
    %c0_i32_0 = arith.constant 0 : i32
    %2 = arith.cmpi ne, %1, %c0_i32_0 : i32
    scf.if %2 {
      %c0_18 = arith.constant 0 : index
      %c0_19 = arith.constant 0 : index
      %25 = vector.load %arg2[%c0_18, %c0_19] : memref<32x128xf32, #tpu.memory_space<vmem>>, vector<32x128xf32>
      %cst_20 = arith.constant dense<0.000000e+00> : vector<32xf32>
      %26 = vector.multi_reduction <add>, %25, %cst_20 [1] : vector<32x128xf32> to vector<32xf32>
      %27 = vector.shape_cast %26 : vector<32xf32> to vector<32x1xf32>
      %cst_21 = arith.constant 1.280000e+02 : f32
      %28 = vector.broadcast %cst_21 : f32 to vector<32x1xf32>
      %29 = arith.divf %27, %28 : vector<32x1xf32>
      %30 = vector.broadcast %29 : vector<32x1xf32> to vector<32x128xf32>
      %31 = arith.subf %25, %30 : vector<32x128xf32>
      %32 = arith.mulf %31, %31 : vector<32x128xf32>
      %cst_22 = arith.constant dense<0.000000e+00> : vector<32xf32>
      %33 = vector.multi_reduction <add>, %32, %cst_22 [1] : vector<32x128xf32> to vector<32xf32>
      %34 = vector.shape_cast %33 : vector<32xf32> to vector<32x1xf32>
      %cst_23 = arith.constant 1.280000e+02 : f32
      %35 = vector.broadcast %cst_23 : f32 to vector<32x1xf32>
      %36 = arith.divf %34, %35 : vector<32x1xf32>
      %cst_24 = arith.constant 9.99999974E-6 : f32
      %37 = vector.broadcast %cst_24 : f32 to vector<32x1xf32>
      %38 = arith.addf %36, %37 : vector<32x1xf32>
      %39 = math.rsqrt %38 : vector<32x1xf32>
      %40 = vector.broadcast %39 : vector<32x1xf32> to vector<32x128xf32>
      %41 = arith.mulf %31, %40 : vector<32x128xf32>
      %c0_25 = arith.constant 0 : index
      %c0_26 = arith.constant 0 : index
      %42 = vector.load %arg3[%c0_25, %c0_26] : memref<1x128xf32, #tpu.memory_space<vmem>>, vector<1x128xf32>
      %43 = vector.broadcast %42 : vector<1x128xf32> to vector<32x128xf32>
      %44 = arith.mulf %41, %43 : vector<32x128xf32>
      %c0_27 = arith.constant 0 : index
      %c0_28 = arith.constant 0 : index
      %45 = vector.load %arg4[%c0_27, %c0_28] : memref<1x128xf32, #tpu.memory_space<vmem>>, vector<1x128xf32>
      %46 = vector.broadcast %45 : vector<1x128xf32> to vector<32x128xf32>
      %47 = arith.addf %44, %46 : vector<32x128xf32>
      %c0_29 = arith.constant 0 : index
      %c0_30 = arith.constant 0 : index
      %48 = vector.load %arg10[%c0_29, %c0_30] : memref<32x128xf32, #tpu.memory_space<vmem>>, vector<32x128xf32>
      tpu.vector_store %arg10[%c0_29, %c0_30], %47 {strides = array<i32>} : memref<32x128xf32, #tpu.memory_space<vmem>>, vector<32x128xf32>,
      %cst_31 = arith.constant 0.000000e+00 : f32
      %49 = vector.broadcast %cst_31 : f32 to vector<32x128xf32>
      %c0_32 = arith.constant 0 : index
      %c0_33 = arith.constant 0 : index
      %50 = vector.load %arg11[%c0_32, %c0_33] : memref<32x128xf32, #tpu.memory_space<vmem>>, vector<32x128xf32>
      tpu.vector_store %arg11[%c0_32, %c0_33], %49 {strides = array<i32>} : memref<32x128xf32, #tpu.memory_space<vmem>>, vector<32x128xf32>,
    } else {
    }
    %c0 = arith.constant 0 : index
    %c0_1 = arith.constant 0 : index
    %3 = vector.load %arg10[%c0, %c0_1] : memref<32x128xf32, #tpu.memory_space<vmem>>, vector<32x128xf32>
    %c0_2 = arith.constant 0 : index
    %c0_3 = arith.constant 0 : index
    %4 = vector.load %arg5[%c0_2, %c0_3] : memref<128x256xf32, #tpu.memory_space<vmem>>, vector<128x256xf32>
    %cst = arith.constant dense<0.000000e+00> : vector<32x256xf32>
    %5 = tpu.matmul %3, %4, %cst {dimension_numbers = #tpu.dot_dimension_numbers<[1], [0], [0], [1], [0, 0, 1, 1], [], []>} : vector<32x128xf32>, vector<128x256xf32>, vector<32x256xf32> -> vector<32x256xf32>
    %c0_4 = arith.constant 0 : index
    %c0_5 = arith.constant 0 : index
    %6 = vector.load %arg6[%c0_4, %c0_5] : memref<1x256xf32, #tpu.memory_space<vmem>>, vector<1x256xf32>
    %7 = vector.broadcast %6 : vector<1x256xf32> to vector<32x256xf32>
    %8 = arith.addf %5, %7 : vector<32x256xf32>
    %cst_6 = arith.constant 5.000000e-01 : f32
    %9 = vector.broadcast %cst_6 : f32 to vector<32x256xf32>
    %10 = arith.mulf %9, %8 : vector<32x256xf32>
    %cst_7 = arith.constant 0.707106769 : f32
    %11 = vector.broadcast %cst_7 : f32 to vector<32x256xf32>
    %12 = arith.mulf %8, %11 : vector<32x256xf32>
    %13 = math.erf %12 : vector<32x256xf32>
    %cst_8 = arith.constant 1.000000e+00 : f32
    %14 = vector.broadcast %cst_8 : f32 to vector<32x256xf32>
    %15 = arith.addf %14, %13 : vector<32x256xf32>
    %16 = arith.mulf %10, %15 : vector<32x256xf32>
    %c0_9 = arith.constant 0 : index
    %c0_10 = arith.constant 0 : index
    %17 = vector.load %arg11[%c0_9, %c0_10] : memref<32x128xf32, #tpu.memory_space<vmem>>, vector<32x128xf32>
    %c0_11 = arith.constant 0 : index
    %c0_12 = arith.constant 0 : index
    %18 = vector.load %arg7[%c0_11, %c0_12] : memref<256x128xf32, #tpu.memory_space<vmem>>, vector<256x128xf32>
    %cst_13 = arith.constant dense<0.000000e+00> : vector<32x128xf32>
    %19 = tpu.matmul %16, %18, %cst_13 {dimension_numbers = #tpu.dot_dimension_numbers<[1], [0], [0], [1], [0, 0, 1, 1], [], []>} : vector<32x256xf32>, vector<256x128xf32>, vector<32x128xf32> -> vector<32x128xf32>
    %20 = arith.addf %17, %19 : vector<32x128xf32>
    %c0_14 = arith.constant 0 : index
    %c0_15 = arith.constant 0 : index
    %21 = vector.load %arg11[%c0_14, %c0_15] : memref<32x128xf32, #tpu.memory_space<vmem>>, vector<32x128xf32>
    tpu.vector_store %arg11[%c0_14, %c0_15], %20 {strides = array<i32>} : memref<32x128xf32, #tpu.memory_space<vmem>>, vector<32x128xf32>,
    %c0_i32_16 = arith.constant 0 : i32
    %22 = arith.cmpi eq, %arg1, %c0_i32_16 : i32
    %23 = arith.extui %22 : i1 to i32
    %c0_i32_17 = arith.constant 0 : i32
    %24 = arith.cmpi ne, %23, %c0_i32_17 : i32
    scf.if %24 {
      %c0_18 = arith.constant 0 : index
      %c0_19 = arith.constant 0 : index
      %25 = vector.load %arg11[%c0_18, %c0_19] : memref<32x128xf32, #tpu.memory_space<vmem>>, vector<32x128xf32>
      %c0_20 = arith.constant 0 : index
      %c0_21 = arith.constant 0 : index
      %26 = vector.load %arg8[%c0_20, %c0_21] : memref<1x128xf32, #tpu.memory_space<vmem>>, vector<1x128xf32>
      %27 = vector.broadcast %26 : vector<1x128xf32> to vector<32x128xf32>
      %28 = arith.addf %25, %27 : vector<32x128xf32>
      %c0_22 = arith.constant 0 : index
      %c0_23 = arith.constant 0 : index
      %29 = vector.load %arg2[%c0_22, %c0_23] : memref<32x128xf32, #tpu.memory_space<vmem>>, vector<32x128xf32>
      %30 = arith.addf %28, %29 : vector<32x128xf32>
      %c0_24 = arith.constant 0 : index
      %c0_25 = arith.constant 0 : index
      %31 = vector.load %arg9[%c0_24, %c0_25] : memref<32x128xf32, #tpu.memory_space<vmem>>, vector<32x128xf32>
      tpu.vector_store %arg9[%c0_24, %c0_25], %30 {strides = array<i32>} : memref<32x128xf32, #tpu.memory_space<vmem>>, vector<32x128xf32>,
    } else {
    }
    return
  }
  func.func @transform_0(%arg0: i32, %arg1: i32) -> (i32, i32) {
    %c0_i32 = arith.constant 0 : i32
    %c0_i32_0 = arith.constant 0 : i32
    return %arg0, %c0_i32 : i32, i32
  }
  func.func @transform_1(%arg0: i32, %arg1: i32) -> (i32, i32) {
    %c0_i32 = arith.constant 0 : i32
    %c0_i32_0 = arith.constant 0 : i32
    %c0_i32_1 = arith.constant 0 : i32
    return %c0_i32, %c0_i32_0 : i32, i32
  }
  func.func @transform_2(%arg0: i32, %arg1: i32) -> (i32, i32) {
    %c0_i32 = arith.constant 0 : i32
    %c0_i32_0 = arith.constant 0 : i32
    %c0_i32_1 = arith.constant 0 : i32
    return %c0_i32, %c0_i32_0 : i32, i32
  }
  func.func @transform_3(%arg0: i32, %arg1: i32) -> (i32, i32) {
    %c0_i32 = arith.constant 0 : i32
    %c0_i32_0 = arith.constant 0 : i32
    return %c0_i32, %arg1 : i32, i32
  }
  func.func @transform_4(%arg0: i32, %arg1: i32) -> (i32, i32) {
    %c0_i32 = arith.constant 0 : i32
    %c0_i32_0 = arith.constant 0 : i32
    return %c0_i32, %arg1 : i32, i32
  }
  func.func @transform_5(%arg0: i32, %arg1: i32) -> (i32, i32) {
    %c0_i32 = arith.constant 0 : i32
    %c0_i32_0 = arith.constant 0 : i32
    return %arg1, %c0_i32 : i32, i32
  }
  func.func @transform_6(%arg0: i32, %arg1: i32) -> (i32, i32) {
    %c0_i32 = arith.constant 0 : i32
    %c0_i32_0 = arith.constant 0 : i32
    %c0_i32_1 = arith.constant 0 : i32
    return %c0_i32, %c0_i32_0 : i32, i32
  }
  func.func @transform_7(%arg0: i32, %arg1: i32) -> (i32, i32) {
    %c0_i32 = arith.constant 0 : i32
    %c0_i32_0 = arith.constant 0 : i32
    return %arg0, %c0_i32 : i32, i32
  }
}

module attributes {stable_mosaic.version = 11 : i64} {
  func.func @_ln_qkv_kernel(%arg0: i32, %arg1: memref<32x128xf32, #tpu.memory_space<vmem>>, %arg2: memref<1x128xf32, #tpu.memory_space<vmem>>, %arg3: memref<1x128xf32, #tpu.memory_space<vmem>>, %arg4: memref<128x384xf32, #tpu.memory_space<vmem>>, %arg5: memref<1x384xf32, #tpu.memory_space<vmem>>, %arg6: memref<32x128xf32, #tpu.memory_space<vmem>>, %arg7: memref<32x128xf32, #tpu.memory_space<vmem>>, %arg8: memref<32x128xf32, #tpu.memory_space<vmem>>) attributes {dimension_semantics = [#tpu.dimension_semantics<parallel>], iteration_bounds = array<i64: 1>, scalar_prefetch = 0 : i64, scratch_operands = 0 : i64, tpu.core_type = #tpu.core_type<tc>, window_params = [{transform_indices = @transform_0, window_bounds = array<i64: 32, 128>}, {pipeline_mode = #tpu.pipeline_mode<synchronous>, transform_indices = @transform_1, window_bounds = array<i64: 1, 128>}, {pipeline_mode = #tpu.pipeline_mode<synchronous>, transform_indices = @transform_2, window_bounds = array<i64: 1, 128>}, {pipeline_mode = #tpu.pipeline_mode<synchronous>, transform_indices = @transform_3, window_bounds = array<i64: 128, 384>}, {pipeline_mode = #tpu.pipeline_mode<synchronous>, transform_indices = @transform_4, window_bounds = array<i64: 1, 384>}, {transform_indices = @transform_5, window_bounds = array<i64: 32, 128>}, {transform_indices = @transform_6, window_bounds = array<i64: 32, 128>}, {transform_indices = @transform_7, window_bounds = array<i64: 32, 128>}]} {
    %c0 = arith.constant 0 : index
    %c0_0 = arith.constant 0 : index
    %0 = vector.load %arg1[%c0, %c0_0] : memref<32x128xf32, #tpu.memory_space<vmem>>, vector<32x128xf32>
    %cst = arith.constant dense<0.000000e+00> : vector<32xf32>
    %1 = vector.multi_reduction <add>, %0, %cst [1] : vector<32x128xf32> to vector<32xf32>
    %2 = vector.shape_cast %1 : vector<32xf32> to vector<32x1xf32>
    %cst_1 = arith.constant 1.280000e+02 : f32
    %3 = vector.broadcast %cst_1 : f32 to vector<32x1xf32>
    %4 = arith.divf %2, %3 : vector<32x1xf32>
    %5 = vector.broadcast %4 : vector<32x1xf32> to vector<32x128xf32>
    %6 = arith.subf %0, %5 : vector<32x128xf32>
    %7 = arith.mulf %6, %6 : vector<32x128xf32>
    %cst_2 = arith.constant dense<0.000000e+00> : vector<32xf32>
    %8 = vector.multi_reduction <add>, %7, %cst_2 [1] : vector<32x128xf32> to vector<32xf32>
    %9 = vector.shape_cast %8 : vector<32xf32> to vector<32x1xf32>
    %cst_3 = arith.constant 1.280000e+02 : f32
    %10 = vector.broadcast %cst_3 : f32 to vector<32x1xf32>
    %11 = arith.divf %9, %10 : vector<32x1xf32>
    %cst_4 = arith.constant 9.99999974E-6 : f32
    %12 = vector.broadcast %cst_4 : f32 to vector<32x1xf32>
    %13 = arith.addf %11, %12 : vector<32x1xf32>
    %14 = math.rsqrt %13 : vector<32x1xf32>
    %15 = vector.broadcast %14 : vector<32x1xf32> to vector<32x128xf32>
    %16 = arith.mulf %6, %15 : vector<32x128xf32>
    %c0_5 = arith.constant 0 : index
    %c0_6 = arith.constant 0 : index
    %17 = vector.load %arg2[%c0_5, %c0_6] : memref<1x128xf32, #tpu.memory_space<vmem>>, vector<1x128xf32>
    %18 = vector.broadcast %17 : vector<1x128xf32> to vector<32x128xf32>
    %19 = arith.mulf %16, %18 : vector<32x128xf32>
    %c0_7 = arith.constant 0 : index
    %c0_8 = arith.constant 0 : index
    %20 = vector.load %arg3[%c0_7, %c0_8] : memref<1x128xf32, #tpu.memory_space<vmem>>, vector<1x128xf32>
    %21 = vector.broadcast %20 : vector<1x128xf32> to vector<32x128xf32>
    %22 = arith.addf %19, %21 : vector<32x128xf32>
    %c0_9 = arith.constant 0 : index
    %c0_10 = arith.constant 0 : index
    %23 = vector.load %arg4[%c0_9, %c0_10] : memref<128x384xf32, #tpu.memory_space<vmem>>, vector<128x384xf32>
    %cst_11 = arith.constant dense<0.000000e+00> : vector<32x384xf32>
    %24 = tpu.matmul %22, %23, %cst_11 {dimension_numbers = #tpu.dot_dimension_numbers<[1], [0], [0], [1], [0, 0, 1, 1], [], []>} : vector<32x128xf32>, vector<128x384xf32>, vector<32x384xf32> -> vector<32x384xf32>
    %c0_12 = arith.constant 0 : index
    %c0_13 = arith.constant 0 : index
    %25 = vector.load %arg5[%c0_12, %c0_13] : memref<1x384xf32, #tpu.memory_space<vmem>>, vector<1x384xf32>
    %26 = vector.broadcast %25 : vector<1x384xf32> to vector<32x384xf32>
    %27 = arith.addf %24, %26 : vector<32x384xf32>
    %28 = vector.extract_strided_slice %27 {offsets = [0, 0], sizes = [32, 128], strides = [1, 1]} : vector<32x384xf32> to vector<32x128xf32>
    %c0_14 = arith.constant 0 : index
    %c0_15 = arith.constant 0 : index
    %29 = vector.load %arg6[%c0_14, %c0_15] : memref<32x128xf32, #tpu.memory_space<vmem>>, vector<32x128xf32>
    tpu.vector_store %arg6[%c0_14, %c0_15], %28 {strides = array<i32>} : memref<32x128xf32, #tpu.memory_space<vmem>>, vector<32x128xf32>,
    %30 = vector.extract_strided_slice %27 {offsets = [0, 128], sizes = [32, 128], strides = [1, 1]} : vector<32x384xf32> to vector<32x128xf32>
    %c0_16 = arith.constant 0 : index
    %c0_17 = arith.constant 0 : index
    %31 = vector.load %arg7[%c0_16, %c0_17] : memref<32x128xf32, #tpu.memory_space<vmem>>, vector<32x128xf32>
    tpu.vector_store %arg7[%c0_16, %c0_17], %30 {strides = array<i32>} : memref<32x128xf32, #tpu.memory_space<vmem>>, vector<32x128xf32>,
    %32 = vector.extract_strided_slice %27 {offsets = [0, 256], sizes = [32, 128], strides = [1, 1]} : vector<32x384xf32> to vector<32x128xf32>
    %c0_18 = arith.constant 0 : index
    %c0_19 = arith.constant 0 : index
    %33 = vector.load %arg8[%c0_18, %c0_19] : memref<32x128xf32, #tpu.memory_space<vmem>>, vector<32x128xf32>
    tpu.vector_store %arg8[%c0_18, %c0_19], %32 {strides = array<i32>} : memref<32x128xf32, #tpu.memory_space<vmem>>, vector<32x128xf32>,
    return
  }
  func.func @transform_0(%arg0: i32) -> (i32, i32) {
    %c0_i32 = arith.constant 0 : i32
    %c0_i32_0 = arith.constant 0 : i32
    return %arg0, %c0_i32 : i32, i32
  }
  func.func @transform_1(%arg0: i32) -> (i32, i32) {
    %c0_i32 = arith.constant 0 : i32
    %c0_i32_0 = arith.constant 0 : i32
    %c0_i32_1 = arith.constant 0 : i32
    return %c0_i32, %c0_i32_0 : i32, i32
  }
  func.func @transform_2(%arg0: i32) -> (i32, i32) {
    %c0_i32 = arith.constant 0 : i32
    %c0_i32_0 = arith.constant 0 : i32
    %c0_i32_1 = arith.constant 0 : i32
    return %c0_i32, %c0_i32_0 : i32, i32
  }
  func.func @transform_3(%arg0: i32) -> (i32, i32) {
    %c0_i32 = arith.constant 0 : i32
    %c0_i32_0 = arith.constant 0 : i32
    %c0_i32_1 = arith.constant 0 : i32
    return %c0_i32, %c0_i32_0 : i32, i32
  }
  func.func @transform_4(%arg0: i32) -> (i32, i32) {
    %c0_i32 = arith.constant 0 : i32
    %c0_i32_0 = arith.constant 0 : i32
    %c0_i32_1 = arith.constant 0 : i32
    return %c0_i32, %c0_i32_0 : i32, i32
  }
  func.func @transform_5(%arg0: i32) -> (i32, i32) {
    %c0_i32 = arith.constant 0 : i32
    %c0_i32_0 = arith.constant 0 : i32
    return %arg0, %c0_i32 : i32, i32
  }
  func.func @transform_6(%arg0: i32) -> (i32, i32) {
    %c0_i32 = arith.constant 0 : i32
    %c0_i32_0 = arith.constant 0 : i32
    return %arg0, %c0_i32 : i32, i32
  }
  func.func @transform_7(%arg0: i32) -> (i32, i32) {
    %c0_i32 = arith.constant 0 : i32
    %c0_i32_0 = arith.constant 0 : i32
    return %arg0, %c0_i32 : i32, i32
  }
}

module attributes {stable_mosaic.version = 11 : i64} {
  func.func @_flash_attn_kernel(%arg0: i32, %arg1: i32, %arg2: i32, %arg3: memref<1x16x128xf32, #tpu.memory_space<vmem>>, %arg4: memref<1x16x128xf32, #tpu.memory_space<vmem>>, %arg5: memref<1x16x128xf32, #tpu.memory_space<vmem>>, %arg6: memref<1x16x128xf32, #tpu.memory_space<vmem>>, %arg7: memref<128x128xf32, #tpu.memory_space<vmem>>, %arg8: memref<1x128xf32, #tpu.memory_space<vmem>>, %arg9: memref<1x16x128xf32, #tpu.memory_space<vmem>>, %arg10: memref<4x16x1xf32, #tpu.memory_space<vmem>>, %arg11: memref<4x16x1xf32, #tpu.memory_space<vmem>>, %arg12: memref<16x128xf32, #tpu.memory_space<vmem>>) attributes {dimension_semantics = [#tpu.dimension_semantics<parallel>, #tpu.dimension_semantics<parallel>, #tpu.dimension_semantics<arbitrary>], iteration_bounds = array<i64: 2, 1, 1>, scalar_prefetch = 0 : i64, scratch_operands = 3 : i64, tpu.core_type = #tpu.core_type<tc>, window_params = [{transform_indices = @transform_0, window_bounds = array<i64: 1, 16, 128>}, {transform_indices = @transform_1, window_bounds = array<i64: 1, 16, 128>}, {transform_indices = @transform_2, window_bounds = array<i64: 1, 16, 128>}, {transform_indices = @transform_3, window_bounds = array<i64: 1, 16, 128>}, {pipeline_mode = #tpu.pipeline_mode<synchronous>, transform_indices = @transform_4, window_bounds = array<i64: 128, 128>}, {pipeline_mode = #tpu.pipeline_mode<synchronous>, transform_indices = @transform_5, window_bounds = array<i64: 1, 128>}, {transform_indices = @transform_6, window_bounds = array<i64: 1, 16, 128>}]} {
    %c16_i32 = arith.constant 16 : i32
    %0 = arith.muli %arg1, %c16_i32 : i32
    %c16_i32_0 = arith.constant 16 : i32
    %1 = arith.muli %arg2, %c16_i32_0 : i32
    %c0_i32 = arith.constant 0 : i32
    %2 = arith.cmpi eq, %arg2, %c0_i32 : i32
    %3 = arith.extui %2 : i1 to i32
    %c0_i32_1 = arith.constant 0 : i32
    %4 = arith.cmpi ne, %3, %c0_i32_1 : i32
    scf.if %4 {
      %cst = arith.constant -1.000000e+30 : f32
      %12 = vector.broadcast %cst : f32 to vector<4x16x1xf32>
      %c0 = arith.constant 0 : index
      %c0_5 = arith.constant 0 : index
      %c0_6 = arith.constant 0 : index
      %13 = vector.load %arg10[%c0, %c0_5, %c0_6] : memref<4x16x1xf32, #tpu.memory_space<vmem>>, vector<4x16x1xf32>
      tpu.vector_store %arg10[%c0, %c0_5, %c0_6], %12 {strides = array<i32>} : memref<4x16x1xf32, #tpu.memory_space<vmem>>, vector<4x16x1xf32>,
      %cst_7 = arith.constant 0.000000e+00 : f32
      %14 = vector.broadcast %cst_7 : f32 to vector<4x16x1xf32>
      %c0_8 = arith.constant 0 : index
      %c0_9 = arith.constant 0 : index
      %c0_10 = arith.constant 0 : index
      %15 = vector.load %arg11[%c0_8, %c0_9, %c0_10] : memref<4x16x1xf32, #tpu.memory_space<vmem>>, vector<4x16x1xf32>
      tpu.vector_store %arg11[%c0_8, %c0_9, %c0_10], %14 {strides = array<i32>} : memref<4x16x1xf32, #tpu.memory_space<vmem>>, vector<4x16x1xf32>,
      %cst_11 = arith.constant 0.000000e+00 : f32
      %16 = vector.broadcast %cst_11 : f32 to vector<16x128xf32>
      %c0_12 = arith.constant 0 : index
      %c0_13 = arith.constant 0 : index
      %17 = vector.load %arg12[%c0_12, %c0_13] : memref<16x128xf32, #tpu.memory_space<vmem>>, vector<16x128xf32>
      tpu.vector_store %arg12[%c0_12, %c0_13], %16 {strides = array<i32>} : memref<16x128xf32, #tpu.memory_space<vmem>>, vector<16x128xf32>,
    } else {
    }
    %c15_i32 = arith.constant 15 : i32
    %5 = arith.addi %0, %c15_i32 : i32
    %6 = arith.cmpi sle, %1, %5 : i32
    %7 = arith.extui %6 : i1 to i32
    %c0_i32_2 = arith.constant 0 : i32
    %8 = arith.cmpi ne, %7, %c0_i32_2 : i32
    scf.if %8 {
      %12 = tpu.iota {dimensions = array<i32: 0>} : vector<16x16xi32>
      %13 = vector.broadcast %0 : i32 to vector<16x16xi32>
      %14 = arith.addi %13, %12 : vector<16x16xi32>
      %15 = tpu.iota {dimensions = array<i32: 1>} : vector<16x16xi32>
      %16 = vector.broadcast %1 : i32 to vector<16x16xi32>
      %17 = arith.addi %16, %15 : vector<16x16xi32>
      %18 = arith.cmpi sgt, %17, %14 : vector<16x16xi32>
      %cst = arith.constant -1.000000e+09 : f32
      %cst_5 = arith.constant 0.000000e+00 : f32
      %19 = vector.broadcast %cst : f32 to vector<16x16xf32>
      %20 = vector.broadcast %cst_5 : f32 to vector<16x16xf32>
      %21 = arith.select %18, %19, %20 : vector<16x16xi1>, vector<16x16xf32>
      %c0 = arith.constant 0 : index
      %c0_6 = arith.constant 0 : index
      %c0_7 = arith.constant 0 : index
      %22 = vector.load %arg3[%c0, %c0_6, %c0_7] : memref<1x16x128xf32, #tpu.memory_space<vmem>>, vector<1x16x32xf32>
      %23 = vector.shape_cast %22 : vector<1x16x32xf32> to vector<16x32xf32>
      %c0_8 = arith.constant 0 : index
      %c0_9 = arith.constant 0 : index
      %c0_10 = arith.constant 0 : index
      %24 = vector.load %arg4[%c0_8, %c0_9, %c0_10] : memref<1x16x128xf32, #tpu.memory_space<vmem>>, vector<1x16x32xf32>
      %25 = vector.shape_cast %24 : vector<1x16x32xf32> to vector<16x32xf32>
      %c0_11 = arith.constant 0 : index
      %c0_12 = arith.constant 0 : index
      %c0_13 = arith.constant 0 : index
      %26 = vector.load %arg5[%c0_11, %c0_12, %c0_13] : memref<1x16x128xf32, #tpu.memory_space<vmem>>, vector<1x16x32xf32>
      %27 = vector.shape_cast %26 : vector<1x16x32xf32> to vector<16x32xf32>
      %cst_14 = arith.constant dense<0.000000e+00> : vector<16x16xf32>
      %28 = tpu.matmul %23, %25, %cst_14 {dimension_numbers = #tpu.dot_dimension_numbers<[1], [1], [0], [0], [0, 0, 1, 0], [], []>} : vector<16x32xf32>, vector<16x32xf32>, vector<16x16xf32> -> vector<16x16xf32>
      %29 = arith.addf %28, %21 : vector<16x16xf32>
      %c0_15 = arith.constant 0 : index
      %c0_16 = arith.constant 0 : index
      %c0_17 = arith.constant 0 : index
      %30 = vector.load %arg10[%c0_15, %c0_16, %c0_17] : memref<4x16x1xf32, #tpu.memory_space<vmem>>, vector<1x16x1xf32>
      %31 = vector.shape_cast %30 : vector<1x16x1xf32> to vector<16x1xf32>
      %cst_18 = arith.constant dense<0xFF800000> : vector<16xf32>
      %32 = vector.multi_reduction <maximumf>, %29, %cst_18 [1] : vector<16x16xf32> to vector<16xf32>
      %33 = vector.shape_cast %32 : vector<16xf32> to vector<16x1xf32>
      %34 = arith.maximumf %31, %33 : vector<16x1xf32>
      %35 = arith.subf %31, %34 : vector<16x1xf32>
      %36 = math.exp %35 : vector<16x1xf32>
      %37 = vector.broadcast %34 : vector<16x1xf32> to vector<16x16xf32>
      %38 = arith.subf %29, %37 : vector<16x16xf32>
      %39 = math.exp %38 : vector<16x16xf32>
      %c0_19 = arith.constant 0 : index
      %c0_20 = arith.constant 0 : index
      %c0_21 = arith.constant 0 : index
      %40 = vector.load %arg11[%c0_19, %c0_20, %c0_21] : memref<4x16x1xf32, #tpu.memory_space<vmem>>, vector<1x16x1xf32>
      %41 = vector.shape_cast %40 : vector<1x16x1xf32> to vector<16x1xf32>
      %42 = arith.mulf %36, %41 : vector<16x1xf32>
      %cst_22 = arith.constant dense<0.000000e+00> : vector<16xf32>
      %43 = vector.multi_reduction <add>, %39, %cst_22 [1] : vector<16x16xf32> to vector<16xf32>
      %44 = vector.shape_cast %43 : vector<16xf32> to vector<16x1xf32>
      %45 = arith.addf %42, %44 : vector<16x1xf32>
      %c0_23 = arith.constant 0 : index
      %c0_24 = arith.constant 0 : index
      %c0_25 = arith.constant 0 : index
      %46 = vector.load %arg11[%c0_23, %c0_24, %c0_25] : memref<4x16x1xf32, #tpu.memory_space<vmem>>, vector<1x16x1xf32>
      %47 = vector.shape_cast %46 : vector<1x16x1xf32> to vector<16x1xf32>
      %48 = vector.shape_cast %45 : vector<16x1xf32> to vector<1x16x1xf32>
      tpu.vector_store %arg11[%c0_23, %c0_24, %c0_25], %48 {strides = array<i32>} : memref<4x16x1xf32, #tpu.memory_space<vmem>>, vector<1x16x1xf32>,
      %c0_26 = arith.constant 0 : index
      %c0_27 = arith.constant 0 : index
      %49 = vector.load %arg12[%c0_26, %c0_27] : memref<16x128xf32, #tpu.memory_space<vmem>>, vector<16x32xf32>
      %50 = vector.broadcast %36 : vector<16x1xf32> to vector<16x32xf32>
      %51 = arith.mulf %50, %49 : vector<16x32xf32>
      %cst_28 = arith.constant dense<0.000000e+00> : vector<16x32xf32>
      %52 = tpu.matmul %39, %27, %cst_28 {dimension_numbers = #tpu.dot_dimension_numbers<[1], [0], [0], [1], [0, 0, 1, 1], [], []>} : vector<16x16xf32>, vector<16x32xf32>, vector<16x32xf32> -> vector<16x32xf32>
      %53 = arith.addf %51, %52 : vector<16x32xf32>
      %c0_29 = arith.constant 0 : index
      %c0_30 = arith.constant 0 : index
      %54 = vector.load %arg12[%c0_29, %c0_30] : memref<16x128xf32, #tpu.memory_space<vmem>>, vector<16x32xf32>
      tpu.vector_store %arg12[%c0_29, %c0_30], %53 {strides = array<i32>} : memref<16x128xf32, #tpu.memory_space<vmem>>, vector<16x32xf32>,
      %c0_31 = arith.constant 0 : index
      %c0_32 = arith.constant 0 : index
      %c0_33 = arith.constant 0 : index
      %55 = vector.load %arg10[%c0_31, %c0_32, %c0_33] : memref<4x16x1xf32, #tpu.memory_space<vmem>>, vector<1x16x1xf32>
      %56 = vector.shape_cast %55 : vector<1x16x1xf32> to vector<16x1xf32>
      %57 = vector.shape_cast %34 : vector<16x1xf32> to vector<1x16x1xf32>
      tpu.vector_store %arg10[%c0_31, %c0_32, %c0_33], %57 {strides = array<i32>} : memref<4x16x1xf32, #tpu.memory_space<vmem>>, vector<1x16x1xf32>,
      %c0_34 = arith.constant 0 : index
      %c0_35 = arith.constant 0 : index
      %c32 = arith.constant 32 : index
      %58 = vector.load %arg3[%c0_34, %c0_35, %c32] : memref<1x16x128xf32, #tpu.memory_space<vmem>>, vector<1x16x32xf32>
      %59 = vector.shape_cast %58 : vector<1x16x32xf32> to vector<16x32xf32>
      %c0_36 = arith.constant 0 : index
      %c0_37 = arith.constant 0 : index
      %c32_38 = arith.constant 32 : index
      %60 = vector.load %arg4[%c0_36, %c0_37, %c32_38] : memref<1x16x128xf32, #tpu.memory_space<vmem>>, vector<1x16x32xf32>
      %61 = vector.shape_cast %60 : vector<1x16x32xf32> to vector<16x32xf32>
      %c0_39 = arith.constant 0 : index
      %c0_40 = arith.constant 0 : index
      %c32_41 = arith.constant 32 : index
      %62 = vector.load %arg5[%c0_39, %c0_40, %c32_41] : memref<1x16x128xf32, #tpu.memory_space<vmem>>, vector<1x16x32xf32>
      %63 = vector.shape_cast %62 : vector<1x16x32xf32> to vector<16x32xf32>
      %cst_42 = arith.constant dense<0.000000e+00> : vector<16x16xf32>
      %64 = tpu.matmul %59, %61, %cst_42 {dimension_numbers = #tpu.dot_dimension_numbers<[1], [1], [0], [0], [0, 0, 1, 0], [], []>} : vector<16x32xf32>, vector<16x32xf32>, vector<16x16xf32> -> vector<16x16xf32>
      %65 = arith.addf %64, %21 : vector<16x16xf32>
      %c1 = arith.constant 1 : index
      %c0_43 = arith.constant 0 : index
      %c0_44 = arith.constant 0 : index
      %66 = vector.load %arg10[%c1, %c0_43, %c0_44] : memref<4x16x1xf32, #tpu.memory_space<vmem>>, vector<1x16x1xf32>
      %67 = vector.shape_cast %66 : vector<1x16x1xf32> to vector<16x1xf32>
      %cst_45 = arith.constant dense<0xFF800000> : vector<16xf32>
      %68 = vector.multi_reduction <maximumf>, %65, %cst_45 [1] : vector<16x16xf32> to vector<16xf32>
      %69 = vector.shape_cast %68 : vector<16xf32> to vector<16x1xf32>
      %70 = arith.maximumf %67, %69 : vector<16x1xf32>
      %71 = arith.subf %67, %70 : vector<16x1xf32>
      %72 = math.exp %71 : vector<16x1xf32>
      %73 = vector.broadcast %70 : vector<16x1xf32> to vector<16x16xf32>
      %74 = arith.subf %65, %73 : vector<16x16xf32>
      %75 = math.exp %74 : vector<16x16xf32>
      %c1_46 = arith.constant 1 : index
      %c0_47 = arith.constant 0 : index
      %c0_48 = arith.constant 0 : index
      %76 = vector.load %arg11[%c1_46, %c0_47, %c0_48] : memref<4x16x1xf32, #tpu.memory_space<vmem>>, vector<1x16x1xf32>
      %77 = vector.shape_cast %76 : vector<1x16x1xf32> to vector<16x1xf32>
      %78 = arith.mulf %72, %77 : vector<16x1xf32>
      %cst_49 = arith.constant dense<0.000000e+00> : vector<16xf32>
      %79 = vector.multi_reduction <add>, %75, %cst_49 [1] : vector<16x16xf32> to vector<16xf32>
      %80 = vector.shape_cast %79 : vector<16xf32> to vector<16x1xf32>
      %81 = arith.addf %78, %80 : vector<16x1xf32>
      %c1_50 = arith.constant 1 : index
      %c0_51 = arith.constant 0 : index
      %c0_52 = arith.constant 0 : index
      %82 = vector.load %arg11[%c1_50, %c0_51, %c0_52] : memref<4x16x1xf32, #tpu.memory_space<vmem>>, vector<1x16x1xf32>
      %83 = vector.shape_cast %82 : vector<1x16x1xf32> to vector<16x1xf32>
      %84 = vector.shape_cast %81 : vector<16x1xf32> to vector<1x16x1xf32>
      tpu.vector_store %arg11[%c1_50, %c0_51, %c0_52], %84 {strides = array<i32>} : memref<4x16x1xf32, #tpu.memory_space<vmem>>, vector<1x16x1xf32>,
      %c0_53 = arith.constant 0 : index
      %c32_54 = arith.constant 32 : index
      %85 = vector.load %arg12[%c0_53, %c32_54] : memref<16x128xf32, #tpu.memory_space<vmem>>, vector<16x32xf32>
      %86 = vector.broadcast %72 : vector<16x1xf32> to vector<16x32xf32>
      %87 = arith.mulf %86, %85 : vector<16x32xf32>
      %cst_55 = arith.constant dense<0.000000e+00> : vector<16x32xf32>
      %88 = tpu.matmul %75, %63, %cst_55 {dimension_numbers = #tpu.dot_dimension_numbers<[1], [0], [0], [1], [0, 0, 1, 1], [], []>} : vector<16x16xf32>, vector<16x32xf32>, vector<16x32xf32> -> vector<16x32xf32>
      %89 = arith.addf %87, %88 : vector<16x32xf32>
      %c0_56 = arith.constant 0 : index
      %c32_57 = arith.constant 32 : index
      %90 = vector.load %arg12[%c0_56, %c32_57] : memref<16x128xf32, #tpu.memory_space<vmem>>, vector<16x32xf32>
      tpu.vector_store %arg12[%c0_56, %c32_57], %89 {strides = array<i32>} : memref<16x128xf32, #tpu.memory_space<vmem>>, vector<16x32xf32>,
      %c1_58 = arith.constant 1 : index
      %c0_59 = arith.constant 0 : index
      %c0_60 = arith.constant 0 : index
      %91 = vector.load %arg10[%c1_58, %c0_59, %c0_60] : memref<4x16x1xf32, #tpu.memory_space<vmem>>, vector<1x16x1xf32>
      %92 = vector.shape_cast %91 : vector<1x16x1xf32> to vector<16x1xf32>
      %93 = vector.shape_cast %70 : vector<16x1xf32> to vector<1x16x1xf32>
      tpu.vector_store %arg10[%c1_58, %c0_59, %c0_60], %93 {strides = array<i32>} : memref<4x16x1xf32, #tpu.memory_space<vmem>>, vector<1x16x1xf32>,
      %c0_61 = arith.constant 0 : index
      %c0_62 = arith.constant 0 : index
      %c64 = arith.constant 64 : index
      %94 = vector.load %arg3[%c0_61, %c0_62, %c64] : memref<1x16x128xf32, #tpu.memory_space<vmem>>, vector<1x16x32xf32>
      %95 = vector.shape_cast %94 : vector<1x16x32xf32> to vector<16x32xf32>
      %c0_63 = arith.constant 0 : index
      %c0_64 = arith.constant 0 : index
      %c64_65 = arith.constant 64 : index
      %96 = vector.load %arg4[%c0_63, %c0_64, %c64_65] : memref<1x16x128xf32, #tpu.memory_space<vmem>>, vector<1x16x32xf32>
      %97 = vector.shape_cast %96 : vector<1x16x32xf32> to vector<16x32xf32>
      %c0_66 = arith.constant 0 : index
      %c0_67 = arith.constant 0 : index
      %c64_68 = arith.constant 64 : index
      %98 = vector.load %arg5[%c0_66, %c0_67, %c64_68] : memref<1x16x128xf32, #tpu.memory_space<vmem>>, vector<1x16x32xf32>
      %99 = vector.shape_cast %98 : vector<1x16x32xf32> to vector<16x32xf32>
      %cst_69 = arith.constant dense<0.000000e+00> : vector<16x16xf32>
      %100 = tpu.matmul %95, %97, %cst_69 {dimension_numbers = #tpu.dot_dimension_numbers<[1], [1], [0], [0], [0, 0, 1, 0], [], []>} : vector<16x32xf32>, vector<16x32xf32>, vector<16x16xf32> -> vector<16x16xf32>
      %101 = arith.addf %100, %21 : vector<16x16xf32>
      %c2 = arith.constant 2 : index
      %c0_70 = arith.constant 0 : index
      %c0_71 = arith.constant 0 : index
      %102 = vector.load %arg10[%c2, %c0_70, %c0_71] : memref<4x16x1xf32, #tpu.memory_space<vmem>>, vector<1x16x1xf32>
      %103 = vector.shape_cast %102 : vector<1x16x1xf32> to vector<16x1xf32>
      %cst_72 = arith.constant dense<0xFF800000> : vector<16xf32>
      %104 = vector.multi_reduction <maximumf>, %101, %cst_72 [1] : vector<16x16xf32> to vector<16xf32>
      %105 = vector.shape_cast %104 : vector<16xf32> to vector<16x1xf32>
      %106 = arith.maximumf %103, %105 : vector<16x1xf32>
      %107 = arith.subf %103, %106 : vector<16x1xf32>
      %108 = math.exp %107 : vector<16x1xf32>
      %109 = vector.broadcast %106 : vector<16x1xf32> to vector<16x16xf32>
      %110 = arith.subf %101, %109 : vector<16x16xf32>
      %111 = math.exp %110 : vector<16x16xf32>
      %c2_73 = arith.constant 2 : index
      %c0_74 = arith.constant 0 : index
      %c0_75 = arith.constant 0 : index
      %112 = vector.load %arg11[%c2_73, %c0_74, %c0_75] : memref<4x16x1xf32, #tpu.memory_space<vmem>>, vector<1x16x1xf32>
      %113 = vector.shape_cast %112 : vector<1x16x1xf32> to vector<16x1xf32>
      %114 = arith.mulf %108, %113 : vector<16x1xf32>
      %cst_76 = arith.constant dense<0.000000e+00> : vector<16xf32>
      %115 = vector.multi_reduction <add>, %111, %cst_76 [1] : vector<16x16xf32> to vector<16xf32>
      %116 = vector.shape_cast %115 : vector<16xf32> to vector<16x1xf32>
      %117 = arith.addf %114, %116 : vector<16x1xf32>
      %c2_77 = arith.constant 2 : index
      %c0_78 = arith.constant 0 : index
      %c0_79 = arith.constant 0 : index
      %118 = vector.load %arg11[%c2_77, %c0_78, %c0_79] : memref<4x16x1xf32, #tpu.memory_space<vmem>>, vector<1x16x1xf32>
      %119 = vector.shape_cast %118 : vector<1x16x1xf32> to vector<16x1xf32>
      %120 = vector.shape_cast %117 : vector<16x1xf32> to vector<1x16x1xf32>
      tpu.vector_store %arg11[%c2_77, %c0_78, %c0_79], %120 {strides = array<i32>} : memref<4x16x1xf32, #tpu.memory_space<vmem>>, vector<1x16x1xf32>,
      %c0_80 = arith.constant 0 : index
      %c64_81 = arith.constant 64 : index
      %121 = vector.load %arg12[%c0_80, %c64_81] : memref<16x128xf32, #tpu.memory_space<vmem>>, vector<16x32xf32>
      %122 = vector.broadcast %108 : vector<16x1xf32> to vector<16x32xf32>
      %123 = arith.mulf %122, %121 : vector<16x32xf32>
      %cst_82 = arith.constant dense<0.000000e+00> : vector<16x32xf32>
      %124 = tpu.matmul %111, %99, %cst_82 {dimension_numbers = #tpu.dot_dimension_numbers<[1], [0], [0], [1], [0, 0, 1, 1], [], []>} : vector<16x16xf32>, vector<16x32xf32>, vector<16x32xf32> -> vector<16x32xf32>
      %125 = arith.addf %123, %124 : vector<16x32xf32>
      %c0_83 = arith.constant 0 : index
      %c64_84 = arith.constant 64 : index
      %126 = vector.load %arg12[%c0_83, %c64_84] : memref<16x128xf32, #tpu.memory_space<vmem>>, vector<16x32xf32>
      tpu.vector_store %arg12[%c0_83, %c64_84], %125 {strides = array<i32>} : memref<16x128xf32, #tpu.memory_space<vmem>>, vector<16x32xf32>,
      %c2_85 = arith.constant 2 : index
      %c0_86 = arith.constant 0 : index
      %c0_87 = arith.constant 0 : index
      %127 = vector.load %arg10[%c2_85, %c0_86, %c0_87] : memref<4x16x1xf32, #tpu.memory_space<vmem>>, vector<1x16x1xf32>
      %128 = vector.shape_cast %127 : vector<1x16x1xf32> to vector<16x1xf32>
      %129 = vector.shape_cast %106 : vector<16x1xf32> to vector<1x16x1xf32>
      tpu.vector_store %arg10[%c2_85, %c0_86, %c0_87], %129 {strides = array<i32>} : memref<4x16x1xf32, #tpu.memory_space<vmem>>, vector<1x16x1xf32>,
      %c0_88 = arith.constant 0 : index
      %c0_89 = arith.constant 0 : index
      %c96 = arith.constant 96 : index
      %130 = vector.load %arg3[%c0_88, %c0_89, %c96] : memref<1x16x128xf32, #tpu.memory_space<vmem>>, vector<1x16x32xf32>
      %131 = vector.shape_cast %130 : vector<1x16x32xf32> to vector<16x32xf32>
      %c0_90 = arith.constant 0 : index
      %c0_91 = arith.constant 0 : index
      %c96_92 = arith.constant 96 : index
      %132 = vector.load %arg4[%c0_90, %c0_91, %c96_92] : memref<1x16x128xf32, #tpu.memory_space<vmem>>, vector<1x16x32xf32>
      %133 = vector.shape_cast %132 : vector<1x16x32xf32> to vector<16x32xf32>
      %c0_93 = arith.constant 0 : index
      %c0_94 = arith.constant 0 : index
      %c96_95 = arith.constant 96 : index
      %134 = vector.load %arg5[%c0_93, %c0_94, %c96_95] : memref<1x16x128xf32, #tpu.memory_space<vmem>>, vector<1x16x32xf32>
      %135 = vector.shape_cast %134 : vector<1x16x32xf32> to vector<16x32xf32>
      %cst_96 = arith.constant dense<0.000000e+00> : vector<16x16xf32>
      %136 = tpu.matmul %131, %133, %cst_96 {dimension_numbers = #tpu.dot_dimension_numbers<[1], [1], [0], [0], [0, 0, 1, 0], [], []>} : vector<16x32xf32>, vector<16x32xf32>, vector<16x16xf32> -> vector<16x16xf32>
      %137 = arith.addf %136, %21 : vector<16x16xf32>
      %c3 = arith.constant 3 : index
      %c0_97 = arith.constant 0 : index
      %c0_98 = arith.constant 0 : index
      %138 = vector.load %arg10[%c3, %c0_97, %c0_98] : memref<4x16x1xf32, #tpu.memory_space<vmem>>, vector<1x16x1xf32>
      %139 = vector.shape_cast %138 : vector<1x16x1xf32> to vector<16x1xf32>
      %cst_99 = arith.constant dense<0xFF800000> : vector<16xf32>
      %140 = vector.multi_reduction <maximumf>, %137, %cst_99 [1] : vector<16x16xf32> to vector<16xf32>
      %141 = vector.shape_cast %140 : vector<16xf32> to vector<16x1xf32>
      %142 = arith.maximumf %139, %141 : vector<16x1xf32>
      %143 = arith.subf %139, %142 : vector<16x1xf32>
      %144 = math.exp %143 : vector<16x1xf32>
      %145 = vector.broadcast %142 : vector<16x1xf32> to vector<16x16xf32>
      %146 = arith.subf %137, %145 : vector<16x16xf32>
      %147 = math.exp %146 : vector<16x16xf32>
      %c3_100 = arith.constant 3 : index
      %c0_101 = arith.constant 0 : index
      %c0_102 = arith.constant 0 : index
      %148 = vector.load %arg11[%c3_100, %c0_101, %c0_102] : memref<4x16x1xf32, #tpu.memory_space<vmem>>, vector<1x16x1xf32>
      %149 = vector.shape_cast %148 : vector<1x16x1xf32> to vector<16x1xf32>
      %150 = arith.mulf %144, %149 : vector<16x1xf32>
      %cst_103 = arith.constant dense<0.000000e+00> : vector<16xf32>
      %151 = vector.multi_reduction <add>, %147, %cst_103 [1] : vector<16x16xf32> to vector<16xf32>
      %152 = vector.shape_cast %151 : vector<16xf32> to vector<16x1xf32>
      %153 = arith.addf %150, %152 : vector<16x1xf32>
      %c3_104 = arith.constant 3 : index
      %c0_105 = arith.constant 0 : index
      %c0_106 = arith.constant 0 : index
      %154 = vector.load %arg11[%c3_104, %c0_105, %c0_106] : memref<4x16x1xf32, #tpu.memory_space<vmem>>, vector<1x16x1xf32>
      %155 = vector.shape_cast %154 : vector<1x16x1xf32> to vector<16x1xf32>
      %156 = vector.shape_cast %153 : vector<16x1xf32> to vector<1x16x1xf32>
      tpu.vector_store %arg11[%c3_104, %c0_105, %c0_106], %156 {strides = array<i32>} : memref<4x16x1xf32, #tpu.memory_space<vmem>>, vector<1x16x1xf32>,
      %c0_107 = arith.constant 0 : index
      %c96_108 = arith.constant 96 : index
      %157 = vector.load %arg12[%c0_107, %c96_108] : memref<16x128xf32, #tpu.memory_space<vmem>>, vector<16x32xf32>
      %158 = vector.broadcast %144 : vector<16x1xf32> to vector<16x32xf32>
      %159 = arith.mulf %158, %157 : vector<16x32xf32>
      %cst_109 = arith.constant dense<0.000000e+00> : vector<16x32xf32>
      %160 = tpu.matmul %147, %135, %cst_109 {dimension_numbers = #tpu.dot_dimension_numbers<[1], [0], [0], [1], [0, 0, 1, 1], [], []>} : vector<16x16xf32>, vector<16x32xf32>, vector<16x32xf32> -> vector<16x32xf32>
      %161 = arith.addf %159, %160 : vector<16x32xf32>
      %c0_110 = arith.constant 0 : index
      %c96_111 = arith.constant 96 : index
      %162 = vector.load %arg12[%c0_110, %c96_111] : memref<16x128xf32, #tpu.memory_space<vmem>>, vector<16x32xf32>
      tpu.vector_store %arg12[%c0_110, %c96_111], %161 {strides = array<i32>} : memref<16x128xf32, #tpu.memory_space<vmem>>, vector<16x32xf32>,
      %c3_112 = arith.constant 3 : index
      %c0_113 = arith.constant 0 : index
      %c0_114 = arith.constant 0 : index
      %163 = vector.load %arg10[%c3_112, %c0_113, %c0_114] : memref<4x16x1xf32, #tpu.memory_space<vmem>>, vector<1x16x1xf32>
      %164 = vector.shape_cast %163 : vector<1x16x1xf32> to vector<16x1xf32>
      %165 = vector.shape_cast %142 : vector<16x1xf32> to vector<1x16x1xf32>
      tpu.vector_store %arg10[%c3_112, %c0_113, %c0_114], %165 {strides = array<i32>} : memref<4x16x1xf32, #tpu.memory_space<vmem>>, vector<1x16x1xf32>,
    } else {
    }
    %c0_i32_3 = arith.constant 0 : i32
    %9 = arith.cmpi eq, %arg2, %c0_i32_3 : i32
    %10 = arith.extui %9 : i1 to i32
    %c0_i32_4 = arith.constant 0 : i32
    %11 = arith.cmpi ne, %10, %c0_i32_4 : i32
    scf.if %11 {
      %c0 = arith.constant 0 : index
      %c0_5 = arith.constant 0 : index
      %c0_6 = arith.constant 0 : index
      %12 = vector.load %arg11[%c0, %c0_5, %c0_6] : memref<4x16x1xf32, #tpu.memory_space<vmem>>, vector<1x16x1xf32>
      %13 = vector.shape_cast %12 : vector<1x16x1xf32> to vector<16x1xf32>
      %14 = tpu.reciprocal %13 {approx = true} : vector<16x1xf32> -> vector<16x1xf32>
      %c0_7 = arith.constant 0 : index
      %c0_8 = arith.constant 0 : index
      %15 = vector.load %arg12[%c0_7, %c0_8] : memref<16x128xf32, #tpu.memory_space<vmem>>, vector<16x32xf32>
      %16 = vector.broadcast %14 : vector<16x1xf32> to vector<16x32xf32>
      %17 = arith.mulf %15, %16 : vector<16x32xf32>
      %c1 = arith.constant 1 : index
      %c0_9 = arith.constant 0 : index
      %c0_10 = arith.constant 0 : index
      %18 = vector.load %arg11[%c1, %c0_9, %c0_10] : memref<4x16x1xf32, #tpu.memory_space<vmem>>, vector<1x16x1xf32>
      %19 = vector.shape_cast %18 : vector<1x16x1xf32> to vector<16x1xf32>
      %20 = tpu.reciprocal %19 {approx = true} : vector<16x1xf32> -> vector<16x1xf32>
      %c0_11 = arith.constant 0 : index
      %c32 = arith.constant 32 : index
      %21 = vector.load %arg12[%c0_11, %c32] : memref<16x128xf32, #tpu.memory_space<vmem>>, vector<16x32xf32>
      %22 = vector.broadcast %20 : vector<16x1xf32> to vector<16x32xf32>
      %23 = arith.mulf %21, %22 : vector<16x32xf32>
      %c2 = arith.constant 2 : index
      %c0_12 = arith.constant 0 : index
      %c0_13 = arith.constant 0 : index
      %24 = vector.load %arg11[%c2, %c0_12, %c0_13] : memref<4x16x1xf32, #tpu.memory_space<vmem>>, vector<1x16x1xf32>
      %25 = vector.shape_cast %24 : vector<1x16x1xf32> to vector<16x1xf32>
      %26 = tpu.reciprocal %25 {approx = true} : vector<16x1xf32> -> vector<16x1xf32>
      %c0_14 = arith.constant 0 : index
      %c64 = arith.constant 64 : index
      %27 = vector.load %arg12[%c0_14, %c64] : memref<16x128xf32, #tpu.memory_space<vmem>>, vector<16x32xf32>
      %28 = vector.broadcast %26 : vector<16x1xf32> to vector<16x32xf32>
      %29 = arith.mulf %27, %28 : vector<16x32xf32>
      %c3 = arith.constant 3 : index
      %c0_15 = arith.constant 0 : index
      %c0_16 = arith.constant 0 : index
      %30 = vector.load %arg11[%c3, %c0_15, %c0_16] : memref<4x16x1xf32, #tpu.memory_space<vmem>>, vector<1x16x1xf32>
      %31 = vector.shape_cast %30 : vector<1x16x1xf32> to vector<16x1xf32>
      %32 = tpu.reciprocal %31 {approx = true} : vector<16x1xf32> -> vector<16x1xf32>
      %c0_17 = arith.constant 0 : index
      %c96 = arith.constant 96 : index
      %33 = vector.load %arg12[%c0_17, %c96] : memref<16x128xf32, #tpu.memory_space<vmem>>, vector<16x32xf32>
      %34 = vector.broadcast %32 : vector<16x1xf32> to vector<16x32xf32>
      %35 = arith.mulf %33, %34 : vector<16x32xf32>
      %36 = tpu.concatenate %17, %23, %29, %35 in 1 : vector<16x32xf32>, vector<16x32xf32>, vector<16x32xf32>, vector<16x32xf32> -> vector<16x128xf32>
      %c0_18 = arith.constant 0 : index
      %c0_19 = arith.constant 0 : index
      %37 = vector.load %arg7[%c0_18, %c0_19] : memref<128x128xf32, #tpu.memory_space<vmem>>, vector<128x128xf32>
      %cst = arith.constant dense<0.000000e+00> : vector<16x128xf32>
      %38 = tpu.matmul %36, %37, %cst {dimension_numbers = #tpu.dot_dimension_numbers<[1], [0], [0], [1], [0, 0, 1, 1], [], []>} : vector<16x128xf32>, vector<128x128xf32>, vector<16x128xf32> -> vector<16x128xf32>
      %c0_20 = arith.constant 0 : index
      %c0_21 = arith.constant 0 : index
      %39 = vector.load %arg8[%c0_20, %c0_21] : memref<1x128xf32, #tpu.memory_space<vmem>>, vector<1x128xf32>
      %40 = vector.broadcast %39 : vector<1x128xf32> to vector<16x128xf32>
      %41 = arith.addf %38, %40 : vector<16x128xf32>
      %c0_22 = arith.constant 0 : index
      %c0_23 = arith.constant 0 : index
      %c0_24 = arith.constant 0 : index
      %42 = vector.load %arg6[%c0_22, %c0_23, %c0_24] : memref<1x16x128xf32, #tpu.memory_space<vmem>>, vector<1x16x128xf32>
      %43 = vector.shape_cast %42 : vector<1x16x128xf32> to vector<16x128xf32>
      %44 = arith.addf %41, %43 : vector<16x128xf32>
      %c0_25 = arith.constant 0 : index
      %c0_26 = arith.constant 0 : index
      %c0_27 = arith.constant 0 : index
      %45 = vector.load %arg9[%c0_25, %c0_26, %c0_27] : memref<1x16x128xf32, #tpu.memory_space<vmem>>, vector<1x16x128xf32>
      %46 = vector.shape_cast %45 : vector<1x16x128xf32> to vector<16x128xf32>
      %47 = vector.shape_cast %44 : vector<16x128xf32> to vector<1x16x128xf32>
      tpu.vector_store %arg9[%c0_25, %c0_26, %c0_27], %47 {strides = array<i32>} : memref<1x16x128xf32, #tpu.memory_space<vmem>>, vector<1x16x128xf32>,
    } else {
    }
    return
  }
  func.func @transform_0(%arg0: i32, %arg1: i32, %arg2: i32) -> (i32, i32, i32) {
    %c0_i32 = arith.constant 0 : i32
    %c0_i32_0 = arith.constant 0 : i32
    return %arg0, %arg1, %c0_i32 : i32, i32, i32
  }
  func.func @transform_1(%arg0: i32, %arg1: i32, %arg2: i32) -> (i32, i32, i32) {
    %c0_i32 = arith.constant 0 : i32
    %c0_i32_0 = arith.constant 0 : i32
    return %arg0, %arg2, %c0_i32 : i32, i32, i32
  }
  func.func @transform_2(%arg0: i32, %arg1: i32, %arg2: i32) -> (i32, i32, i32) {
    %c0_i32 = arith.constant 0 : i32
    %c0_i32_0 = arith.constant 0 : i32
    return %arg0, %arg2, %c0_i32 : i32, i32, i32
  }
  func.func @transform_3(%arg0: i32, %arg1: i32, %arg2: i32) -> (i32, i32, i32) {
    %c0_i32 = arith.constant 0 : i32
    %c0_i32_0 = arith.constant 0 : i32
    return %arg0, %arg1, %c0_i32 : i32, i32, i32
  }
  func.func @transform_4(%arg0: i32, %arg1: i32, %arg2: i32) -> (i32, i32) {
    %c0_i32 = arith.constant 0 : i32
    %c0_i32_0 = arith.constant 0 : i32
    %c0_i32_1 = arith.constant 0 : i32
    return %c0_i32, %c0_i32_0 : i32, i32
  }
  func.func @transform_5(%arg0: i32, %arg1: i32, %arg2: i32) -> (i32, i32) {
    %c0_i32 = arith.constant 0 : i32
    %c0_i32_0 = arith.constant 0 : i32
    %c0_i32_1 = arith.constant 0 : i32
    return %c0_i32, %c0_i32_0 : i32, i32
  }
  func.func @transform_6(%arg0: i32, %arg1: i32, %arg2: i32) -> (i32, i32, i32) {
    %c0_i32 = arith.constant 0 : i32
    %c0_i32_0 = arith.constant 0 : i32
    return %arg0, %arg1, %c0_i32 : i32, i32, i32
  }
}

</mosaic_0001>

<llo_original>
// kernel: transformer_block_forward.3
$region0: #{transformer_block_forward.3}
  #allocation0 [shape = 'u32[]', space=smem, size = 0x4, offset = 0x4, fixed_abs, tag = 'smem constant byte address 0x4 - core index']
  #allocation1 [shape = 'u32[144,128]{1,0:T(1,128)}', space=vmem, size = 0x12000, scoped, tag = 'internal scratch']
  %s0 = inlined_call_operand.vmem [shape: f32[32,128], index: 0, kind: input, shape index: {}]
  %s1 = inlined_call_operand.vmem [shape: f32[1,128], index: 1, kind: input, shape index: {}]
  %s2 = inlined_call_operand.vmem [shape: f32[1,128], index: 2, kind: input, shape index: {}]
  %s3 = inlined_call_operand.hbm [shape: f32[128,384], index: 3, kind: input, shape index: {}]
  %s4 = inlined_call_operand.vmem [shape: f32[1,384], index: 4, kind: input, shape index: {}]
  %s5 = inlined_call_operand.vmem [shape: f32[32,128], index: 5, kind: output, shape index: {0}]
  %s6 = inlined_call_operand.vmem [shape: f32[32,128], index: 6, kind: output, shape index: {1}]
  %s7 = inlined_call_operand.vmem [shape: f32[32,128], index: 7, kind: output, shape index: {2}]
  %8 = xla_tuple %s5, %s6, %s7
  %s9 = sld [smem:[#allocation0]]
  $region50: #{transformer_block_forward.3} parent=0
    _
  %s11 = ssub.s32 1, %s9
  %s12 = scalar_select 0, %s11, %s9
  $region1: #{transformer_block_forward.3} parent=0
    #allocation2 [shape = 'u8[196608]{0}', space=vmem, size = 0x30000, scoped, tag = 'input window, operand 3, single buffered']
    #allocation3 [shape = 's32[1]{0}', space=sflag, size = 0x4, scoped, tag = 'scoped memory for transformer_block_forward.3']
    %13 = vsyncpa [#allocation3], 0
    // Predicated region
    $region2: #{transformer_block_forward.3} parent=1 // pred_check
      _
    $region3: #{transformer_block_forward.3} parent=1 // pred_check_branch
      %15 = sbr.rel (0) target = $region5
    $region4: #{transformer_block_forward.3} parent=1 // pred_region
      _
    $region5: #{transformer_block_forward.3} parent=1 // pred_fallthru
      _
    // Predicated region
    $region6: #{transformer_block_forward.3} parent=1 // pred_check
      _
    $region7: #{transformer_block_forward.3} parent=1 // pred_check_branch
      %17 = sbr.rel (0) target = $region9
    $region8: #{transformer_block_forward.3} parent=1 // pred_region
      _
    $region9: #{transformer_block_forward.3} parent=1 // pred_fallthru
      _
    // Predicated region
    $region10: #{transformer_block_forward.3} parent=1 // pred_check
      _
    $region11: #{transformer_block_forward.3} parent=1 // pred_check_branch
      %19 = sbr.rel (0) target = $region13
    $region12: #{transformer_block_forward.3} parent=1 // pred_region
      _
    $region13: #{transformer_block_forward.3} parent=1 // pred_fallthru
      _
    // Predicated region
    $region14: #{transformer_block_forward.3} parent=1 // pred_check
      _
    $region15: #{transformer_block_forward.3} parent=1 // pred_check_branch
      %21 = sbr.rel (0) target = $region17
    $region16: #{transformer_block_forward.3} parent=1 // pred_region
      %s23 = ssub.s32 6144, 6144
      %24 = vsyncadd [#allocation3], %s23
      %s25 = sshll.u32 [#allocation2], 4
      %s26 = int_to_ptr.vmem [resolvable:$true] %s25
      %31 = dma.hbm_to_vmem [thread:$0]  %s3, 6144, %s26, [#allocation3], 384, 384, 24
    $region17: #{transformer_block_forward.3} parent=1 // pred_fallthru
      _
    // Predicated region
    $region18: #{transformer_block_forward.3} parent=1 // pred_check
      _
    $region19: #{transformer_block_forward.3} parent=1 // pred_check_branch
      %33 = sbr.rel (0) target = $region21
    $region20: #{transformer_block_forward.3} parent=1 // pred_region
      _
    $region21: #{transformer_block_forward.3} parent=1 // pred_fallthru
      _
    // Predicated region
    $region22: #{transformer_block_forward.3} parent=1 // pred_check
      _
    $region23: #{transformer_block_forward.3} parent=1 // pred_check_branch
      %35 = sbr.rel (0) target = $region25
    $region24: #{transformer_block_forward.3} parent=1 // pred_region
      %36 = dma.done [#allocation3], 6144
    $region25: #{transformer_block_forward.3} parent=1 // pred_fallthru
      _
    %v37 = vld [vmem:[%s0] sm:$0xff]
    %v38 = vld [vmem:[%s0 + $0x8] sm:$0xff]
    %v39 = vld [vmem:[%s0 + $0x10] sm:$0xff]
    %v40 = vld [vmem:[%s0 + $0x18] sm:$0xff]
    %41 = vadd.xlane.f32.xlu0 %v37
    %v42 = vpop.xlane.xlu0 %41
    %43 = vadd.xlane.f32.xlu0 %v38
    %v44 = vpop.xlane.xlu0 %43
    %45 = vadd.xlane.f32.xlu0 %v39
    %v46 = vpop.xlane.xlu0 %45
    %47 = vadd.xlane.f32.xlu0 %v40
    %v48 = vpop.xlane.xlu0 %47
    %v49 = vrcp.pop 128.0
    %v50 = vmul.f32 %v42, %v49
    %v51 = vmul.f32 %v44, %v49
    %v52 = vmul.f32 %v46, %v49
    %v53 = vmul.f32 %v48, %v49
    %v54 = vsub.f32 %v37, %v50
    %v55 = vsub.f32 %v38, %v51
    %v56 = vsub.f32 %v39, %v52
    %v57 = vsub.f32 %v40, %v53
    %v58 = vmul.f32 %v54, %v54
    %v59 = vmul.f32 %v55, %v55
    %v60 = vmul.f32 %v56, %v56
    %v61 = vmul.f32 %v57, %v57
    %62 = vadd.xlane.f32.xlu0 %v58
    %v63 = vpop.xlane.xlu0 %62
    %64 = vadd.xlane.f32.xlu0 %v59
    %v65 = vpop.xlane.xlu0 %64
    %66 = vadd.xlane.f32.xlu0 %v60
    %v67 = vpop.xlane.xlu0 %66
    %68 = vadd.xlane.f32.xlu0 %v61
    %v69 = vpop.xlane.xlu0 %68
    %v70 = vmul.f32 %v63, %v49
    %v71 = vmul.f32 %v65, %v49
    %v72 = vmul.f32 %v67, %v49
    %v73 = vmul.f32 %v69, %v49
    %v74 = vadd.f32 %v70, 1e-05
    %v75 = vadd.f32 %v71, 1e-05
    %v76 = vadd.f32 %v72, 1e-05
    %v77 = vadd.f32 %v73, 1e-05
    %v78 = vrsqrt.pop %v74
    %v79 = vrsqrt.pop %v75
    %v80 = vrsqrt.pop %v76
    %v81 = vrsqrt.pop %v77
    %v82 = vmul.f32 %v54, %v78
    %v83 = vmul.f32 %v55, %v79
    %v84 = vmul.f32 %v56, %v80
    %v85 = vmul.f32 %v57, %v81
    %v86 = vld [vmem:[%s1] sm:$0x1]
    %v88 = vlaneseq
    %v89 = vshrl.u32 %v88, 7
    %v90 = vsub.s32 0, %v89
    %v91 = vrot.slane %v86, %v90
    %v93 = vmul.f32 %v82, %v91
    %v94 = vmul.f32 %v83, %v91
    %v95 = vmul.f32 %v84, %v91
    %v96 = vmul.f32 %v85, %v91
    %v97 = vld [vmem:[%s2] sm:$0x1]
    %v99 = vlaneseq
    %v100 = vshrl.u32 %v99, 7
    %v101 = vsub.s32 0, %v100
    %v102 = vrot.slane %v97, %v101
    %v104 = vadd.f32 %v93, %v102
    %v105 = vadd.f32 %v94, %v102
    %v106 = vadd.f32 %v95, %v102
    %v107 = vadd.f32 %v96, %v102
    %v108 = vld [vmem:[#allocation2] sm:$0xff]
    %v109 = vld [vmem:[#allocation2 + $0x8] sm:$0xff]
    %v110 = vld [vmem:[#allocation2 + $0x10] sm:$0xff]
    %v111 = vld [vmem:[#allocation2 + $0x18] sm:$0xff]
    %v112 = vld [vmem:[#allocation2 + $0x20] sm:$0xff]
    %v113 = vld [vmem:[#allocation2 + $0x28] sm:$0xff]
    %v114 = vld [vmem:[#allocation2 + $0x30] sm:$0xff]
    %v115 = vld [vmem:[#allocation2 + $0x38] sm:$0xff]
    %v116 = vld [vmem:[#allocation2 + $0x40] sm:$0xff]
    %v117 = vld [vmem:[#allocation2 + $0x48] sm:$0xff]
    %v118 = vld [vmem:[#allocation2 + $0x50] sm:$0xff]
    %v119 = vld [vmem:[#allocation2 + $0x58] sm:$0xff]
    %v120 = vld [vmem:[#allocation2 + $0x60] sm:$0xff]
    %v121 = vld [vmem:[#allocation2 + $0x68] sm:$0xff]
    %v122 = vld [vmem:[#allocation2 + $0x70] sm:$0xff]
    %v123 = vld [vmem:[#allocation2 + $0x78] sm:$0xff]
    %v124 = vld [vmem:[#allocation2 + $0x80] sm:$0xff]
    %v125 = vld [vmem:[#allocation2 + $0x88] sm:$0xff]
    %v126 = vld [vmem:[#allocation2 + $0x90] sm:$0xff]
    %v127 = vld [vmem:[#allocation2 + $0x98] sm:$0xff]
    %v128 = vld [vmem:[#allocation2 + $0xa0] sm:$0xff]
    %v129 = vld [vmem:[#allocation2 + $0xa8] sm:$0xff]
    %v130 = vld [vmem:[#allocation2 + $0xb0] sm:$0xff]
    %v131 = vld [vmem:[#allocation2 + $0xb8] sm:$0xff]
    %v132 = vld [vmem:[#allocation2 + $0xc0] sm:$0xff]
    %v133 = vld [vmem:[#allocation2 + $0xc8] sm:$0xff]
    %v134 = vld [vmem:[#allocation2 + $0xd0] sm:$0xff]
    %v135 = vld [vmem:[#allocation2 + $0xd8] sm:$0xff]
    %v136 = vld [vmem:[#allocation2 + $0xe0] sm:$0xff]
    %v137 = vld [vmem:[#allocation2 + $0xe8] sm:$0xff]
    %v138 = vld [vmem:[#allocation2 + $0xf0] sm:$0xff]
    %v139 = vld [vmem:[#allocation2 + $0xf8] sm:$0xff]
    %v140 = vld [vmem:[#allocation2 + $0x100] sm:$0xff]
    %v141 = vld [vmem:[#allocation2 + $0x108] sm:$0xff]
    %v142 = vld [vmem:[#allocation2 + $0x110] sm:$0xff]
    %v143 = vld [vmem:[#allocation2 + $0x118] sm:$0xff]
    %v144 = vld [vmem:[#allocation2 + $0x120] sm:$0xff]
    %v145 = vld [vmem:[#allocation2 + $0x128] sm:$0xff]
    %v146 = vld [vmem:[#allocation2 + $0x130] sm:$0xff]
    %v147 = vld [vmem:[#allocation2 + $0x138] sm:$0xff]
    %v148 = vld [vmem:[#allocation2 + $0x140] sm:$0xff]
    %v149 = vld [vmem:[#allocation2 + $0x148] sm:$0xff]
    %v150 = vld [vmem:[#allocation2 + $0x150] sm:$0xff]
    %v151 = vld [vmem:[#allocation2 + $0x158] sm:$0xff]
    %v152 = vld [vmem:[#allocation2 + $0x160] sm:$0xff]
    %v153 = vld [vmem:[#allocation2 + $0x168] sm:$0xff]
    %v154 = vld [vmem:[#allocation2 + $0x170] sm:$0xff]
    %v155 = vld [vmem:[#allocation2 + $0x178] sm:$0xff]
    %v156 = vld [vmem:[%s4] sm:$0x7]
    %v158 = vlaneseq
    %v159 = vshrl.u32 %v158, 7
    %v160 = vsub.s32 0, %v159
    %v161 = vrot.slane %v156, %v160
    %v162 = vlaneseq
    %v163 = vshrl.u32 %v162, 7
    %v164 = vsub.s32 1, %v163
    %v165 = vrot.slane %v156, %v164
    %v166 = vlaneseq
    %v167 = vshrl.u32 %v166, 7
    %v168 = vsub.s32 2, %v167
    %v169 = vrot.slane %v156, %v168
    %173 = vmatprep.subr.mxu0 %v109
    %174 = vmatpush1.msra.mxu0 %v108
    %175 = vmatprep.subr.mxu0 %v112
    %176 = vmatpush1.msra.mxu0 %v111
    %177 = vmatprep.subr.mxu0 %v115
    %178 = vmatpush1.msra.mxu0 %v114
    %179 = vmatprep.subr.mxu0 %v118
    %180 = vmatpush1.msra.mxu0 %v117
    %181 = vmatprep.subr.mxu0 %v121
    %182 = vmatpush1.msra.mxu0 %v120
    %183 = vmatprep.subr.mxu0 %v124
    %184 = vmatpush1.msra.mxu0 %v123
    %185 = vmatprep.subr.mxu0 %v127
    %186 = vmatpush1.msra.mxu0 %v126
    %187 = vmatprep.subr.mxu0 %v130
    %188 = vmatpush1.msra.mxu0 %v129
    %189 = vmatprep.subr.mxu0 %v133
    %190 = vmatpush1.msra.mxu0 %v132
    %191 = vmatprep.subr.mxu0 %v136
    %192 = vmatpush1.msra.mxu0 %v135
    %193 = vmatprep.subr.mxu0 %v139
    %194 = vmatpush1.msra.mxu0 %v138
    %195 = vmatprep.subr.mxu0 %v142
    %196 = vmatpush1.msra.mxu0 %v141
    %197 = vmatprep.subr.mxu0 %v145
    %198 = vmatpush1.msra.mxu0 %v144
    %199 = vmatprep.subr.mxu0 %v148
    %200 = vmatpush1.msra.mxu0 %v147
    %201 = vmatprep.subr.mxu0 %v151
    %202 = vmatpush1.msra.mxu0 %v150
    %203 = vmatprep.subr.mxu0 %v154
    %204 = vmatpush1.msra.mxu0 %v153
    %205 = vmatprep.subr.mxu0 0.0
    %206 = vmatpush1.msra.mxu0 0.0
    %207 = vmatprep.subr.mxu0 0.0
    %208 = vmatpush1.msra.mxu0 0.0
    %209 = vmatprep.subr.mxu0 0.0
    %210 = vmatpush1.msra.mxu0 0.0
    %211 = vmatprep.subr.mxu0 0.0
    %212 = vmatpush1.msra.mxu0 0.0
    %213 = vmatprep.subr.mxu0 0.0
    %214 = vmatpush1.msra.mxu0 0.0
    %215 = vmatprep.subr.mxu0 0.0
    %216 = vmatpush1.msra.mxu0 0.0
    %217 = vmatprep.subr.mxu0 0.0
    %218 = vmatpush1.msra.mxu0 0.0
    %219 = vmatprep.subr.mxu0 0.0
    %220 = vmatpush1.msra.mxu0 0.0
    %221 = vmatprep.subr.mxu0 0.0
    %222 = vmatpush1.msra.mxu0 0.0
    %223 = vmatprep.subr.mxu0 0.0
    %224 = vmatpush1.msra.mxu0 0.0
    %225 = vmatprep.subr.mxu0 0.0
    %226 = vmatpush1.msra.mxu0 0.0
    %227 = vmatprep.subr.mxu0 0.0
    %228 = vmatpush1.msra.mxu0 0.0
    %229 = vmatprep.subr.mxu0 0.0
    %230 = vmatpush1.msra.mxu0 0.0
    %231 = vmatprep.subr.mxu0 0.0
    %232 = vmatpush1.msra.mxu0 0.0
    %233 = vmatprep.subr.mxu0 0.0
    %234 = vmatpush1.msra.mxu0 0.0
    %235 = vmatprep.subr.mxu0 0.0
    %236 = vmatpush1.msra.mxu0 0.0
    %237 = vmatprep.mubr.f32.mxu0 0.0
    %238 = vmatmul.mubr.f32.gmra.mrb[0].mxu0 %v104
    %v239 = vpop.f32.mrb[0].mxu0
    %v240 = vadd.f32 %v161, %v239
    %v241 = vpop.f32.mrb[0].mxu0
    %v242 = vadd.f32 %v165, %v241
    %243 = vmatprep.mubr.f32.mxu0 0.0
    %244 = vmatmul.mubr.f32.gmra.mrb[0].mxu0 %v105
    %v245 = vpop.f32.mrb[0].mxu0
    %v246 = vadd.f32 %v161, %v245
    %v247 = vpop.f32.mrb[0].mxu0
    %v248 = vadd.f32 %v165, %v247
    %249 = vmatprep.mubr.f32.mxu0 0.0
    %250 = vmatmul.mubr.f32.gmra.mrb[0].mxu0 %v106
    %v251 = vpop.f32.mrb[0].mxu0
    %v252 = vadd.f32 %v161, %v251
    %v253 = vpop.f32.mrb[0].mxu0
    %v254 = vadd.f32 %v165, %v253
    %255 = vmatprep.mubr.f32.mxu0 0.0
    %256 = vmatmul.mubr.f32.gmra.mrb[0].mxu0 %v107
    %v257 = vpop.f32.mrb[0].mxu0
    %v258 = vadd.f32 %v161, %v257
    %v259 = vpop.f32.mrb[0].mxu0
    %v260 = vadd.f32 %v165, %v259
    %261 = vdwg.mxu0
    %262 = vmatprep.subr.mxu0 0.0
    %263 = vmatpush1.msra.mxu0 %v110
    %264 = vmatprep.subr.mxu0 0.0
    %265 = vmatpush1.msra.mxu0 %v113
    %266 = vmatprep.subr.mxu0 0.0
    %267 = vmatpush1.msra.mxu0 %v116
    %268 = vmatprep.subr.mxu0 0.0
    %269 = vmatpush1.msra.mxu0 %v119
    %270 = vmatprep.subr.mxu0 0.0
    %271 = vmatpush1.msra.mxu0 %v122
    %272 = vmatprep.subr.mxu0 0.0
    %273 = vmatpush1.msra.mxu0 %v125
    %274 = vmatprep.subr.mxu0 0.0
    %275 = vmatpush1.msra.mxu0 %v128
    %276 = vmatprep.subr.mxu0 0.0
    %277 = vmatpush1.msra.mxu0 %v131
    %278 = vmatprep.subr.mxu0 0.0
    %279 = vmatpush1.msra.mxu0 %v134
    %280 = vmatprep.subr.mxu0 0.0
    %281 = vmatpush1.msra.mxu0 %v137
    %282 = vmatprep.subr.mxu0 0.0
    %283 = vmatpush1.msra.mxu0 %v140
    %284 = vmatprep.subr.mxu0 0.0
    %285 = vmatpush1.msra.mxu0 %v143
    %286 = vmatprep.subr.mxu0 0.0
    %287 = vmatpush1.msra.mxu0 %v146
    %288 = vmatprep.subr.mxu0 0.0
    %289 = vmatpush1.msra.mxu0 %v149
    %290 = vmatprep.subr.mxu0 0.0
    %291 = vmatpush1.msra.mxu0 %v152
    %292 = vmatprep.subr.mxu0 0.0
    %293 = vmatpush1.msra.mxu0 %v155
    %294 = vmatprep.subr.mxu0 0.0
    %295 = vmatpush1.msra.mxu0 0.0
    %296 = vmatprep.subr.mxu0 0.0
    %297 = vmatpush1.msra.mxu0 0.0
    %298 = vmatprep.subr.mxu0 0.0
    %299 = vmatpush1.msra.mxu0 0.0
    %300 = vmatprep.subr.mxu0 0.0
    %301 = vmatpush1.msra.mxu0 0.0
    %302 = vmatprep.subr.mxu0 0.0
    %303 = vmatpush1.msra.mxu0 0.0
    %304 = vmatprep.subr.mxu0 0.0
    %305 = vmatpush1.msra.mxu0 0.0
    %306 = vmatprep.subr.mxu0 0.0
    %307 = vmatpush1.msra.mxu0 0.0
    %308 = vmatprep.subr.mxu0 0.0
    %309 = vmatpush1.msra.mxu0 0.0
    %310 = vmatprep.subr.mxu0 0.0
    %311 = vmatpush1.msra.mxu0 0.0
    %312 = vmatprep.subr.mxu0 0.0
    %313 = vmatpush1.msra.mxu0 0.0
    %314 = vmatprep.subr.mxu0 0.0
    %315 = vmatpush1.msra.mxu0 0.0
    %316 = vmatprep.subr.mxu0 0.0
    %317 = vmatpush1.msra.mxu0 0.0
    %318 = vmatprep.subr.mxu0 0.0
    %319 = vmatpush1.msra.mxu0 0.0
    %320 = vmatprep.subr.mxu0 0.0
    %321 = vmatpush1.msra.mxu0 0.0
    %322 = vmatprep.subr.mxu0 0.0
    %323 = vmatpush1.msra.mxu0 0.0
    %324 = vmatprep.subr.mxu0 0.0
    %325 = vmatpush1.msra.mxu0 0.0
    %326 = vmatprep.mubr.f32.mxu0 0.0
    %327 = vmatmul.mubr.f32.gmra.mrb[0].mxu0 %v104
    %v328 = vpop.f32.mrb[0].mxu0
    %v329 = vadd.f32 %v169, %v328
    %v330 = vpop.f32.mrb[0].mxu0
    %331 = vmatprep.mubr.f32.mxu0 0.0
    %332 = vmatmul.mubr.f32.gmra.mrb[0].mxu0 %v105
    %v333 = vpop.f32.mrb[0].mxu0
    %v334 = vadd.f32 %v169, %v333
    %v335 = vpop.f32.mrb[0].mxu0
    %336 = vmatprep.mubr.f32.mxu0 0.0
    %337 = vmatmul.mubr.f32.gmra.mrb[0].mxu0 %v106
    %v338 = vpop.f32.mrb[0].mxu0
    %v339 = vadd.f32 %v169, %v338
    %v340 = vpop.f32.mrb[0].mxu0
    %341 = vmatprep.mubr.f32.mxu0 0.0
    %342 = vmatmul.mubr.f32.gmra.mrb[0].mxu0 %v107
    %v343 = vpop.f32.mrb[0].mxu0
    %v344 = vadd.f32 %v169, %v343
    %v345 = vpop.f32.mrb[0].mxu0
    %346 = vdwg.mxu0
    %347 = vst [vmem:[%s5] sm:$0xff] %v240
    %348 = vst [vmem:[%s5 + $0x8] sm:$0xff] %v246
    %349 = vst [vmem:[%s5 + $0x10] sm:$0xff] %v252
    %350 = vst [vmem:[%s5 + $0x18] sm:$0xff] %v258
    %351 = vst [vmem:[%s6] sm:$0xff] %v242
    %352 = vst [vmem:[%s6 + $0x8] sm:$0xff] %v248
    %353 = vst [vmem:[%s6 + $0x10] sm:$0xff] %v254
    %354 = vst [vmem:[%s6 + $0x18] sm:$0xff] %v260
    %355 = vst [vmem:[%s7] sm:$0xff] %v329
    %356 = vst [vmem:[%s7 + $0x8] sm:$0xff] %v334
    %357 = vst [vmem:[%s7 + $0x10] sm:$0xff] %v339
    %358 = vst [vmem:[%s7 + $0x18] sm:$0xff] %v344
    // Predicated region
    $region26: #{transformer_block_forward.3} parent=1 // pred_check
      _
    $region27: #{transformer_block_forward.3} parent=1 // pred_check_branch
      %360 = sbr.rel (0) target = $region29
    $region28: #{transformer_block_forward.3} parent=1 // pred_region
      _
    $region29: #{transformer_block_forward.3} parent=1 // pred_fallthru
      _
    // Predicated region
    $region30: #{transformer_block_forward.3} parent=1 // pred_check
      _
    $region31: #{transformer_block_forward.3} parent=1 // pred_check_branch
      %362 = sbr.rel (0) target = $region33
    $region32: #{transformer_block_forward.3} parent=1 // pred_region
      _
    $region33: #{transformer_block_forward.3} parent=1 // pred_fallthru
      _
    // Predicated region
    $region34: #{transformer_block_forward.3} parent=1 // pred_check
      _
    $region35: #{transformer_block_forward.3} parent=1 // pred_check_branch
      %364 = sbr.rel (0) target = $region37
    $region36: #{transformer_block_forward.3} parent=1 // pred_region
      _
    $region37: #{transformer_block_forward.3} parent=1 // pred_fallthru
      _
    // Predicated region
    $region38: #{transformer_block_forward.3} parent=1 // pred_check
      _
    $region39: #{transformer_block_forward.3} parent=1 // pred_check_branch
      %366 = sbr.rel (0) target = $region41
    $region40: #{transformer_block_forward.3} parent=1 // pred_region
      _
    $region41: #{transformer_block_forward.3} parent=1 // pred_fallthru
      _
    // Predicated region
    $region42: #{transformer_block_forward.3} parent=1 // pred_check
      _
    $region43: #{transformer_block_forward.3} parent=1 // pred_check_branch
      %368 = sbr.rel (0) target = $region45
    $region44: #{transformer_block_forward.3} parent=1 // pred_region
      _
    $region45: #{transformer_block_forward.3} parent=1 // pred_fallthru
      _
    // Predicated region
    $region46: #{transformer_block_forward.3} parent=1 // pred_check
      _
    $region47: #{transformer_block_forward.3} parent=1 // pred_check_branch
      %370 = sbr.rel (0) target = $region49
    $region48: #{transformer_block_forward.3} parent=1 // pred_region
      _
    $region49: #{transformer_block_forward.3} parent=1 // pred_fallthru
      _
    %371 = vsyncpa [#allocation3], 1

// kernel: transformer_block_forward.5
$region0: #{transformer_block_forward.5}
  #allocation0 [shape = 'u32[]', space=smem, size = 0x4, offset = 0x4, fixed_abs, tag = 'smem constant byte address 0x4 - core index']
  #allocation1 [shape = 'u32[144,128]{1,0:T(1,128)}', space=vmem, size = 0x12000, scoped, tag = 'internal scratch']
  #allocation2 [shape = 'f32[32,128]{1,0:T(8,128)}', space=vmem, size = 0x4000, scoped, tag = 'scratch operand']
  #allocation3 [shape = 'f32[32,128]{1,0:T(8,128)}', space=vmem, size = 0x4000, scoped, tag = 'scratch operand']
  %s0 = inlined_call_operand.vmem [shape: f32[32,128], index: 0, kind: input, shape index: {}]
  %s1 = inlined_call_operand.vmem [shape: f32[1,128], index: 1, kind: input, shape index: {}]
  %s2 = inlined_call_operand.vmem [shape: f32[1,128], index: 2, kind: input, shape index: {}]
  %s3 = inlined_call_operand.vmem [shape: f32[128,256], index: 3, kind: input, shape index: {}]
  %s4 = inlined_call_operand.vmem [shape: f32[1,256], index: 4, kind: input, shape index: {}]
  %s5 = inlined_call_operand.vmem [shape: f32[256,128], index: 5, kind: input, shape index: {}]
  %s6 = inlined_call_operand.vmem [shape: f32[1,128], index: 6, kind: input, shape index: {}]
  %s7 = inlined_call_operand.hbm [shape: f32[32,128], index: 7, kind: output, shape index: {}]
  %s8 = sld [smem:[#allocation0]]
  $region46: #{transformer_block_forward.5} parent=0
    _
  %s10 = ssub.s32 1, %s8
  %s11 = scalar_select 0, %s10, %s8
  $region1: #{transformer_block_forward.5} parent=0
    #allocation4 [shape = 'u8[16384]{0}', space=vmem, size = 0x4000, scoped, tag = 'output window, operand 0, single buffered']
    #allocation5 [shape = 's32[1]{0}', space=sflag, size = 0x4, scoped, tag = 'scoped memory for transformer_block_forward.5']
    %12 = vsyncpa [#allocation5], 0
    // Predicated region
    $region2: #{transformer_block_forward.5} parent=1 // pred_check
      _
    $region3: #{transformer_block_forward.5} parent=1 // pred_check_branch
      %14 = sbr.rel (0) target = $region5
    $region4: #{transformer_block_forward.5} parent=1 // pred_region
      _
    $region5: #{transformer_block_forward.5} parent=1 // pred_fallthru
      _
    // Predicated region
    $region6: #{transformer_block_forward.5} parent=1 // pred_check
      _
    $region7: #{transformer_block_forward.5} parent=1 // pred_check_branch
      %16 = sbr.rel (0) target = $region9
    $region8: #{transformer_block_forward.5} parent=1 // pred_region
      _
    $region9: #{transformer_block_forward.5} parent=1 // pred_fallthru
      _
    // Predicated region
    $region10: #{transformer_block_forward.5} parent=1 // pred_check
      _
    $region11: #{transformer_block_forward.5} parent=1 // pred_check_branch
      %18 = sbr.rel (0) target = $region13
    $region12: #{transformer_block_forward.5} parent=1 // pred_region
      _
    $region13: #{transformer_block_forward.5} parent=1 // pred_fallthru
      _
    // Predicated region
    $region14: #{transformer_block_forward.5} parent=1 // pred_check
      _
    $region15: #{transformer_block_forward.5} parent=1 // pred_check_branch
      %20 = sbr.rel (0) target = $region17
    $region16: #{transformer_block_forward.5} parent=1 // pred_region
      _
    $region17: #{transformer_block_forward.5} parent=1 // pred_fallthru
      _
    // Predicated region
    $region18: #{transformer_block_forward.5} parent=1 // pred_check
      _
    $region19: #{transformer_block_forward.5} parent=1 // pred_check_branch
      %22 = sbr.rel (0) target = $region21
    $region20: #{transformer_block_forward.5} parent=1 // pred_region
      _
    $region21: #{transformer_block_forward.5} parent=1 // pred_fallthru
      _
    // Predicated region
    $region22: #{transformer_block_forward.5} parent=1 // pred_check
      _
    $region23: #{transformer_block_forward.5} parent=1 // pred_check_branch
      %24 = sbr.rel (0) target = $region25
    $region24: #{transformer_block_forward.5} parent=1 // pred_region
      _
    $region25: #{transformer_block_forward.5} parent=1 // pred_fallthru
      _
    // Predicated region
    $region26: #{transformer_block_forward.5} parent=1 // pred_check
      _
    $region27: #{transformer_block_forward.5} parent=1 // pred_check_branch
      %26 = sbr.rel (0) target = $region29
    $region28: #{transformer_block_forward.5} parent=1 // pred_region
      _
    $region29: #{transformer_block_forward.5} parent=1 // pred_fallthru
      _
    %p27 = scmp.eq.s32.totalorder 0, 0
    // Predicated region
    $region30: #{transformer_block_forward.5} parent=1 // pred_check
      %p28 = pneg %p27
    $region31: #{transformer_block_forward.5} parent=1 // pred_check_branch
      %30 = sbr.rel (%p28) target = $region33
    $region32: #{transformer_block_forward.5} parent=1 // pred_region
      %v31 = vld [vmem:[%s0] sm:$0xff]
      %v32 = vld [vmem:[%s0 + $0x8] sm:$0xff]
      %v33 = vld [vmem:[%s0 + $0x10] sm:$0xff]
      %v34 = vld [vmem:[%s0 + $0x18] sm:$0xff]
      %35 = vadd.xlane.f32.xlu0 %v31
      %v36 = vpop.xlane.xlu0 %35
      %37 = vadd.xlane.f32.xlu0 %v32
      %v38 = vpop.xlane.xlu0 %37
      %39 = vadd.xlane.f32.xlu0 %v33
      %v40 = vpop.xlane.xlu0 %39
      %41 = vadd.xlane.f32.xlu0 %v34
      %v42 = vpop.xlane.xlu0 %41
      %v43 = vrcp.pop 128.0
      %v44 = vmul.f32 %v36, %v43
      %v45 = vmul.f32 %v38, %v43
      %v46 = vmul.f32 %v40, %v43
      %v47 = vmul.f32 %v42, %v43
      %v48 = vsub.f32 %v31, %v44
      %v49 = vsub.f32 %v32, %v45
      %v50 = vsub.f32 %v33, %v46
      %v51 = vsub.f32 %v34, %v47
      %v52 = vmul.f32 %v48, %v48
      %v53 = vmul.f32 %v49, %v49
      %v54 = vmul.f32 %v50, %v50
      %v55 = vmul.f32 %v51, %v51
      %56 = vadd.xlane.f32.xlu0 %v52
      %v57 = vpop.xlane.xlu0 %56
      %58 = vadd.xlane.f32.xlu0 %v53
      %v59 = vpop.xlane.xlu0 %58
      %60 = vadd.xlane.f32.xlu0 %v54
      %v61 = vpop.xlane.xlu0 %60
      %62 = vadd.xlane.f32.xlu0 %v55
      %v63 = vpop.xlane.xlu0 %62
      %v64 = vmul.f32 %v57, %v43
      %v65 = vmul.f32 %v59, %v43
      %v66 = vmul.f32 %v61, %v43
      %v67 = vmul.f32 %v63, %v43
      %v68 = vadd.f32 %v64, 1e-05
      %v69 = vadd.f32 %v65, 1e-05
      %v70 = vadd.f32 %v66, 1e-05
      %v71 = vadd.f32 %v67, 1e-05
      %v72 = vrsqrt.pop %v68
      %v73 = vrsqrt.pop %v69
      %v74 = vrsqrt.pop %v70
      %v75 = vrsqrt.pop %v71
      %v76 = vmul.f32 %v48, %v72
      %v77 = vmul.f32 %v49, %v73
      %v78 = vmul.f32 %v50, %v74
      %v79 = vmul.f32 %v51, %v75
      %v80 = vld [vmem:[%s1] sm:$0x1]
      %v82 = vlaneseq
      %v83 = vshrl.u32 %v82, 7
      %v84 = vsub.s32 0, %v83
      %v85 = vrot.slane %v80, %v84
      %v87 = vmul.f32 %v76, %v85
      %v88 = vmul.f32 %v77, %v85
      %v89 = vmul.f32 %v78, %v85
      %v90 = vmul.f32 %v79, %v85
      %v91 = vld [vmem:[%s2] sm:$0x1]
      %v93 = vlaneseq
      %v94 = vshrl.u32 %v93, 7
      %v95 = vsub.s32 0, %v94
      %v96 = vrot.slane %v91, %v95
      %v98 = vadd.f32 %v87, %v96
      %v99 = vadd.f32 %v88, %v96
      %v100 = vadd.f32 %v89, %v96
      %v101 = vadd.f32 %v90, %v96
      %102 = vst [vmem:[#allocation2] sm:$0xff] %v98
      %103 = vst [vmem:[#allocation2 + $0x8] sm:$0xff] %v99
      %104 = vst [vmem:[#allocation2 + $0x10] sm:$0xff] %v100
      %105 = vst [vmem:[#allocation2 + $0x18] sm:$0xff] %v101
      %106 = vst [vmem:[#allocation3] sm:$0xff] 0.0
      %107 = vst [vmem:[#allocation3 + $0x8] sm:$0xff] 0.0
      %108 = vst [vmem:[#allocation3 + $0x10] sm:$0xff] 0.0
      %109 = vst [vmem:[#allocation3 + $0x18] sm:$0xff] 0.0
    $region33: #{transformer_block_forward.5} parent=1 // pred_fallthru
      _
    %v110 = vld [vmem:[#allocation2] sm:$0xff]
    %v111 = vld [vmem:[#allocation2 + $0x8] sm:$0xff]
    %v112 = vld [vmem:[#allocation2 + $0x10] sm:$0xff]
    %v113 = vld [vmem:[#allocation2 + $0x18] sm:$0xff]
    %v114 = vld [vmem:[%s3] sm:$0xff]
    %v115 = vld [vmem:[%s3 + $0x8] sm:$0xff]
    %v116 = vld [vmem:[%s3 + $0x10] sm:$0xff]
    %v117 = vld [vmem:[%s3 + $0x18] sm:$0xff]
    %v118 = vld [vmem:[%s3 + $0x20] sm:$0xff]
    %v119 = vld [vmem:[%s3 + $0x28] sm:$0xff]
    %v120 = vld [vmem:[%s3 + $0x30] sm:$0xff]
    %v121 = vld [vmem:[%s3 + $0x38] sm:$0xff]
    %v122 = vld [vmem:[%s3 + $0x40] sm:$0xff]
    %v123 = vld [vmem:[%s3 + $0x48] sm:$0xff]
    %v124 = vld [vmem:[%s3 + $0x50] sm:$0xff]
    %v125 = vld [vmem:[%s3 + $0x58] sm:$0xff]
    %v126 = vld [vmem:[%s3 + $0x60] sm:$0xff]
    %v127 = vld [vmem:[%s3 + $0x68] sm:$0xff]
    %v128 = vld [vmem:[%s3 + $0x70] sm:$0xff]
    %v129 = vld [vmem:[%s3 + $0x78] sm:$0xff]
    %v130 = vld [vmem:[%s3 + $0x80] sm:$0xff]
    %v131 = vld [vmem:[%s3 + $0x88] sm:$0xff]
    %v132 = vld [vmem:[%s3 + $0x90] sm:$0xff]
    %v133 = vld [vmem:[%s3 + $0x98] sm:$0xff]
    %v134 = vld [vmem:[%s3 + $0xa0] sm:$0xff]
    %v135 = vld [vmem:[%s3 + $0xa8] sm:$0xff]
    %v136 = vld [vmem:[%s3 + $0xb0] sm:$0xff]
    %v137 = vld [vmem:[%s3 + $0xb8] sm:$0xff]
    %v138 = vld [vmem:[%s3 + $0xc0] sm:$0xff]
    %v139 = vld [vmem:[%s3 + $0xc8] sm:$0xff]
    %v140 = vld [vmem:[%s3 + $0xd0] sm:$0xff]
    %v141 = vld [vmem:[%s3 + $0xd8] sm:$0xff]
    %v142 = vld [vmem:[%s3 + $0xe0] sm:$0xff]
    %v143 = vld [vmem:[%s3 + $0xe8] sm:$0xff]
    %v144 = vld [vmem:[%s3 + $0xf0] sm:$0xff]
    %v145 = vld [vmem:[%s3 + $0xf8] sm:$0xff]
    %v146 = vld [vmem:[%s4] sm:$0x3]
    %v148 = vlaneseq
    %v149 = vshrl.u32 %v148, 7
    %v150 = vsub.s32 0, %v149
    %v151 = vrot.slane %v146, %v150
    %v152 = vlaneseq
    %v153 = vshrl.u32 %v152, 7
    %v154 = vsub.s32 1, %v153
    %v155 = vrot.slane %v146, %v154
    %158 = vmatprep.subr.mxu0 %v115
    %159 = vmatpush1.msra.mxu0 %v114
    %160 = vmatprep.subr.mxu0 %v117
    %161 = vmatpush1.msra.mxu0 %v116
    %162 = vmatprep.subr.mxu0 %v119
    %163 = vmatpush1.msra.mxu0 %v118
    %164 = vmatprep.subr.mxu0 %v121
    %165 = vmatpush1.msra.mxu0 %v120
    %166 = vmatprep.subr.mxu0 %v123
    %167 = vmatpush1.msra.mxu0 %v122
    %168 = vmatprep.subr.mxu0 %v125
    %169 = vmatpush1.msra.mxu0 %v124
    %170 = vmatprep.subr.mxu0 %v127
    %171 = vmatpush1.msra.mxu0 %v126
    %172 = vmatprep.subr.mxu0 %v129
    %173 = vmatpush1.msra.mxu0 %v128
    %174 = vmatprep.subr.mxu0 %v131
    %175 = vmatpush1.msra.mxu0 %v130
    %176 = vmatprep.subr.mxu0 %v133
    %177 = vmatpush1.msra.mxu0 %v132
    %178 = vmatprep.subr.mxu0 %v135
    %179 = vmatpush1.msra.mxu0 %v134
    %180 = vmatprep.subr.mxu0 %v137
    %181 = vmatpush1.msra.mxu0 %v136
    %182 = vmatprep.subr.mxu0 %v139
    %183 = vmatpush1.msra.mxu0 %v138
    %184 = vmatprep.subr.mxu0 %v141
    %185 = vmatpush1.msra.mxu0 %v140
    %186 = vmatprep.subr.mxu0 %v143
    %187 = vmatpush1.msra.mxu0 %v142
    %188 = vmatprep.subr.mxu0 %v145
    %189 = vmatpush1.msra.mxu0 %v144
    %190 = vmatprep.subr.mxu0 0.0
    %191 = vmatpush1.msra.mxu0 0.0
    %192 = vmatprep.subr.mxu0 0.0
    %193 = vmatpush1.msra.mxu0 0.0
    %194 = vmatprep.subr.mxu0 0.0
    %195 = vmatpush1.msra.mxu0 0.0
    %196 = vmatprep.subr.mxu0 0.0
    %197 = vmatpush1.msra.mxu0 0.0
    %198 = vmatprep.subr.mxu0 0.0
    %199 = vmatpush1.msra.mxu0 0.0
    %200 = vmatprep.subr.mxu0 0.0
    %201 = vmatpush1.msra.mxu0 0.0
    %202 = vmatprep.subr.mxu0 0.0
    %203 = vmatpush1.msra.mxu0 0.0
    %204 = vmatprep.subr.mxu0 0.0
    %205 = vmatpush1.msra.mxu0 0.0
    %206 = vmatprep.subr.mxu0 0.0
    %207 = vmatpush1.msra.mxu0 0.0
    %208 = vmatprep.subr.mxu0 0.0
    %209 = vmatpush1.msra.mxu0 0.0
    %210 = vmatprep.subr.mxu0 0.0
    %211 = vmatpush1.msra.mxu0 0.0
    %212 = vmatprep.subr.mxu0 0.0
    %213 = vmatpush1.msra.mxu0 0.0
    %214 = vmatprep.subr.mxu0 0.0
    %215 = vmatpush1.msra.mxu0 0.0
    %216 = vmatprep.subr.mxu0 0.0
    %217 = vmatpush1.msra.mxu0 0.0
    %218 = vmatprep.subr.mxu0 0.0
    %219 = vmatpush1.msra.mxu0 0.0
    %220 = vmatprep.subr.mxu0 0.0
    %221 = vmatpush1.msra.mxu0 0.0
    %222 = vmatprep.mubr.f32.mxu0 0.0
    %223 = vmatmul.mubr.f32.gmra.mrb[0].mxu0 %v110
    %v224 = vpop.f32.mrb[0].mxu0
    %v225 = vadd.f32 %v151, %v224
    %v226 = vpop.f32.mrb[0].mxu0
    %v227 = vadd.f32 %v155, %v226
    %228 = vmatprep.mubr.f32.mxu0 0.0
    %229 = vmatmul.mubr.f32.gmra.mrb[0].mxu0 %v111
    %v230 = vpop.f32.mrb[0].mxu0
    %v231 = vadd.f32 %v151, %v230
    %v232 = vpop.f32.mrb[0].mxu0
    %v233 = vadd.f32 %v155, %v232
    %234 = vmatprep.mubr.f32.mxu0 0.0
    %235 = vmatmul.mubr.f32.gmra.mrb[0].mxu0 %v112
    %v236 = vpop.f32.mrb[0].mxu0
    %v237 = vadd.f32 %v151, %v236
    %v238 = vpop.f32.mrb[0].mxu0
    %v239 = vadd.f32 %v155, %v238
    %240 = vmatprep.mubr.f32.mxu0 0.0
    %241 = vmatmul.mubr.f32.gmra.mrb[0].mxu0 %v113
    %v242 = vpop.f32.mrb[0].mxu0
    %v243 = vadd.f32 %v151, %v242
    %v244 = vpop.f32.mrb[0].mxu0
    %v245 = vadd.f32 %v155, %v244
    %246 = vdwg.mxu0
    %v247 = vmul.f32 %v225, 0.5
    %v248 = vmul.f32 %v227, 0.5
    %v249 = vmul.f32 %v231, 0.5
    %v250 = vmul.f32 %v233, 0.5
    %v251 = vmul.f32 %v237, 0.5
    %v252 = vmul.f32 %v239, 0.5
    %v253 = vmul.f32 %v243, 0.5
    %v254 = vmul.f32 %v245, 0.5
    %v255 = vmul.f32 %v225, 0.70710677
    %v256 = vmul.f32 %v227, 0.70710677
    %v257 = vmul.f32 %v231, 0.70710677
    %v258 = vmul.f32 %v233, 0.70710677
    %v259 = vmul.f32 %v237, 0.70710677
    %v260 = vmul.f32 %v239, 0.70710677
    %v261 = vmul.f32 %v243, 0.70710677
    %v262 = vmul.f32 %v245, 0.70710677
    %v263 = verf.f32.pop %v255
    %v264 = verf.f32.pop %v256
    %v265 = verf.f32.pop %v257
    %v266 = verf.f32.pop %v258
    %v267 = verf.f32.pop %v259
    %v268 = verf.f32.pop %v260
    %v269 = verf.f32.pop %v261
    %v270 = verf.f32.pop %v262
    %v271 = vadd.f32 %v263, 1.0
    %v272 = vadd.f32 %v264, 1.0
    %v273 = vadd.f32 %v265, 1.0
    %v274 = vadd.f32 %v266, 1.0
    %v275 = vadd.f32 %v267, 1.0
    %v276 = vadd.f32 %v268, 1.0
    %v277 = vadd.f32 %v269, 1.0
    %v278 = vadd.f32 %v270, 1.0
    %v279 = vmul.f32 %v247, %v271
    %v280 = vmul.f32 %v248, %v272
    %v281 = vmul.f32 %v249, %v273
    %v282 = vmul.f32 %v250, %v274
    %v283 = vmul.f32 %v251, %v275
    %v284 = vmul.f32 %v252, %v276
    %v285 = vmul.f32 %v253, %v277
    %v286 = vmul.f32 %v254, %v278
    %v287 = vld [vmem:[#allocation3] sm:$0xff]
    %v288 = vld [vmem:[#allocation3 + $0x8] sm:$0xff]
    %v289 = vld [vmem:[#allocation3 + $0x10] sm:$0xff]
    %v290 = vld [vmem:[#allocation3 + $0x18] sm:$0xff]
    %v291 = vld [vmem:[%s5] sm:$0xff]
    %v292 = vld [vmem:[%s5 + $0x8] sm:$0xff]
    %v293 = vld [vmem:[%s5 + $0x10] sm:$0xff]
    %v294 = vld [vmem:[%s5 + $0x18] sm:$0xff]
    %v295 = vld [vmem:[%s5 + $0x20] sm:$0xff]
    %v296 = vld [vmem:[%s5 + $0x28] sm:$0xff]
    %v297 = vld [vmem:[%s5 + $0x30] sm:$0xff]
    %v298 = vld [vmem:[%s5 + $0x38] sm:$0xff]
    %v299 = vld [vmem:[%s5 + $0x40] sm:$0xff]
    %v300 = vld [vmem:[%s5 + $0x48] sm:$0xff]
    %v301 = vld [vmem:[%s5 + $0x50] sm:$0xff]
    %v302 = vld [vmem:[%s5 + $0x58] sm:$0xff]
    %v303 = vld [vmem:[%s5 + $0x60] sm:$0xff]
    %v304 = vld [vmem:[%s5 + $0x68] sm:$0xff]
    %v305 = vld [vmem:[%s5 + $0x70] sm:$0xff]
    %v306 = vld [vmem:[%s5 + $0x78] sm:$0xff]
    %v307 = vld [vmem:[%s5 + $0x80] sm:$0xff]
    %v308 = vld [vmem:[%s5 + $0x88] sm:$0xff]
    %v309 = vld [vmem:[%s5 + $0x90] sm:$0xff]
    %v310 = vld [vmem:[%s5 + $0x98] sm:$0xff]
    %v311 = vld [vmem:[%s5 + $0xa0] sm:$0xff]
    %v312 = vld [vmem:[%s5 + $0xa8] sm:$0xff]
    %v313 = vld [vmem:[%s5 + $0xb0] sm:$0xff]
    %v314 = vld [vmem:[%s5 + $0xb8] sm:$0xff]
    %v315 = vld [vmem:[%s5 + $0xc0] sm:$0xff]
    %v316 = vld [vmem:[%s5 + $0xc8] sm:$0xff]
    %v317 = vld [vmem:[%s5 + $0xd0] sm:$0xff]
    %v318 = vld [vmem:[%s5 + $0xd8] sm:$0xff]
    %v319 = vld [vmem:[%s5 + $0xe0] sm:$0xff]
    %v320 = vld [vmem:[%s5 + $0xe8] sm:$0xff]
    %v321 = vld [vmem:[%s5 + $0xf0] sm:$0xff]
    %v322 = vld [vmem:[%s5 + $0xf8] sm:$0xff]
    %323 = vmatprep.subr.mxu0 0.0
    %324 = vmatpush1.msra.mxu0 %v291
    %325 = vmatprep.subr.mxu0 0.0
    %326 = vmatpush1.msra.mxu0 %v292
    %327 = vmatprep.subr.mxu0 0.0
    %328 = vmatpush1.msra.mxu0 %v293
    %329 = vmatprep.subr.mxu0 0.0
    %330 = vmatpush1.msra.mxu0 %v294
    %331 = vmatprep.subr.mxu0 0.0
    %332 = vmatpush1.msra.mxu0 %v295
    %333 = vmatprep.subr.mxu0 0.0
    %334 = vmatpush1.msra.mxu0 %v296
    %335 = vmatprep.subr.mxu0 0.0
    %336 = vmatpush1.msra.mxu0 %v297
    %337 = vmatprep.subr.mxu0 0.0
    %338 = vmatpush1.msra.mxu0 %v298
    %339 = vmatprep.subr.mxu0 0.0
    %340 = vmatpush1.msra.mxu0 %v299
    %341 = vmatprep.subr.mxu0 0.0
    %342 = vmatpush1.msra.mxu0 %v300
    %343 = vmatprep.subr.mxu0 0.0
    %344 = vmatpush1.msra.mxu0 %v301
    %345 = vmatprep.subr.mxu0 0.0
    %346 = vmatpush1.msra.mxu0 %v302
    %347 = vmatprep.subr.mxu0 0.0
    %348 = vmatpush1.msra.mxu0 %v303
    %349 = vmatprep.subr.mxu0 0.0
    %350 = vmatpush1.msra.mxu0 %v304
    %351 = vmatprep.subr.mxu0 0.0
    %352 = vmatpush1.msra.mxu0 %v305
    %353 = vmatprep.subr.mxu0 0.0
    %354 = vmatpush1.msra.mxu0 %v306
    %355 = vmatprep.subr.mxu0 0.0
    %356 = vmatpush1.msra.mxu0 %v307
    %357 = vmatprep.subr.mxu0 0.0
    %358 = vmatpush1.msra.mxu0 %v308
    %359 = vmatprep.subr.mxu0 0.0
    %360 = vmatpush1.msra.mxu0 %v309
    %361 = vmatprep.subr.mxu0 0.0
    %362 = vmatpush1.msra.mxu0 %v310
    %363 = vmatprep.subr.mxu0 0.0
    %364 = vmatpush1.msra.mxu0 %v311
    %365 = vmatprep.subr.mxu0 0.0
    %366 = vmatpush1.msra.mxu0 %v312
    %367 = vmatprep.subr.mxu0 0.0
    %368 = vmatpush1.msra.mxu0 %v313
    %369 = vmatprep.subr.mxu0 0.0
    %370 = vmatpush1.msra.mxu0 %v314
    %371 = vmatprep.subr.mxu0 0.0
    %372 = vmatpush1.msra.mxu0 %v315
    %373 = vmatprep.subr.mxu0 0.0
    %374 = vmatpush1.msra.mxu0 %v316
    %375 = vmatprep.subr.mxu0 0.0
    %376 = vmatpush1.msra.mxu0 %v317
    %377 = vmatprep.subr.mxu0 0.0
    %378 = vmatpush1.msra.mxu0 %v318
    %379 = vmatprep.subr.mxu0 0.0
    %380 = vmatpush1.msra.mxu0 %v319
    %381 = vmatprep.subr.mxu0 0.0
    %382 = vmatpush1.msra.mxu0 %v320
    %383 = vmatprep.subr.mxu0 0.0
    %384 = vmatpush1.msra.mxu0 %v321
    %385 = vmatprep.subr.mxu0 0.0
    %386 = vmatpush1.msra.mxu0 %v322
    %387 = vmatprep.mubr.f32.mxu0 %v280
    %388 = vmatmul.mubr.f32.gmra.mrb[0].mxu0 %v279
    %v389 = vpop.f32.mrb[0].mxu0
    %v390 = vadd.f32 0.0, %v389
    %v391 = vpop.f32.mrb[0].mxu0
    %392 = vmatprep.mubr.f32.mxu0 %v282
    %393 = vmatmul.mubr.f32.gmra.mrb[0].mxu0 %v281
    %v394 = vpop.f32.mrb[0].mxu0
    %v395 = vadd.f32 0.0, %v394
    %v396 = vpop.f32.mrb[0].mxu0
    %397 = vmatprep.mubr.f32.mxu0 %v284
    %398 = vmatmul.mubr.f32.gmra.mrb[0].mxu0 %v283
    %v399 = vpop.f32.mrb[0].mxu0
    %v400 = vadd.f32 0.0, %v399
    %v401 = vpop.f32.mrb[0].mxu0
    %402 = vmatprep.mubr.f32.mxu0 %v286
    %403 = vmatmul.mubr.f32.gmra.mrb[0].mxu0 %v285
    %v404 = vpop.f32.mrb[0].mxu0
    %v405 = vadd.f32 0.0, %v404
    %v406 = vpop.f32.mrb[0].mxu0
    %407 = vdwg.mxu0
    %v408 = vadd.f32 %v287, %v390
    %v409 = vadd.f32 %v288, %v395
    %v410 = vadd.f32 %v289, %v400
    %v411 = vadd.f32 %v290, %v405
    %412 = vst [vmem:[#allocation3] sm:$0xff] %v408
    %413 = vst [vmem:[#allocation3 + $0x8] sm:$0xff] %v409
    %414 = vst [vmem:[#allocation3 + $0x10] sm:$0xff] %v410
    %415 = vst [vmem:[#allocation3 + $0x18] sm:$0xff] %v411
    // Predicated region
    $region34: #{transformer_block_forward.5} parent=1 // pred_check
      %p416 = pneg %p27
    $region35: #{transformer_block_forward.5} parent=1 // pred_check_branch
      %418 = sbr.rel (%p416) target = $region37
    $region36: #{transformer_block_forward.5} parent=1 // pred_region
      %v419 = vld [vmem:[#allocation3] sm:$0xff]
      %v420 = vld [vmem:[#allocation3 + $0x8] sm:$0xff]
      %v421 = vld [vmem:[#allocation3 + $0x10] sm:$0xff]
      %v422 = vld [vmem:[#allocation3 + $0x18] sm:$0xff]
      %v423 = vld [vmem:[%s6] sm:$0x1]
      %v425 = vlaneseq
      %v426 = vshrl.u32 %v425, 7
      %v427 = vsub.s32 0, %v426
      %v428 = vrot.slane %v423, %v427
      %v430 = vadd.f32 %v419, %v428
      %v431 = vadd.f32 %v420, %v428
      %v432 = vadd.f32 %v421, %v428
      %v433 = vadd.f32 %v422, %v428
      %v434 = vld [vmem:[%s0] sm:$0xff]
      %v435 = vld [vmem:[%s0 + $0x8] sm:$0xff]
      %v436 = vld [vmem:[%s0 + $0x10] sm:$0xff]
      %v437 = vld [vmem:[%s0 + $0x18] sm:$0xff]
      %v438 = vadd.f32 %v430, %v434
      %v439 = vadd.f32 %v431, %v435
      %v440 = vadd.f32 %v432, %v436
      %v441 = vadd.f32 %v433, %v437
      %442 = vst [vmem:[#allocation4] sm:$0xff] %v438
      %443 = vst [vmem:[#allocation4 + $0x8] sm:$0xff] %v439
      %444 = vst [vmem:[#allocation4 + $0x10] sm:$0xff] %v440
      %445 = vst [vmem:[#allocation4 + $0x18] sm:$0xff] %v441
    $region37: #{transformer_block_forward.5} parent=1 // pred_fallthru
      _
    // Predicated region
    $region38: #{transformer_block_forward.5} parent=1 // pred_check
      _
    $region39: #{transformer_block_forward.5} parent=1 // pred_check_branch
      %447 = sbr.rel (0) target = $region41
    $region40: #{transformer_block_forward.5} parent=1 // pred_region
      %s449 = ssub.s32 512, 512
      %450 = vsyncadd [#allocation5], %s449
      %s451 = sshll.u32 [#allocation4], 4
      %s452 = int_to_ptr.vmem [resolvable:$true] %s451
      %457 = dma.vmem_to_hbm [thread:$0]  %s452, 512, %s7, [#allocation5], 128, 128, 8
    $region41: #{transformer_block_forward.5} parent=1 // pred_fallthru
      _
    // Predicated region
    $region42: #{transformer_block_forward.5} parent=1 // pred_check
      _
    $region43: #{transformer_block_forward.5} parent=1 // pred_check_branch
      %459 = sbr.rel (0) target = $region45
    $region44: #{transformer_block_forward.5} parent=1 // pred_region
      %460 = dma.done [#allocation5], 512
    $region45: #{transformer_block_forward.5} parent=1 // pred_fallthru
      _
    %461 = vsyncpa [#allocation5], 1

// kernel: transformer_block_forward.4
$region0: #{transformer_block_forward.4}
  #allocation0 [shape = 'u32[]', space=smem, size = 0x4, offset = 0x4, fixed_abs, tag = 'smem constant byte address 0x4 - core index']
  #allocation1 [shape = 'u32[144,128]{1,0:T(1,128)}', space=vmem, size = 0x12000, scoped, tag = 'internal scratch']
  #allocation2 [shape = 'f32[4,16,1]{2,1,0:T(8,128)}', space=vmem, size = 0x8000, scoped, tag = 'scratch operand']
  #allocation3 [shape = 'f32[4,16,1]{2,1,0:T(8,128)}', space=vmem, size = 0x8000, scoped, tag = 'scratch operand']
  #allocation4 [shape = 'f32[16,128]{1,0:T(8,128)}', space=vmem, size = 0x2000, scoped, tag = 'scratch operand']
  %s0 = inlined_call_operand.vmem [shape: f32[2,16,128], index: 0, kind: input, shape index: {}]
  %s1 = inlined_call_operand.vmem [shape: f32[2,16,128], index: 1, kind: input, shape index: {}]
  %s2 = inlined_call_operand.vmem [shape: f32[2,16,128], index: 2, kind: input, shape index: {}]
  %s3 = inlined_call_operand.vmem [shape: f32[2,16,128], index: 3, kind: input, shape index: {}]
  %s4 = inlined_call_operand.vmem [shape: f32[128,128], index: 4, kind: input, shape index: {}]
  %s5 = inlined_call_operand.vmem [shape: f32[1,128], index: 5, kind: input, shape index: {}]
  %s6 = inlined_call_operand.vmem [shape: f32[2,16,128], index: 6, kind: output, shape index: {}]
  %s7 = sld [smem:[#allocation0]]
  $region69: #{transformer_block_forward.4} parent=0
    _
  %s9 = ssub.s32 1, %s7
  %s10 = scalar_select 0, %s9, %s7
  loop: start=0, step=1, limit=4
  $region2: #{transformer_block_forward.4} parent=0 // loop_pre_header
    _
  $region3: #{transformer_block_forward.4} parent=0 // loop_header
    %s12 = sphi 0, %s16
    %p13 = scmp.ge.s32.totalorder %s12, 4
    %s19 = sphi 0, %s38
    %s20 = sphi 0, %s34
    %s21 = sphi 0, %s30
    %s22 = sphi 0, %s19
    %s23 = sphi 0, %s20
    %s24 = sphi 0, %s21
    %s25 = sphi 0, %s22
    %s26 = sphi 0, %s23
    %s27 = sphi 0, %s24
    %s43 = sphi 0, %s45
    %s46 = sphi 0, %s43
    %s47 = sphi 0, %s46
    %s63 = sphi 0, %s47
    %s71 = sphi 0, %s73
    %s74 = sphi 0, %s71
    %s75 = sphi 0, %s74
    %s91 = sphi 0, %s75
    %s99 = sphi 0, %s101
    %s102 = sphi 0, %s99
    %s103 = sphi 0, %s102
    %s119 = sphi 0, %s103
    %s127 = sphi 0, %s129
    %s130 = sphi 0, %s127
    %s131 = sphi 0, %s130
    %s147 = sphi 0, %s131
    %s151 = sphi 0, %s151
    %s153 = sphi 0, %s151
    %s154 = sphi 0, %s153
    %s168 = sphi 0, %s154
    %s172 = sphi 0, %s172
    %s174 = sphi 0, %s172
    %s175 = sphi 0, %s174
    %s189 = sphi 0, %s175
    %s197 = sphi 0, %s199
    %s200 = sphi 0, %s197
    %s201 = sphi 0, %s200
    %s217 = sphi 0, %s201
  $region4: #{transformer_block_forward.4} parent=0 // loop_header_branch
    %15 = sbr.rel (%p13) target = $region8
  $region5: #{transformer_block_forward.4} parent=0 // loop_body
    %s17 = ssub.s32 %s12, 1
    %s18 = ssub.s32 %s12, 2
    %s28 = sadd.s32 1, %s21
    %p29 = scmp.ge.s32.totalorder %s28, 1
    %s30 = scalar_select %p29, 0, %s28
    %s31 = sadd.s32 1, %s20
    %s32 = scalar_select %p29, %s31, %s20
    %p33 = scmp.ge.s32.totalorder %s32, 1
    %s34 = scalar_select %p33, 0, %s32
    %s35 = sadd.s32 1, %s19
    %s36 = scalar_select %p33, %s35, %s19
    %p37 = scmp.ge.s32.totalorder %s36, 2
    %s38 = scalar_select %p37, 0, %s36
    %s39 = ssub.s32 %s19, %s38
    %s40 = ssub.s32 %s20, %s34
    %s41 = sor.u32 %s39, %s40
    %p42 = scmp.eq.s32.totalorder %s41, 0
    %s44 = sadd.s32 %s43, 1
    %s45 = scalar_select %p42, %s43, %s44
    %p48 = pneg %p42
    %p49 = scmp.eq.s32.totalorder %s12, 1
    %p50 = por %p48, %p49
    %p51 = scmp.ne.s32.totalorder %s43, %s46
    %p52 = scmp.eq.s32.totalorder %s12, 0
    %p53 = por %p51, %p52
    %p54 = scmp.ne.s32.totalorder %s43, %s46
    %p55 = scmp.eq.s32.totalorder %s17, 1
    %p56 = por %p54, %p55
    %p57 = scmp.ne.s32.totalorder %s46, %s47
    %p58 = scmp.eq.s32.totalorder %s17, 0
    %p59 = por %p57, %p58
    %p60 = scmp.ne.s32.totalorder %s46, %s47
    %p61 = scmp.eq.s32.totalorder %s18, 1
    %p62 = por %p60, %p61
    %p64 = scmp.ne.s32.totalorder %s47, %s63
    %p65 = scmp.eq.s32.totalorder %s18, 0
    %p66 = por %p64, %p65
    %s67 = ssub.s32 %s19, %s38
    %s68 = ssub.s32 %s21, %s30
    %s69 = sor.u32 %s67, %s68
    %p70 = scmp.eq.s32.totalorder %s69, 0
    %s72 = sadd.s32 %s71, 1
    %s73 = scalar_select %p70, %s71, %s72
    %p76 = pneg %p70
    %p77 = scmp.eq.s32.totalorder %s12, 1
    %p78 = por %p76, %p77
    %p79 = scmp.ne.s32.totalorder %s71, %s74
    %p80 = scmp.eq.s32.totalorder %s12, 0
    %p81 = por %p79, %p80
    %p82 = scmp.ne.s32.totalorder %s71, %s74
    %p83 = scmp.eq.s32.totalorder %s17, 1
    %p84 = por %p82, %p83
    %p85 = scmp.ne.s32.totalorder %s74, %s75
    %p86 = scmp.eq.s32.totalorder %s17, 0
    %p87 = por %p85, %p86
    %p88 = scmp.ne.s32.totalorder %s74, %s75
    %p89 = scmp.eq.s32.totalorder %s18, 1
    %p90 = por %p88, %p89
    %p92 = scmp.ne.s32.totalorder %s75, %s91
    %p93 = scmp.eq.s32.totalorder %s18, 0
    %p94 = por %p92, %p93
    %s95 = ssub.s32 %s19, %s38
    %s96 = ssub.s32 %s21, %s30
    %s97 = sor.u32 %s95, %s96
    %p98 = scmp.eq.s32.totalorder %s97, 0
    %s100 = sadd.s32 %s99, 1
    %s101 = scalar_select %p98, %s99, %s100
    %p104 = pneg %p98
    %p105 = scmp.eq.s32.totalorder %s12, 1
    %p106 = por %p104, %p105
    %p107 = scmp.ne.s32.totalorder %s99, %s102
    %p108 = scmp.eq.s32.totalorder %s12, 0
    %p109 = por %p107, %p108
    %p110 = scmp.ne.s32.totalorder %s99, %s102
    %p111 = scmp.eq.s32.totalorder %s17, 1
    %p112 = por %p110, %p111
    %p113 = scmp.ne.s32.totalorder %s102, %s103
    %p114 = scmp.eq.s32.totalorder %s17, 0
    %p115 = por %p113, %p114
    %p116 = scmp.ne.s32.totalorder %s102, %s103
    %p117 = scmp.eq.s32.totalorder %s18, 1
    %p118 = por %p116, %p117
    %p120 = scmp.ne.s32.totalorder %s103, %s119
    %p121 = scmp.eq.s32.totalorder %s18, 0
    %p122 = por %p120, %p121
    %s123 = ssub.s32 %s19, %s38
    %s124 = ssub.s32 %s20, %s34
    %s125 = sor.u32 %s123, %s124
    %p126 = scmp.eq.s32.totalorder %s125, 0
    %s128 = sadd.s32 %s127, 1
    %s129 = scalar_select %p126, %s127, %s128
    %p132 = pneg %p126
    %p133 = scmp.eq.s32.totalorder %s12, 1
    %p134 = por %p132, %p133
    %p135 = scmp.ne.s32.totalorder %s127, %s130
    %p136 = scmp.eq.s32.totalorder %s12, 0
    %p137 = por %p135, %p136
    %p138 = scmp.ne.s32.totalorder %s127, %s130
    %p139 = scmp.eq.s32.totalorder %s17, 1
    %p140 = por %p138, %p139
    %p141 = scmp.ne.s32.totalorder %s130, %s131
    %p142 = scmp.eq.s32.totalorder %s17, 0
    %p143 = por %p141, %p142
    %p144 = scmp.ne.s32.totalorder %s130, %s131
    %p145 = scmp.eq.s32.totalorder %s18, 1
    %p146 = por %p144, %p145
    %p148 = scmp.ne.s32.totalorder %s131, %s147
    %p149 = scmp.eq.s32.totalorder %s18, 0
    %p150 = por %p148, %p149
    %s152 = sadd.s32 %s151, 1
    %p155 = scmp.eq.s32.totalorder %s12, 1
    %p156 = scmp.ne.s32.totalorder %s151, %s153
    %p157 = scmp.eq.s32.totalorder %s12, 0
    %p158 = por %p156, %p157
    %p159 = scmp.ne.s32.totalorder %s151, %s153
    %p160 = scmp.eq.s32.totalorder %s17, 1
    %p161 = por %p159, %p160
    %p162 = scmp.ne.s32.totalorder %s153, %s154
    %p163 = scmp.eq.s32.totalorder %s17, 0
    %p164 = por %p162, %p163
    %p165 = scmp.ne.s32.totalorder %s153, %s154
    %p166 = scmp.eq.s32.totalorder %s18, 1
    %p167 = por %p165, %p166
    %p169 = scmp.ne.s32.totalorder %s154, %s168
    %p170 = scmp.eq.s32.totalorder %s18, 0
    %p171 = por %p169, %p170
    %s173 = sadd.s32 %s172, 1
    %p176 = scmp.eq.s32.totalorder %s12, 1
    %p177 = scmp.ne.s32.totalorder %s172, %s174
    %p178 = scmp.eq.s32.totalorder %s12, 0
    %p179 = por %p177, %p178
    %p180 = scmp.ne.s32.totalorder %s172, %s174
    %p181 = scmp.eq.s32.totalorder %s17, 1
    %p182 = por %p180, %p181
    %p183 = scmp.ne.s32.totalorder %s174, %s175
    %p184 = scmp.eq.s32.totalorder %s17, 0
    %p185 = por %p183, %p184
    %p186 = scmp.ne.s32.totalorder %s174, %s175
    %p187 = scmp.eq.s32.totalorder %s18, 1
    %p188 = por %p186, %p187
    %p190 = scmp.ne.s32.totalorder %s175, %s189
    %p191 = scmp.eq.s32.totalorder %s18, 0
    %p192 = por %p190, %p191
    %s193 = ssub.s32 %s19, %s38
    %s194 = ssub.s32 %s20, %s34
    %s195 = sor.u32 %s193, %s194
    %p196 = scmp.eq.s32.totalorder %s195, 0
    %s198 = sadd.s32 %s197, 1
    %s199 = scalar_select %p196, %s197, %s198
    %p202 = pneg %p196
    %p203 = scmp.eq.s32.totalorder %s12, 1
    %p204 = por %p202, %p203
    %p205 = scmp.ne.s32.totalorder %s197, %s200
    %p206 = scmp.eq.s32.totalorder %s12, 0
    %p207 = por %p205, %p206
    %p208 = scmp.ne.s32.totalorder %s197, %s200
    %p209 = scmp.eq.s32.totalorder %s17, 1
    %p210 = por %p208, %p209
    %p211 = scmp.ne.s32.totalorder %s200, %s201
    %p212 = scmp.eq.s32.totalorder %s17, 0
    %p213 = por %p211, %p212
    %p214 = scmp.ne.s32.totalorder %s200, %s201
    %p215 = scmp.eq.s32.totalorder %s18, 1
    %p216 = por %p214, %p215
    %p218 = scmp.ne.s32.totalorder %s201, %s217
    %p219 = scmp.eq.s32.totalorder %s18, 0
    %p220 = por %p218, %p219
    %p221 = scmp.le.s32.totalorder 1, %s12
    %p222 = scmp.lt.s32.totalorder %s12, 3
    %p223 = pnand %p221, %p222
    %p224 = pneg %p223
    // Predicated region
    $region9: #{transformer_block_forward.4} parent=5 // pred_check
      _
    $region10: #{transformer_block_forward.4} parent=5 // pred_check_branch
      %226 = sbr.rel (%p223) target = $region12
    $region11: #{transformer_block_forward.4} parent=5 // pred_region
      %s227 = ssub.s32 %s12, 1
      // Predicated region
      $region13: #{transformer_block_forward.4} parent=11 // pred_check
        %p228 = pneg %p164
      $region14: #{transformer_block_forward.4} parent=11 // pred_check_branch
        %230 = sbr.rel (%p228) target = $region16
      $region15: #{transformer_block_forward.4} parent=11 // pred_region
        _
      $region16: #{transformer_block_forward.4} parent=11 // pred_fallthru
        _
      // Predicated region
      $region17: #{transformer_block_forward.4} parent=11 // pred_check
        %p231 = pneg %p185
      $region18: #{transformer_block_forward.4} parent=11 // pred_check_branch
        %233 = sbr.rel (%p231) target = $region20
      $region19: #{transformer_block_forward.4} parent=11 // pred_region
        _
      $region20: #{transformer_block_forward.4} parent=11 // pred_fallthru
        _
    $region12: #{transformer_block_forward.4} parent=5 // pred_fallthru
      _
    %p234 = scmp.lt.s32.totalorder %s12, 2
    // Predicated region
    $region21: #{transformer_block_forward.4} parent=5 // pred_check
      %p235 = pneg %p234
    $region22: #{transformer_block_forward.4} parent=5 // pred_check_branch
      %237 = sbr.rel (%p235) target = $region24
    $region23: #{transformer_block_forward.4} parent=5 // pred_region
      // Predicated region
      $region25: #{transformer_block_forward.4} parent=23 // pred_check
        %p238 = pneg %p53
      $region26: #{transformer_block_forward.4} parent=23 // pred_check_branch
        %240 = sbr.rel (%p238) target = $region28
      $region27: #{transformer_block_forward.4} parent=23 // pred_region
        %s241 = smul.u32 2, %s20
        %p242 = scmp.lt.s32.totalorder %s19, 1
        %s243 = scalar_select %p242, %s19, 1
        %p244 = scmp.lt.s32.totalorder %s241, 1
        %s245 = scalar_select %p244, %s241, 1
        %s246 = smul.addr %s243, 2
        %s247 = sadd.s32 %s245, %s246
        %s248 = smul.addr %s247, 8
        %s249 = scalar_lea.vmem %s0, %s248
        %s250 = smul.u32 2, %s20
      $region28: #{transformer_block_forward.4} parent=23 // pred_fallthru
        _
      // Predicated region
      $region29: #{transformer_block_forward.4} parent=23 // pred_check
        %p251 = pneg %p81
      $region30: #{transformer_block_forward.4} parent=23 // pred_check_branch
        %253 = sbr.rel (%p251) target = $region32
      $region31: #{transformer_block_forward.4} parent=23 // pred_region
        %s254 = smul.u32 2, %s21
        %p255 = scmp.lt.s32.totalorder %s19, 1
        %s256 = scalar_select %p255, %s19, 1
        %p257 = scmp.lt.s32.totalorder %s254, 1
        %s258 = scalar_select %p257, %s254, 1
        %s259 = smul.addr %s256, 2
        %s260 = sadd.s32 %s258, %s259
        %s261 = smul.addr %s260, 8
        %s262 = scalar_lea.vmem %s1, %s261
        %s263 = smul.u32 2, %s21
      $region32: #{transformer_block_forward.4} parent=23 // pred_fallthru
        _
      // Predicated region
      $region33: #{transformer_block_forward.4} parent=23 // pred_check
        %p264 = pneg %p109
      $region34: #{transformer_block_forward.4} parent=23 // pred_check_branch
        %266 = sbr.rel (%p264) target = $region36
      $region35: #{transformer_block_forward.4} parent=23 // pred_region
        %s267 = smul.u32 2, %s21
        %p268 = scmp.lt.s32.totalorder %s19, 1
        %s269 = scalar_select %p268, %s19, 1
        %p270 = scmp.lt.s32.totalorder %s267, 1
        %s271 = scalar_select %p270, %s267, 1
        %s272 = smul.addr %s269, 2
        %s273 = sadd.s32 %s271, %s272
        %s274 = smul.addr %s273, 8
        %s275 = scalar_lea.vmem %s2, %s274
        %s276 = smul.u32 2, %s21
      $region36: #{transformer_block_forward.4} parent=23 // pred_fallthru
        _
      // Predicated region
      $region37: #{transformer_block_forward.4} parent=23 // pred_check
        %p277 = pneg %p137
      $region38: #{transformer_block_forward.4} parent=23 // pred_check_branch
        %279 = sbr.rel (%p277) target = $region40
      $region39: #{transformer_block_forward.4} parent=23 // pred_region
        %s280 = smul.u32 2, %s20
        %p281 = scmp.lt.s32.totalorder %s19, 1
        %s282 = scalar_select %p281, %s19, 1
        %p283 = scmp.lt.s32.totalorder %s280, 1
        %s284 = scalar_select %p283, %s280, 1
        %s285 = smul.addr %s282, 2
        %s286 = sadd.s32 %s284, %s285
        %s287 = smul.addr %s286, 8
        %s288 = scalar_lea.vmem %s3, %s287
        %s289 = smul.u32 2, %s20
      $region40: #{transformer_block_forward.4} parent=23 // pred_fallthru
        _
    $region24: #{transformer_block_forward.4} parent=5 // pred_fallthru
      _
    %p290 = scmp.le.s32.totalorder 1, %s12
    %p291 = scmp.lt.s32.totalorder %s12, 3
    %p292 = pnand %p290, %p291
    %p293 = pneg %p292
    // Predicated region
    $region41: #{transformer_block_forward.4} parent=5 // pred_check
      _
    $region42: #{transformer_block_forward.4} parent=5 // pred_check_branch
      %295 = sbr.rel (%p292) target = $region44
    $region43: #{transformer_block_forward.4} parent=5 // pred_region
      %s296 = ssub.s32 %s12, 1
      %s297 = smul.u32 2, %s23
      %p298 = scmp.lt.s32.totalorder %s22, 1
      %s299 = scalar_select %p298, %s22, 1
      %p300 = scmp.lt.s32.totalorder %s297, 1
      %s301 = scalar_select %p300, %s297, 1
      %s302 = smul.addr %s299, 2
      %s303 = sadd.s32 %s301, %s302
      %s304 = smul.addr %s303, 8
      %s305 = scalar_lea.vmem %s0, %s304
      %p306 = pneg %p59
      %p307 = pneg %p56
      %s308 = smul.u32 2, %s24
      %p309 = scmp.lt.s32.totalorder %s22, 1
      %s310 = scalar_select %p309, %s22, 1
      %p311 = scmp.lt.s32.totalorder %s308, 1
      %s312 = scalar_select %p311, %s308, 1
      %s313 = smul.addr %s310, 2
      %s314 = sadd.s32 %s312, %s313
      %s315 = smul.addr %s314, 8
      %s316 = scalar_lea.vmem %s1, %s315
      %p317 = pneg %p87
      %p318 = pneg %p84
      %s319 = smul.u32 2, %s24
      %p320 = scmp.lt.s32.totalorder %s22, 1
      %s321 = scalar_select %p320, %s22, 1
      %p322 = scmp.lt.s32.totalorder %s319, 1
      %s323 = scalar_select %p322, %s319, 1
      %s324 = smul.addr %s321, 2
      %s325 = sadd.s32 %s323, %s324
      %s326 = smul.addr %s325, 8
      %s327 = scalar_lea.vmem %s2, %s326
      %p328 = pneg %p115
      %p329 = pneg %p112
      %s330 = smul.u32 2, %s23
      %p331 = scmp.lt.s32.totalorder %s22, 1
      %s332 = scalar_select %p331, %s22, 1
      %p333 = scmp.lt.s32.totalorder %s330, 1
      %s334 = scalar_select %p333, %s330, 1
      %s335 = smul.addr %s332, 2
      %s336 = sadd.s32 %s334, %s335
      %s337 = smul.addr %s336, 8
      %s338 = scalar_lea.vmem %s3, %s337
      %p339 = pneg %p143
      %p340 = pneg %p140
      %p341 = pneg %p164
      %p342 = pneg %p161
      %p343 = pneg %p185
      %p344 = pneg %p182
      %p345 = pneg %p213
      %p346 = pneg %p210
      %s347 = smul.u32 2, %s23
      %p348 = scmp.lt.s32.totalorder %s22, 1
      %s349 = scalar_select %p348, %s22, 1
      %p350 = scmp.lt.s32.totalorder %s347, 1
      %s351 = scalar_select %p350, %s347, 1
      %s352 = smul.addr %s349, 2
      %s353 = sadd.s32 %s351, %s352
      %s354 = smul.addr %s353, 8
      %s355 = scalar_lea.vmem %s6, %s354
      %s356 = smul.u32 2, %s23
      %p357 = scmp.lt.s32.totalorder %s22, 1
      %s358 = scalar_select %p357, %s22, 1
      %p359 = scmp.lt.s32.totalorder %s356, 1
      %s360 = scalar_select %p359, %s356, 1
      %s361 = smul.addr %s358, 2
      %s362 = sadd.s32 %s360, %s361
      %s363 = smul.addr %s362, 8
      %s364 = scalar_lea.vmem %s0, %s363
      %s365 = smul.u32 2, %s23
      %s366 = smul.u32 2, %s24
      %p367 = scmp.lt.s32.totalorder %s22, 1
      %s368 = scalar_select %p367, %s22, 1
      %p369 = scmp.lt.s32.totalorder %s366, 1
      %s370 = scalar_select %p369, %s366, 1
      %s371 = smul.addr %s368, 2
      %s372 = sadd.s32 %s370, %s371
      %s373 = smul.addr %s372, 8
      %s374 = scalar_lea.vmem %s1, %s373
      %s375 = smul.u32 2, %s24
      %s376 = smul.u32 2, %s24
      %p377 = scmp.lt.s32.totalorder %s22, 1
      %s378 = scalar_select %p377, %s22, 1
      %p379 = scmp.lt.s32.totalorder %s376, 1
      %s380 = scalar_select %p379, %s376, 1
      %s381 = smul.addr %s378, 2
      %s382 = sadd.s32 %s380, %s381
      %s383 = smul.addr %s382, 8
      %s384 = scalar_lea.vmem %s2, %s383
      %s385 = smul.u32 2, %s24
      %s386 = smul.u32 2, %s23
      %p387 = scmp.lt.s32.totalorder %s22, 1
      %s388 = scalar_select %p387, %s22, 1
      %p389 = scmp.lt.s32.totalorder %s386, 1
      %s390 = scalar_select %p389, %s386, 1
      %s391 = smul.addr %s388, 2
      %s392 = sadd.s32 %s390, %s391
      %s393 = smul.addr %s392, 8
      %s394 = scalar_lea.vmem %s3, %s393
      %s395 = smul.u32 2, %s23
      %s396 = smul.u32 2, %s23
      %p397 = scmp.lt.s32.totalorder %s22, 1
      %s398 = scalar_select %p397, %s22, 1
      %p399 = scmp.lt.s32.totalorder %s396, 1
      %s400 = scalar_select %p399, %s396, 1
      %s401 = smul.addr %s398, 2
      %s402 = sadd.s32 %s400, %s401
      %s403 = smul.addr %s402, 8
      %s404 = scalar_lea.vmem %s6, %s403
      %s405 = smul.u32 2, %s23
      %s406 = smul.u32 %s23, 16
      %s407 = smul.u32 %s24, 16
      %p408 = scmp.eq.s32.totalorder %s24, 0
      // Predicated region
      $region45: #{transformer_block_forward.4} parent=43 // pred_check
        %p409 = pneg %p408
      $region46: #{transformer_block_forward.4} parent=43 // pred_check_branch
        %411 = sbr.rel (%p409) target = $region48
      $region47: #{transformer_block_forward.4} parent=43 // pred_region
        %vm412 = vcmask 7168
        %413 = vst.msk [vmem:[#allocation2] sm:$0xff] %vm412, -1e+30
        %414 = vst.msk [vmem:[#allocation2 + $0x8] sm:$0xff] %vm412, -1e+30
        %415 = vst.msk [vmem:[#allocation2 + $0x10] sm:$0xff] %vm412, -1e+30
        %416 = vst.msk [vmem:[#allocation2 + $0x18] sm:$0xff] %vm412, -1e+30
        %417 = vst.msk [vmem:[#allocation2 + $0x20] sm:$0xff] %vm412, -1e+30
        %418 = vst.msk [vmem:[#allocation2 + $0x28] sm:$0xff] %vm412, -1e+30
        %419 = vst.msk [vmem:[#allocation2 + $0x30] sm:$0xff] %vm412, -1e+30
        %420 = vst.msk [vmem:[#allocation2 + $0x38] sm:$0xff] %vm412, -1e+30
        %421 = vst.msk [vmem:[#allocation3] sm:$0xff] %vm412, 0.0
        %422 = vst.msk [vmem:[#allocation3 + $0x8] sm:$0xff] %vm412, 0.0
        %423 = vst.msk [vmem:[#allocation3 + $0x10] sm:$0xff] %vm412, 0.0
        %424 = vst.msk [vmem:[#allocation3 + $0x18] sm:$0xff] %vm412, 0.0
        %425 = vst.msk [vmem:[#allocation3 + $0x20] sm:$0xff] %vm412, 0.0
        %426 = vst.msk [vmem:[#allocation3 + $0x28] sm:$0xff] %vm412, 0.0
        %427 = vst.msk [vmem:[#allocation3 + $0x30] sm:$0xff] %vm412, 0.0
        %428 = vst.msk [vmem:[#allocation3 + $0x38] sm:$0xff] %vm412, 0.0
        %429 = vst [vmem:[#allocation4] sm:$0xff] 0.0
        %430 = vst [vmem:[#allocation4 + $0x8] sm:$0xff] 0.0
      $region48: #{transformer_block_forward.4} parent=43 // pred_fallthru
        _
      %s431 = sadd.s32 %s406, 15
      %p432 = scmp.le.s32.totalorder %s407, %s431
      // Predicated region
      $region49: #{transformer_block_forward.4} parent=43 // pred_check
        %p433 = pneg %p432
      $region50: #{transformer_block_forward.4} parent=43 // pred_check_branch
        %435 = sbr.rel (%p433) target = $region52
      $region51: #{transformer_block_forward.4} parent=43 // pred_region
        %v436 = vlaneseq
        %v437 = vshrl.u32 %v436, 7
        %v438 = vadd.s32 %v437, 8
        %v439 = vstv %s406
        %v440 = vadd.s32 %v439, %v437
        %v441 = vadd.s32 %v439, %v438
        %v442 = vlaneseq
        %v443 = vand.u32 %v442, 127
        %v444 = vstv %s407
        %v445 = vadd.s32 %v444, %v443
        %vm446 = vcmp.gt.s32.totalorder %v445, %v440
        %vm447 = vcmp.gt.s32.totalorder %v445, %v441
        %v448 = vsel %vm446, -1e+09, 0.0
        %v449 = vsel %vm447, -1e+09, 0.0
        %v450 = vld [vmem:[%s364] sm:$0xff]
        %v451 = vld [vmem:[%s364 + $0x8] sm:$0xff]
        %v452 = vld [vmem:[%s374] sm:$0xff]
        %v453 = vld [vmem:[%s374 + $0x8] sm:$0xff]
        %v454 = vld [vmem:[%s384] sm:$0xff]
        %v455 = vld [vmem:[%s384 + $0x8] sm:$0xff]
        %vm456 = vcmask 261120
        %v458 = vsel %vm456, %v450, 0
        %v461 = vsel %vm456, %v451, 0
        %v464 = vsel %vm456, %v452, 0
        %v467 = vsel %vm456, %v453, 0
        %469 = vmatprep.subr.mxu0 0.0
        %470 = vmatpush1.xpose.msra.mxu0 %v464
        %471 = vmatprep.subr.mxu0 0.0
        %472 = vmatpush1.xpose.msra.mxu0 %v467
        %473 = vmatprep.subr.mxu0 0.0
        %474 = vmatpush1.xpose.msra.mxu0 0.0
        %475 = vmatprep.subr.mxu0 0.0
        %476 = vmatpush1.xpose.msra.mxu0 0.0
        %477 = vmatprep.subr.mxu0 0.0
        %478 = vmatpush1.xpose.msra.mxu0 0.0
        %479 = vmatprep.subr.mxu0 0.0
        %480 = vmatpush1.xpose.msra.mxu0 0.0
        %481 = vmatprep.subr.mxu0 0.0
        %482 = vmatpush1.xpose.msra.mxu0 0.0
        %483 = vmatprep.subr.mxu0 0.0
        %484 = vmatpush1.xpose.msra.mxu0 0.0
        %485 = vmatprep.subr.mxu0 0.0
        %486 = vmatpush1.xpose.msra.mxu0 0.0
        %487 = vmatprep.subr.mxu0 0.0
        %488 = vmatpush1.xpose.msra.mxu0 0.0
        %489 = vmatprep.subr.mxu0 0.0
        %490 = vmatpush1.xpose.msra.mxu0 0.0
        %491 = vmatprep.subr.mxu0 0.0
        %492 = vmatpush1.xpose.msra.mxu0 0.0
        %493 = vmatprep.subr.mxu0 0.0
        %494 = vmatpush1.xpose.msra.mxu0 0.0
        %495 = vmatprep.subr.mxu0 0.0
        %496 = vmatpush1.xpose.msra.mxu0 0.0
        %497 = vmatprep.subr.mxu0 0.0
        %498 = vmatpush1.xpose.msra.mxu0 0.0
        %499 = vmatprep.subr.mxu0 0.0
        %500 = vmatpush1.xpose.msra.mxu0 0.0
        %501 = vmatprep.subr.mxu0 0.0
        %502 = vmatpush1.xpose.msra.mxu0 0.0
        %503 = vmatprep.subr.mxu0 0.0
        %504 = vmatpush1.xpose.msra.mxu0 0.0
        %505 = vmatprep.subr.mxu0 0.0
        %506 = vmatpush1.xpose.msra.mxu0 0.0
        %507 = vmatprep.subr.mxu0 0.0
        %508 = vmatpush1.xpose.msra.mxu0 0.0
        %509 = vmatprep.subr.mxu0 0.0
        %510 = vmatpush1.xpose.msra.mxu0 0.0
        %511 = vmatprep.subr.mxu0 0.0
        %512 = vmatpush1.xpose.msra.mxu0 0.0
        %513 = vmatprep.subr.mxu0 0.0
        %514 = vmatpush1.xpose.msra.mxu0 0.0
        %515 = vmatprep.subr.mxu0 0.0
        %516 = vmatpush1.xpose.msra.mxu0 0.0
        %517 = vmatprep.subr.mxu0 0.0
        %518 = vmatpush1.xpose.msra.mxu0 0.0
        %519 = vmatprep.subr.mxu0 0.0
        %520 = vmatpush1.xpose.msra.mxu0 0.0
        %521 = vmatprep.subr.mxu0 0.0
        %522 = vmatpush1.xpose.msra.mxu0 0.0
        %523 = vmatprep.subr.mxu0 0.0
        %524 = vmatpush1.xpose.msra.mxu0 0.0
        %525 = vmatprep.subr.mxu0 0.0
        %526 = vmatpush1.xpose.msra.mxu0 0.0
        %527 = vmatprep.subr.mxu0 0.0
        %528 = vmatpush1.xpose.msra.mxu0 0.0
        %529 = vmatprep.subr.mxu0 0.0
        %530 = vmatpush1.xpose.msra.mxu0 0.0
        %531 = vmatprep.subr.mxu0 0.0
        %532 = vmatpush1.xpose.msra.mxu0 0.0
        %533 = vmatprep.mubr.f32.mxu0 0.0
        %534 = vmatmul.mubr.f32.gmra.mrb[0].mxu0 %v458
        %v535 = vpop.f32.mrb[0].mxu0
        %v536 = vadd.f32 %v448, %v535
        %v537 = vpop.f32.mrb[0].mxu0
        %538 = vmatprep.mubr.f32.mxu0 0.0
        %539 = vmatmul.mubr.f32.gmra.mrb[0].mxu0 %v461
        %v540 = vpop.f32.mrb[0].mxu0
        %v541 = vadd.f32 %v449, %v540
        %v542 = vpop.f32.mrb[0].mxu0
        %543 = vdwg.mxu0
        %v544 = vld [vmem:[#allocation2] sm:$0xff]
        %v545 = vld [vmem:[#allocation2 + $0x8] sm:$0xff]
        %vm546 = vcmask 130048
        %v547 = vsel %vm546, %v536, -inf
        %548 = vmax.xlane.f32.xlu0 %v547
        %v549 = vpop.xlane.xlu0 %548
        %v550 = vsel %vm546, %v541, -inf
        %551 = vmax.xlane.f32.xlu0 %v550
        %v552 = vpop.xlane.xlu0 %551
        %v553 = vmax.f32 %v544, %v549
        %v554 = vmax.f32 %v545, %v552
        %v555 = vsub.f32 %v544, %v553
        %v556 = vsub.f32 %v545, %v554
        %v557 = vmul.f32 %v555, 1.442695
        %v558 = vpow.pop %v557
        %v559 = vmul.f32 %v556, 1.442695
        %v560 = vpow.pop %v559
        %562 = vset.pattern.permute.xlu0 0
        %563 = vperm.xlu0 %562, %v553
        %v564 = vpop.permute.xlu0 %563
        %567 = vset.pattern.permute.xlu0 0
        %568 = vperm.xlu0 %567, %v554
        %v569 = vpop.permute.xlu0 %568
        %v571 = vsub.f32 %v536, %v564
        %v572 = vsub.f32 %v541, %v569
        %v573 = vmul.f32 %v571, 1.442695
        %v574 = vpow.pop %v573
        %v575 = vmul.f32 %v572, 1.442695
        %v576 = vpow.pop %v575
        %v577 = vld [vmem:[#allocation3] sm:$0xff]
        %v578 = vld [vmem:[#allocation3 + $0x8] sm:$0xff]
        %v579 = vmul.f32 %v558, %v577
        %v580 = vmul.f32 %v560, %v578
        %v581 = vsel %vm546, %v574, 0.0
        %582 = vadd.xlane.f32.xlu0 %v581
        %v583 = vpop.xlane.xlu0 %582
        %v584 = vsel %vm546, %v576, 0.0
        %585 = vadd.xlane.f32.xlu0 %v584
        %v586 = vpop.xlane.xlu0 %585
        %v587 = vadd.f32 %v579, %v583
        %v588 = vadd.f32 %v580, %v586
        %vm589 = vcmask 7168
        %590 = vst.msk [vmem:[#allocation3] sm:$0xff] %vm589, %v587
        %591 = vst.msk [vmem:[#allocation3 + $0x8] sm:$0xff] %vm589, %v588
        %v592 = vld [vmem:[#allocation4] sm:$0xff]
        %v593 = vld [vmem:[#allocation4 + $0x8] sm:$0xff]
        %595 = vset.pattern.permute.xlu0 0
        %596 = vperm.xlu0 %595, %v558
        %v597 = vpop.permute.xlu0 %596
        %600 = vset.pattern.permute.xlu0 0
        %601 = vperm.xlu0 %600, %v560
        %v602 = vpop.permute.xlu0 %601
        %v604 = vmul.f32 %v597, %v592
        %v605 = vmul.f32 %v602, %v593
        %v607 = vsel %vm546, %v574, 0
        %v610 = vsel %vm546, %v576, 0
        %612 = vmatprep.subr.mxu0 0.0
        %613 = vmatpush1.msra.mxu0 %v454
        %614 = vmatprep.subr.mxu0 0.0
        %615 = vmatpush1.msra.mxu0 %v455
        %616 = vmatprep.subr.mxu0 0.0
        %617 = vmatpush1.msra.mxu0 0.0
        %618 = vmatprep.subr.mxu0 0.0
        %619 = vmatpush1.msra.mxu0 0.0
        %620 = vmatprep.subr.mxu0 0.0
        %621 = vmatpush1.msra.mxu0 0.0
        %622 = vmatprep.subr.mxu0 0.0
        %623 = vmatpush1.msra.mxu0 0.0
        %624 = vmatprep.subr.mxu0 0.0
        %625 = vmatpush1.msra.mxu0 0.0
        %626 = vmatprep.subr.mxu0 0.0
        %627 = vmatpush1.msra.mxu0 0.0
        %628 = vmatprep.subr.mxu0 0.0
        %629 = vmatpush1.msra.mxu0 0.0
        %630 = vmatprep.subr.mxu0 0.0
        %631 = vmatpush1.msra.mxu0 0.0
        %632 = vmatprep.subr.mxu0 0.0
        %633 = vmatpush1.msra.mxu0 0.0
        %634 = vmatprep.subr.mxu0 0.0
        %635 = vmatpush1.msra.mxu0 0.0
        %636 = vmatprep.subr.mxu0 0.0
        %637 = vmatpush1.msra.mxu0 0.0
        %638 = vmatprep.subr.mxu0 0.0
        %639 = vmatpush1.msra.mxu0 0.0
        %640 = vmatprep.subr.mxu0 0.0
        %641 = vmatpush1.msra.mxu0 0.0
        %642 = vmatprep.subr.mxu0 0.0
        %643 = vmatpush1.msra.mxu0 0.0
        %644 = vmatprep.subr.mxu0 0.0
        %645 = vmatpush1.msra.mxu0 0.0
        %646 = vmatprep.subr.mxu0 0.0
        %647 = vmatpush1.msra.mxu0 0.0
        %648 = vmatprep.subr.mxu0 0.0
        %649 = vmatpush1.msra.mxu0 0.0
        %650 = vmatprep.subr.mxu0 0.0
        %651 = vmatpush1.msra.mxu0 0.0
        %652 = vmatprep.subr.mxu0 0.0
        %653 = vmatpush1.msra.mxu0 0.0
        %654 = vmatprep.subr.mxu0 0.0
        %655 = vmatpush1.msra.mxu0 0.0
        %656 = vmatprep.subr.mxu0 0.0
        %657 = vmatpush1.msra.mxu0 0.0
        %658 = vmatprep.subr.mxu0 0.0
        %659 = vmatpush1.msra.mxu0 0.0
        %660 = vmatprep.subr.mxu0 0.0
        %661 = vmatpush1.msra.mxu0 0.0
        %662 = vmatprep.subr.mxu0 0.0
        %663 = vmatpush1.msra.mxu0 0.0
        %664 = vmatprep.subr.mxu0 0.0
        %665 = vmatpush1.msra.mxu0 0.0
        %666 = vmatprep.subr.mxu0 0.0
        %667 = vmatpush1.msra.mxu0 0.0
        %668 = vmatprep.subr.mxu0 0.0
        %669 = vmatpush1.msra.mxu0 0.0
        %670 = vmatprep.subr.mxu0 0.0
        %671 = vmatpush1.msra.mxu0 0.0
        %672 = vmatprep.subr.mxu0 0.0
        %673 = vmatpush1.msra.mxu0 0.0
        %674 = vmatprep.subr.mxu0 0.0
        %675 = vmatpush1.msra.mxu0 0.0
        %676 = vmatprep.mubr.f32.mxu0 0.0
        %677 = vmatmul.mubr.f32.gmra.mrb[0].mxu0 %v607
        %v678 = vpop.f32.mrb[0].mxu0
        %v679 = vadd.f32 0.0, %v678
        %v680 = vpop.f32.mrb[0].mxu0
        %681 = vmatprep.mubr.f32.mxu0 0.0
        %682 = vmatmul.mubr.f32.gmra.mrb[0].mxu0 %v610
        %v683 = vpop.f32.mrb[0].mxu0
        %v684 = vadd.f32 0.0, %v683
        %v685 = vpop.f32.mrb[0].mxu0
        %686 = vdwg.mxu0
        %v687 = vadd.f32 %v604, %v679
        %v688 = vadd.f32 %v605, %v684
        %689 = vst.msk [vmem:[#allocation4] sm:$0xff] %vm456, %v687
        %690 = vst.msk [vmem:[#allocation4 + $0x8] sm:$0xff] %vm456, %v688
        %691 = vst.msk [vmem:[#allocation2] sm:$0xff] %vm589, %v553
        %692 = vst.msk [vmem:[#allocation2 + $0x8] sm:$0xff] %vm589, %v554
        %v693 = vld [vmem:[%s364] sm:$0xff]
        %v694 = vld [vmem:[%s364 + $0x8] sm:$0xff]
        %v695 = vld [vmem:[%s374] sm:$0xff]
        %v696 = vld [vmem:[%s374 + $0x8] sm:$0xff]
        %v697 = vld [vmem:[%s384] sm:$0xff]
        %v698 = vld [vmem:[%s384 + $0x8] sm:$0xff]
        %701 = vrot.lane.b32.xlu0 %v693, 96
        %v702 = vpop.permute.xlu0 %701
        %703 = vrot.lane.b32.xlu0 %v694, 96
        %v704 = vpop.permute.xlu0 %703
        %707 = vrot.lane.b32.xlu0 %v695, 96
        %v708 = vpop.permute.xlu0 %707
        %709 = vrot.lane.b32.xlu0 %v696, 96
        %v710 = vpop.permute.xlu0 %709
        %v711 = vsel %vm456, %v702, 0
        %v713 = vsel %vm456, %v704, 0
        %v715 = vsel %vm456, %v708, 0
        %v717 = vsel %vm456, %v710, 0
        %719 = vmatprep.subr.mxu0 0.0
        %720 = vmatpush1.xpose.msra.mxu0 %v715
        %721 = vmatprep.subr.mxu0 0.0
        %722 = vmatpush1.xpose.msra.mxu0 %v717
        %723 = vmatprep.subr.mxu0 0.0
        %724 = vmatpush1.xpose.msra.mxu0 0.0
        %725 = vmatprep.subr.mxu0 0.0
        %726 = vmatpush1.xpose.msra.mxu0 0.0
        %727 = vmatprep.subr.mxu0 0.0
        %728 = vmatpush1.xpose.msra.mxu0 0.0
        %729 = vmatprep.subr.mxu0 0.0
        %730 = vmatpush1.xpose.msra.mxu0 0.0
        %731 = vmatprep.subr.mxu0 0.0
        %732 = vmatpush1.xpose.msra.mxu0 0.0
        %733 = vmatprep.subr.mxu0 0.0
        %734 = vmatpush1.xpose.msra.mxu0 0.0
        %735 = vmatprep.subr.mxu0 0.0
        %736 = vmatpush1.xpose.msra.mxu0 0.0
        %737 = vmatprep.subr.mxu0 0.0
        %738 = vmatpush1.xpose.msra.mxu0 0.0
        %739 = vmatprep.subr.mxu0 0.0
        %740 = vmatpush1.xpose.msra.mxu0 0.0
        %741 = vmatprep.subr.mxu0 0.0
        %742 = vmatpush1.xpose.msra.mxu0 0.0
        %743 = vmatprep.subr.mxu0 0.0
        %744 = vmatpush1.xpose.msra.mxu0 0.0
        %745 = vmatprep.subr.mxu0 0.0
        %746 = vmatpush1.xpose.msra.mxu0 0.0
        %747 = vmatprep.subr.mxu0 0.0
        %748 = vmatpush1.xpose.msra.mxu0 0.0
        %749 = vmatprep.subr.mxu0 0.0
        %750 = vmatpush1.xpose.msra.mxu0 0.0
        %751 = vmatprep.subr.mxu0 0.0
        %752 = vmatpush1.xpose.msra.mxu0 0.0
        %753 = vmatprep.subr.mxu0 0.0
        %754 = vmatpush1.xpose.msra.mxu0 0.0
        %755 = vmatprep.subr.mxu0 0.0
        %756 = vmatpush1.xpose.msra.mxu0 0.0
        %757 = vmatprep.subr.mxu0 0.0
        %758 = vmatpush1.xpose.msra.mxu0 0.0
        %759 = vmatprep.subr.mxu0 0.0
        %760 = vmatpush1.xpose.msra.mxu0 0.0
        %761 = vmatprep.subr.mxu0 0.0
        %762 = vmatpush1.xpose.msra.mxu0 0.0
        %763 = vmatprep.subr.mxu0 0.0
        %764 = vmatpush1.xpose.msra.mxu0 0.0
        %765 = vmatprep.subr.mxu0 0.0
        %766 = vmatpush1.xpose.msra.mxu0 0.0
        %767 = vmatprep.subr.mxu0 0.0
        %768 = vmatpush1.xpose.msra.mxu0 0.0
        %769 = vmatprep.subr.mxu0 0.0
        %770 = vmatpush1.xpose.msra.mxu0 0.0
        %771 = vmatprep.subr.mxu0 0.0
        %772 = vmatpush1.xpose.msra.mxu0 0.0
        %773 = vmatprep.subr.mxu0 0.0
        %774 = vmatpush1.xpose.msra.mxu0 0.0
        %775 = vmatprep.subr.mxu0 0.0
        %776 = vmatpush1.xpose.msra.mxu0 0.0
        %777 = vmatprep.subr.mxu0 0.0
        %778 = vmatpush1.xpose.msra.mxu0 0.0
        %779 = vmatprep.subr.mxu0 0.0
        %780 = vmatpush1.xpose.msra.mxu0 0.0
        %781 = vmatprep.subr.mxu0 0.0
        %782 = vmatpush1.xpose.msra.mxu0 0.0
        %783 = vmatprep.mubr.f32.mxu0 0.0
        %784 = vmatmul.mubr.f32.gmra.mrb[0].mxu0 %v711
        %v785 = vpop.f32.mrb[0].mxu0
        %v786 = vadd.f32 %v448, %v785
        %v787 = vpop.f32.mrb[0].mxu0
        %788 = vmatprep.mubr.f32.mxu0 0.0
        %789 = vmatmul.mubr.f32.gmra.mrb[0].mxu0 %v713
        %v790 = vpop.f32.mrb[0].mxu0
        %v791 = vadd.f32 %v449, %v790
        %v792 = vpop.f32.mrb[0].mxu0
        %793 = vdwg.mxu0
        %s794 = scalar_lea.vmem [#allocation2], 16
        %v795 = vld [vmem:[%s794] sm:$0xff]
        %v796 = vld [vmem:[%s794 + $0x8] sm:$0xff]
        %v797 = vsel %vm546, %v786, -inf
        %798 = vmax.xlane.f32.xlu0 %v797
        %v799 = vpop.xlane.xlu0 %798
        %v800 = vsel %vm546, %v791, -inf
        %801 = vmax.xlane.f32.xlu0 %v800
        %v802 = vpop.xlane.xlu0 %801
        %v803 = vmax.f32 %v795, %v799
        %v804 = vmax.f32 %v796, %v802
        %v805 = vsub.f32 %v795, %v803
        %v806 = vsub.f32 %v796, %v804
        %v807 = vmul.f32 %v805, 1.442695
        %v808 = vpow.pop %v807
        %v809 = vmul.f32 %v806, 1.442695
        %v810 = vpow.pop %v809
        %812 = vset.pattern.permute.xlu0 0
        %813 = vperm.xlu0 %812, %v803
        %v814 = vpop.permute.xlu0 %813
        %817 = vset.pattern.permute.xlu0 0
        %818 = vperm.xlu0 %817, %v804
        %v819 = vpop.permute.xlu0 %818
        %v821 = vsub.f32 %v786, %v814
        %v822 = vsub.f32 %v791, %v819
        %v823 = vmul.f32 %v821, 1.442695
        %v824 = vpow.pop %v823
        %v825 = vmul.f32 %v822, 1.442695
        %v826 = vpow.pop %v825
        %s827 = scalar_lea.vmem [#allocation3], 16
        %v828 = vld [vmem:[%s827] sm:$0xff]
        %v829 = vld [vmem:[%s827 + $0x8] sm:$0xff]
        %v830 = vmul.f32 %v808, %v828
        %v831 = vmul.f32 %v810, %v829
        %v832 = vsel %vm546, %v824, 0.0
        %833 = vadd.xlane.f32.xlu0 %v832
        %v834 = vpop.xlane.xlu0 %833
        %v835 = vsel %vm546, %v826, 0.0
        %836 = vadd.xlane.f32.xlu0 %v835
        %v837 = vpop.xlane.xlu0 %836
        %v838 = vadd.f32 %v830, %v834
        %v839 = vadd.f32 %v831, %v837
        %840 = vst.msk [vmem:[%s827] sm:$0xff] %vm589, %v838
        %841 = vst.msk [vmem:[%s827 + $0x8] sm:$0xff] %vm589, %v839
        %v842 = vld [vmem:[#allocation4] sm:$0xff]
        %v843 = vld [vmem:[#allocation4 + $0x8] sm:$0xff]
        %845 = vset.pattern.permute.xlu0 0
        %846 = vperm.xlu0 %845, %v808
        %v847 = vpop.permute.xlu0 %846
        %850 = vset.pattern.permute.xlu0 0
        %851 = vperm.xlu0 %850, %v810
        %v852 = vpop.permute.xlu0 %851
        %v854 = vmul.f32 %v847, %v842
        %v855 = vmul.f32 %v852, %v843
        %858 = vrot.lane.b32.xlu0 %v697, 96
        %v859 = vpop.permute.xlu0 %858
        %860 = vrot.lane.b32.xlu0 %v698, 96
        %v861 = vpop.permute.xlu0 %860
        %v865 = vsel %vm546, %v824, 0
        %v868 = vsel %vm546, %v826, 0
        %870 = vmatprep.subr.mxu0 0.0
        %871 = vmatpush1.msra.mxu0 %v859
        %872 = vmatprep.subr.mxu0 0.0
        %873 = vmatpush1.msra.mxu0 %v861
        %874 = vmatprep.subr.mxu0 0.0
        %875 = vmatpush1.msra.mxu0 0.0
        %876 = vmatprep.subr.mxu0 0.0
        %877 = vmatpush1.msra.mxu0 0.0
        %878 = vmatprep.subr.mxu0 0.0
        %879 = vmatpush1.msra.mxu0 0.0
        %880 = vmatprep.subr.mxu0 0.0
        %881 = vmatpush1.msra.mxu0 0.0
        %882 = vmatprep.subr.mxu0 0.0
        %883 = vmatpush1.msra.mxu0 0.0
        %884 = vmatprep.subr.mxu0 0.0
        %885 = vmatpush1.msra.mxu0 0.0
        %886 = vmatprep.subr.mxu0 0.0
        %887 = vmatpush1.msra.mxu0 0.0
        %888 = vmatprep.subr.mxu0 0.0
        %889 = vmatpush1.msra.mxu0 0.0
        %890 = vmatprep.subr.mxu0 0.0
        %891 = vmatpush1.msra.mxu0 0.0
        %892 = vmatprep.subr.mxu0 0.0
        %893 = vmatpush1.msra.mxu0 0.0
        %894 = vmatprep.subr.mxu0 0.0
        %895 = vmatpush1.msra.mxu0 0.0
        %896 = vmatprep.subr.mxu0 0.0
        %897 = vmatpush1.msra.mxu0 0.0
        %898 = vmatprep.subr.mxu0 0.0
        %899 = vmatpush1.msra.mxu0 0.0
        %900 = vmatprep.subr.mxu0 0.0
        %901 = vmatpush1.msra.mxu0 0.0
        %902 = vmatprep.subr.mxu0 0.0
        %903 = vmatpush1.msra.mxu0 0.0
        %904 = vmatprep.subr.mxu0 0.0
        %905 = vmatpush1.msra.mxu0 0.0
        %906 = vmatprep.subr.mxu0 0.0
        %907 = vmatpush1.msra.mxu0 0.0
        %908 = vmatprep.subr.mxu0 0.0
        %909 = vmatpush1.msra.mxu0 0.0
        %910 = vmatprep.subr.mxu0 0.0
        %911 = vmatpush1.msra.mxu0 0.0
        %912 = vmatprep.subr.mxu0 0.0
        %913 = vmatpush1.msra.mxu0 0.0
        %914 = vmatprep.subr.mxu0 0.0
        %915 = vmatpush1.msra.mxu0 0.0
        %916 = vmatprep.subr.mxu0 0.0
        %917 = vmatpush1.msra.mxu0 0.0
        %918 = vmatprep.subr.mxu0 0.0
        %919 = vmatpush1.msra.mxu0 0.0
        %920 = vmatprep.subr.mxu0 0.0
        %921 = vmatpush1.msra.mxu0 0.0
        %922 = vmatprep.subr.mxu0 0.0
        %923 = vmatpush1.msra.mxu0 0.0
        %924 = vmatprep.subr.mxu0 0.0
        %925 = vmatpush1.msra.mxu0 0.0
        %926 = vmatprep.subr.mxu0 0.0
        %927 = vmatpush1.msra.mxu0 0.0
        %928 = vmatprep.subr.mxu0 0.0
        %929 = vmatpush1.msra.mxu0 0.0
        %930 = vmatprep.subr.mxu0 0.0
        %931 = vmatpush1.msra.mxu0 0.0
        %932 = vmatprep.subr.mxu0 0.0
        %933 = vmatpush1.msra.mxu0 0.0
        %934 = vmatprep.mubr.f32.mxu0 0.0
        %935 = vmatmul.mubr.f32.gmra.mrb[0].mxu0 %v865
        %v936 = vpop.f32.mrb[0].mxu0
        %v937 = vadd.f32 0.0, %v936
        %v938 = vpop.f32.mrb[0].mxu0
        %939 = vmatprep.mubr.f32.mxu0 0.0
        %940 = vmatmul.mubr.f32.gmra.mrb[0].mxu0 %v868
        %v941 = vpop.f32.mrb[0].mxu0
        %v942 = vadd.f32 0.0, %v941
        %v943 = vpop.f32.mrb[0].mxu0
        %944 = vdwg.mxu0
        %947 = vrot.lane.b32.xlu0 %v937, 32
        %v948 = vpop.permute.xlu0 %947
        %949 = vrot.lane.b32.xlu0 %v942, 32
        %v950 = vpop.permute.xlu0 %949
        %v953 = vadd.f32 %v854, %v948
        %v954 = vadd.f32 %v855, %v950
        %vm955 = vcmask 523520
        %956 = vst.msk [vmem:[#allocation4] sm:$0xff] %vm955, %v953
        %957 = vst.msk [vmem:[#allocation4 + $0x8] sm:$0xff] %vm955, %v954
        %958 = vst.msk [vmem:[%s794] sm:$0xff] %vm589, %v803
        %959 = vst.msk [vmem:[%s794 + $0x8] sm:$0xff] %vm589, %v804
        %v960 = vld [vmem:[%s364] sm:$0xff]
        %v961 = vld [vmem:[%s364 + $0x8] sm:$0xff]
        %v962 = vld [vmem:[%s374] sm:$0xff]
        %v963 = vld [vmem:[%s374 + $0x8] sm:$0xff]
        %v964 = vld [vmem:[%s384] sm:$0xff]
        %v965 = vld [vmem:[%s384 + $0x8] sm:$0xff]
        %968 = vrot.lane.b32.xlu0 %v960, 64
        %v969 = vpop.permute.xlu0 %968
        %970 = vrot.lane.b32.xlu0 %v961, 64
        %v971 = vpop.permute.xlu0 %970
        %974 = vrot.lane.b32.xlu0 %v962, 64
        %v975 = vpop.permute.xlu0 %974
        %976 = vrot.lane.b32.xlu0 %v963, 64
        %v977 = vpop.permute.xlu0 %976
        %v978 = vsel %vm456, %v969, 0
        %v980 = vsel %vm456, %v971, 0
        %v982 = vsel %vm456, %v975, 0
        %v984 = vsel %vm456, %v977, 0
        %986 = vmatprep.subr.mxu0 0.0
        %987 = vmatpush1.xpose.msra.mxu0 %v982
        %988 = vmatprep.subr.mxu0 0.0
        %989 = vmatpush1.xpose.msra.mxu0 %v984
        %990 = vmatprep.subr.mxu0 0.0
        %991 = vmatpush1.xpose.msra.mxu0 0.0
        %992 = vmatprep.subr.mxu0 0.0
        %993 = vmatpush1.xpose.msra.mxu0 0.0
        %994 = vmatprep.subr.mxu0 0.0
        %995 = vmatpush1.xpose.msra.mxu0 0.0
        %996 = vmatprep.subr.mxu0 0.0
        %997 = vmatpush1.xpose.msra.mxu0 0.0
        %998 = vmatprep.subr.mxu0 0.0
        %999 = vmatpush1.xpose.msra.mxu0 0.0
        %1000 = vmatprep.subr.mxu0 0.0
        %1001 = vmatpush1.xpose.msra.mxu0 0.0
        %1002 = vmatprep.subr.mxu0 0.0
        %1003 = vmatpush1.xpose.msra.mxu0 0.0
        %1004 = vmatprep.subr.mxu0 0.0
        %1005 = vmatpush1.xpose.msra.mxu0 0.0
        %1006 = vmatprep.subr.mxu0 0.0
        %1007 = vmatpush1.xpose.msra.mxu0 0.0
        %1008 = vmatprep.subr.mxu0 0.0
        %1009 = vmatpush1.xpose.msra.mxu0 0.0
        %1010 = vmatprep.subr.mxu0 0.0
        %1011 = vmatpush1.xpose.msra.mxu0 0.0
        %1012 = vmatprep.subr.mxu0 0.0
        %1013 = vmatpush1.xpose.msra.mxu0 0.0
        %1014 = vmatprep.subr.mxu0 0.0
        %1015 = vmatpush1.xpose.msra.mxu0 0.0
        %1016 = vmatprep.subr.mxu0 0.0
        %1017 = vmatpush1.xpose.msra.mxu0 0.0
        %1018 = vmatprep.subr.mxu0 0.0
        %1019 = vmatpush1.xpose.msra.mxu0 0.0
        %1020 = vmatprep.subr.mxu0 0.0
        %1021 = vmatpush1.xpose.msra.mxu0 0.0
        %1022 = vmatprep.subr.mxu0 0.0
        %1023 = vmatpush1.xpose.msra.mxu0 0.0
        %1024 = vmatprep.subr.mxu0 0.0
        %1025 = vmatpush1.xpose.msra.mxu0 0.0
        %1026 = vmatprep.subr.mxu0 0.0
        %1027 = vmatpush1.xpose.msra.mxu0 0.0
        %1028 = vmatprep.subr.mxu0 0.0
        %1029 = vmatpush1.xpose.msra.mxu0 0.0
        %1030 = vmatprep.subr.mxu0 0.0
        %1031 = vmatpush1.xpose.msra.mxu0 0.0
        %1032 = vmatprep.subr.mxu0 0.0
        %1033 = vmatpush1.xpose.msra.mxu0 0.0
        %1034 = vmatprep.subr.mxu0 0.0
        %1035 = vmatpush1.xpose.msra.mxu0 0.0
        %1036 = vmatprep.subr.mxu0 0.0
        %1037 = vmatpush1.xpose.msra.mxu0 0.0
        %1038 = vmatprep.subr.mxu0 0.0
        %1039 = vmatpush1.xpose.msra.mxu0 0.0
        %1040 = vmatprep.subr.mxu0 0.0
        %1041 = vmatpush1.xpose.msra.mxu0 0.0
        %1042 = vmatprep.subr.mxu0 0.0
        %1043 = vmatpush1.xpose.msra.mxu0 0.0
        %1044 = vmatprep.subr.mxu0 0.0
        %1045 = vmatpush1.xpose.msra.mxu0 0.0
        %1046 = vmatprep.subr.mxu0 0.0
        %1047 = vmatpush1.xpose.msra.mxu0 0.0
        %1048 = vmatprep.subr.mxu0 0.0
        %1049 = vmatpush1.xpose.msra.mxu0 0.0
        %1050 = vmatprep.mubr.f32.mxu0 0.0
        %1051 = vmatmul.mubr.f32.gmra.mrb[0].mxu0 %v978
        %v1052 = vpop.f32.mrb[0].mxu0
        %v1053 = vadd.f32 %v448, %v1052
        %v1054 = vpop.f32.mrb[0].mxu0
        %1055 = vmatprep.mubr.f32.mxu0 0.0
        %1056 = vmatmul.mubr.f32.gmra.mrb[0].mxu0 %v980
        %v1057 = vpop.f32.mrb[0].mxu0
        %v1058 = vadd.f32 %v449, %v1057
        %v1059 = vpop.f32.mrb[0].mxu0
        %1060 = vdwg.mxu0
        %s1061 = scalar_lea.vmem [#allocation2], 32
        %v1062 = vld [vmem:[%s1061] sm:$0xff]
        %v1063 = vld [vmem:[%s1061 + $0x8] sm:$0xff]
        %v1064 = vsel %vm546, %v1053, -inf
        %1065 = vmax.xlane.f32.xlu0 %v1064
        %v1066 = vpop.xlane.xlu0 %1065
        %v1067 = vsel %vm546, %v1058, -inf
        %1068 = vmax.xlane.f32.xlu0 %v1067
        %v1069 = vpop.xlane.xlu0 %1068
        %v1070 = vmax.f32 %v1062, %v1066
        %v1071 = vmax.f32 %v1063, %v1069
        %v1072 = vsub.f32 %v1062, %v1070
        %v1073 = vsub.f32 %v1063, %v1071
        %v1074 = vmul.f32 %v1072, 1.442695
        %v1075 = vpow.pop %v1074
        %v1076 = vmul.f32 %v1073, 1.442695
        %v1077 = vpow.pop %v1076
        %1079 = vset.pattern.permute.xlu0 0
        %1080 = vperm.xlu0 %1079, %v1070
        %v1081 = vpop.permute.xlu0 %1080
        %1084 = vset.pattern.permute.xlu0 0
        %1085 = vperm.xlu0 %1084, %v1071
        %v1086 = vpop.permute.xlu0 %1085
        %v1088 = vsub.f32 %v1053, %v1081
        %v1089 = vsub.f32 %v1058, %v1086
        %v1090 = vmul.f32 %v1088, 1.442695
        %v1091 = vpow.pop %v1090
        %v1092 = vmul.f32 %v1089, 1.442695
        %v1093 = vpow.pop %v1092
        %s1094 = scalar_lea.vmem [#allocation3], 32
        %v1095 = vld [vmem:[%s1094] sm:$0xff]
        %v1096 = vld [vmem:[%s1094 + $0x8] sm:$0xff]
        %v1097 = vmul.f32 %v1075, %v1095
        %v1098 = vmul.f32 %v1077, %v1096
        %v1099 = vsel %vm546, %v1091, 0.0
        %1100 = vadd.xlane.f32.xlu0 %v1099
        %v1101 = vpop.xlane.xlu0 %1100
        %v1102 = vsel %vm546, %v1093, 0.0
        %1103 = vadd.xlane.f32.xlu0 %v1102
        %v1104 = vpop.xlane.xlu0 %1103
        %v1105 = vadd.f32 %v1097, %v1101
        %v1106 = vadd.f32 %v1098, %v1104
        %1107 = vst.msk [vmem:[%s1094] sm:$0xff] %vm589, %v1105
        %1108 = vst.msk [vmem:[%s1094 + $0x8] sm:$0xff] %vm589, %v1106
        %v1109 = vld [vmem:[#allocation4] sm:$0xff]
        %v1110 = vld [vmem:[#allocation4 + $0x8] sm:$0xff]
        %1112 = vset.pattern.permute.xlu0 0
        %1113 = vperm.xlu0 %1112, %v1075
        %v1114 = vpop.permute.xlu0 %1113
        %1117 = vset.pattern.permute.xlu0 0
        %1118 = vperm.xlu0 %1117, %v1077
        %v1119 = vpop.permute.xlu0 %1118
        %v1121 = vmul.f32 %v1114, %v1109
        %v1122 = vmul.f32 %v1119, %v1110
        %1125 = vrot.lane.b32.xlu0 %v964, 64
        %v1126 = vpop.permute.xlu0 %1125
        %1127 = vrot.lane.b32.xlu0 %v965, 64
        %v1128 = vpop.permute.xlu0 %1127
        %v1132 = vsel %vm546, %v1091, 0
        %v1135 = vsel %vm546, %v1093, 0
        %1137 = vmatprep.subr.mxu0 0.0
        %1138 = vmatpush1.msra.mxu0 %v1126
        %1139 = vmatprep.subr.mxu0 0.0
        %1140 = vmatpush1.msra.mxu0 %v1128
        %1141 = vmatprep.subr.mxu0 0.0
        %1142 = vmatpush1.msra.mxu0 0.0
        %1143 = vmatprep.subr.mxu0 0.0
        %1144 = vmatpush1.msra.mxu0 0.0
        %1145 = vmatprep.subr.mxu0 0.0
        %1146 = vmatpush1.msra.mxu0 0.0
        %1147 = vmatprep.subr.mxu0 0.0
        %1148 = vmatpush1.msra.mxu0 0.0
        %1149 = vmatprep.subr.mxu0 0.0
        %1150 = vmatpush1.msra.mxu0 0.0
        %1151 = vmatprep.subr.mxu0 0.0
        %1152 = vmatpush1.msra.mxu0 0.0
        %1153 = vmatprep.subr.mxu0 0.0
        %1154 = vmatpush1.msra.mxu0 0.0
        %1155 = vmatprep.subr.mxu0 0.0
        %1156 = vmatpush1.msra.mxu0 0.0
        %1157 = vmatprep.subr.mxu0 0.0
        %1158 = vmatpush1.msra.mxu0 0.0
        %1159 = vmatprep.subr.mxu0 0.0
        %1160 = vmatpush1.msra.mxu0 0.0
        %1161 = vmatprep.subr.mxu0 0.0
        %1162 = vmatpush1.msra.mxu0 0.0
        %1163 = vmatprep.subr.mxu0 0.0
        %1164 = vmatpush1.msra.mxu0 0.0
        %1165 = vmatprep.subr.mxu0 0.0
        %1166 = vmatpush1.msra.mxu0 0.0
        %1167 = vmatprep.subr.mxu0 0.0
        %1168 = vmatpush1.msra.mxu0 0.0
        %1169 = vmatprep.subr.mxu0 0.0
        %1170 = vmatpush1.msra.mxu0 0.0
        %1171 = vmatprep.subr.mxu0 0.0
        %1172 = vmatpush1.msra.mxu0 0.0
        %1173 = vmatprep.subr.mxu0 0.0
        %1174 = vmatpush1.msra.mxu0 0.0
        %1175 = vmatprep.subr.mxu0 0.0
        %1176 = vmatpush1.msra.mxu0 0.0
        %1177 = vmatprep.subr.mxu0 0.0
        %1178 = vmatpush1.msra.mxu0 0.0
        %1179 = vmatprep.subr.mxu0 0.0
        %1180 = vmatpush1.msra.mxu0 0.0
        %1181 = vmatprep.subr.mxu0 0.0
        %1182 = vmatpush1.msra.mxu0 0.0
        %1183 = vmatprep.subr.mxu0 0.0
        %1184 = vmatpush1.msra.mxu0 0.0
        %1185 = vmatprep.subr.mxu0 0.0
        %1186 = vmatpush1.msra.mxu0 0.0
        %1187 = vmatprep.subr.mxu0 0.0
        %1188 = vmatpush1.msra.mxu0 0.0
        %1189 = vmatprep.subr.mxu0 0.0
        %1190 = vmatpush1.msra.mxu0 0.0
        %1191 = vmatprep.subr.mxu0 0.0
        %1192 = vmatpush1.msra.mxu0 0.0
        %1193 = vmatprep.subr.mxu0 0.0
        %1194 = vmatpush1.msra.mxu0 0.0
        %1195 = vmatprep.subr.mxu0 0.0
        %1196 = vmatpush1.msra.mxu0 0.0
        %1197 = vmatprep.subr.mxu0 0.0
        %1198 = vmatpush1.msra.mxu0 0.0
        %1199 = vmatprep.subr.mxu0 0.0
        %1200 = vmatpush1.msra.mxu0 0.0
        %1201 = vmatprep.mubr.f32.mxu0 0.0
        %1202 = vmatmul.mubr.f32.gmra.mrb[0].mxu0 %v1132
        %v1203 = vpop.f32.mrb[0].mxu0
        %v1204 = vadd.f32 0.0, %v1203
        %v1205 = vpop.f32.mrb[0].mxu0
        %1206 = vmatprep.mubr.f32.mxu0 0.0
        %1207 = vmatmul.mubr.f32.gmra.mrb[0].mxu0 %v1135
        %v1208 = vpop.f32.mrb[0].mxu0
        %v1209 = vadd.f32 0.0, %v1208
        %v1210 = vpop.f32.mrb[0].mxu0
        %1211 = vdwg.mxu0
        %1214 = vrot.lane.b32.xlu0 %v1204, 64
        %v1215 = vpop.permute.xlu0 %1214
        %1216 = vrot.lane.b32.xlu0 %v1209, 64
        %v1217 = vpop.permute.xlu0 %1216
        %v1220 = vadd.f32 %v1121, %v1215
        %v1221 = vadd.f32 %v1122, %v1217
        %vm1222 = vcmask 785920
        %1223 = vst.msk [vmem:[#allocation4] sm:$0xff] %vm1222, %v1220
        %1224 = vst.msk [vmem:[#allocation4 + $0x8] sm:$0xff] %vm1222, %v1221
        %1225 = vst.msk [vmem:[%s1061] sm:$0xff] %vm589, %v1070
        %1226 = vst.msk [vmem:[%s1061 + $0x8] sm:$0xff] %vm589, %v1071
        %v1227 = vld [vmem:[%s364] sm:$0xff]
        %v1228 = vld [vmem:[%s364 + $0x8] sm:$0xff]
        %v1229 = vld [vmem:[%s374] sm:$0xff]
        %v1230 = vld [vmem:[%s374 + $0x8] sm:$0xff]
        %v1231 = vld [vmem:[%s384] sm:$0xff]
        %v1232 = vld [vmem:[%s384 + $0x8] sm:$0xff]
        %1235 = vrot.lane.b32.xlu0 %v1227, 32
        %v1236 = vpop.permute.xlu0 %1235
        %1237 = vrot.lane.b32.xlu0 %v1228, 32
        %v1238 = vpop.permute.xlu0 %1237
        %1241 = vrot.lane.b32.xlu0 %v1229, 32
        %v1242 = vpop.permute.xlu0 %1241
        %1243 = vrot.lane.b32.xlu0 %v1230, 32
        %v1244 = vpop.permute.xlu0 %1243
        %v1245 = vsel %vm456, %v1236, 0
        %v1247 = vsel %vm456, %v1238, 0
        %v1249 = vsel %vm456, %v1242, 0
        %v1251 = vsel %vm456, %v1244, 0
        %1253 = vmatprep.subr.mxu0 0.0
        %1254 = vmatpush1.xpose.msra.mxu0 %v1249
        %1255 = vmatprep.subr.mxu0 0.0
        %1256 = vmatpush1.xpose.msra.mxu0 %v1251
        %1257 = vmatprep.subr.mxu0 0.0
        %1258 = vmatpush1.xpose.msra.mxu0 0.0
        %1259 = vmatprep.subr.mxu0 0.0
        %1260 = vmatpush1.xpose.msra.mxu0 0.0
        %1261 = vmatprep.subr.mxu0 0.0
        %1262 = vmatpush1.xpose.msra.mxu0 0.0
        %1263 = vmatprep.subr.mxu0 0.0
        %1264 = vmatpush1.xpose.msra.mxu0 0.0
        %1265 = vmatprep.subr.mxu0 0.0
        %1266 = vmatpush1.xpose.msra.mxu0 0.0
        %1267 = vmatprep.subr.mxu0 0.0
        %1268 = vmatpush1.xpose.msra.mxu0 0.0
        %1269 = vmatprep.subr.mxu0 0.0
        %1270 = vmatpush1.xpose.msra.mxu0 0.0
        %1271 = vmatprep.subr.mxu0 0.0
        %1272 = vmatpush1.xpose.msra.mxu0 0.0
        %1273 = vmatprep.subr.mxu0 0.0
        %1274 = vmatpush1.xpose.msra.mxu0 0.0
        %1275 = vmatprep.subr.mxu0 0.0
        %1276 = vmatpush1.xpose.msra.mxu0 0.0
        %1277 = vmatprep.subr.mxu0 0.0
        %1278 = vmatpush1.xpose.msra.mxu0 0.0
        %1279 = vmatprep.subr.mxu0 0.0
        %1280 = vmatpush1.xpose.msra.mxu0 0.0
        %1281 = vmatprep.subr.mxu0 0.0
        %1282 = vmatpush1.xpose.msra.mxu0 0.0
        %1283 = vmatprep.subr.mxu0 0.0
        %1284 = vmatpush1.xpose.msra.mxu0 0.0
        %1285 = vmatprep.subr.mxu0 0.0
        %1286 = vmatpush1.xpose.msra.mxu0 0.0
        %1287 = vmatprep.subr.mxu0 0.0
        %1288 = vmatpush1.xpose.msra.mxu0 0.0
        %1289 = vmatprep.subr.mxu0 0.0
        %1290 = vmatpush1.xpose.msra.mxu0 0.0
        %1291 = vmatprep.subr.mxu0 0.0
        %1292 = vmatpush1.xpose.msra.mxu0 0.0
        %1293 = vmatprep.subr.mxu0 0.0
        %1294 = vmatpush1.xpose.msra.mxu0 0.0
        %1295 = vmatprep.subr.mxu0 0.0
        %1296 = vmatpush1.xpose.msra.mxu0 0.0
        %1297 = vmatprep.subr.mxu0 0.0
        %1298 = vmatpush1.xpose.msra.mxu0 0.0
        %1299 = vmatprep.subr.mxu0 0.0
        %1300 = vmatpush1.xpose.msra.mxu0 0.0
        %1301 = vmatprep.subr.mxu0 0.0
        %1302 = vmatpush1.xpose.msra.mxu0 0.0
        %1303 = vmatprep.subr.mxu0 0.0
        %1304 = vmatpush1.xpose.msra.mxu0 0.0
        %1305 = vmatprep.subr.mxu0 0.0
        %1306 = vmatpush1.xpose.msra.mxu0 0.0
        %1307 = vmatprep.subr.mxu0 0.0
        %1308 = vmatpush1.xpose.msra.mxu0 0.0
        %1309 = vmatprep.subr.mxu0 0.0
        %1310 = vmatpush1.xpose.msra.mxu0 0.0
        %1311 = vmatprep.subr.mxu0 0.0
        %1312 = vmatpush1.xpose.msra.mxu0 0.0
        %1313 = vmatprep.subr.mxu0 0.0
        %1314 = vmatpush1.xpose.msra.mxu0 0.0
        %1315 = vmatprep.subr.mxu0 0.0
        %1316 = vmatpush1.xpose.msra.mxu0 0.0
        %1317 = vmatprep.mubr.f32.mxu0 0.0
        %1318 = vmatmul.mubr.f32.gmra.mrb[0].mxu0 %v1245
        %v1319 = vpop.f32.mrb[0].mxu0
        %v1320 = vadd.f32 %v448, %v1319
        %v1321 = vpop.f32.mrb[0].mxu0
        %1322 = vmatprep.mubr.f32.mxu0 0.0
        %1323 = vmatmul.mubr.f32.gmra.mrb[0].mxu0 %v1247
        %v1324 = vpop.f32.mrb[0].mxu0
        %v1325 = vadd.f32 %v449, %v1324
        %v1326 = vpop.f32.mrb[0].mxu0
        %1327 = vdwg.mxu0
        %s1328 = scalar_lea.vmem [#allocation2], 48
        %v1329 = vld [vmem:[%s1328] sm:$0xff]
        %v1330 = vld [vmem:[%s1328 + $0x8] sm:$0xff]
        %v1331 = vsel %vm546, %v1320, -inf
        %1332 = vmax.xlane.f32.xlu0 %v1331
        %v1333 = vpop.xlane.xlu0 %1332
        %v1334 = vsel %vm546, %v1325, -inf
        %1335 = vmax.xlane.f32.xlu0 %v1334
        %v1336 = vpop.xlane.xlu0 %1335
        %v1337 = vmax.f32 %v1329, %v1333
        %v1338 = vmax.f32 %v1330, %v1336
        %v1339 = vsub.f32 %v1329, %v1337
        %v1340 = vsub.f32 %v1330, %v1338
        %v1341 = vmul.f32 %v1339, 1.442695
        %v1342 = vpow.pop %v1341
        %v1343 = vmul.f32 %v1340, 1.442695
        %v1344 = vpow.pop %v1343
        %1346 = vset.pattern.permute.xlu0 0
        %1347 = vperm.xlu0 %1346, %v1337
        %v1348 = vpop.permute.xlu0 %1347
        %1351 = vset.pattern.permute.xlu0 0
        %1352 = vperm.xlu0 %1351, %v1338
        %v1353 = vpop.permute.xlu0 %1352
        %v1355 = vsub.f32 %v1320, %v1348
        %v1356 = vsub.f32 %v1325, %v1353
        %v1357 = vmul.f32 %v1355, 1.442695
        %v1358 = vpow.pop %v1357
        %v1359 = vmul.f32 %v1356, 1.442695
        %v1360 = vpow.pop %v1359
        %s1361 = scalar_lea.vmem [#allocation3], 48
        %v1362 = vld [vmem:[%s1361] sm:$0xff]
        %v1363 = vld [vmem:[%s1361 + $0x8] sm:$0xff]
        %v1364 = vmul.f32 %v1342, %v1362
        %v1365 = vmul.f32 %v1344, %v1363
        %v1366 = vsel %vm546, %v1358, 0.0
        %1367 = vadd.xlane.f32.xlu0 %v1366
        %v1368 = vpop.xlane.xlu0 %1367
        %v1369 = vsel %vm546, %v1360, 0.0
        %1370 = vadd.xlane.f32.xlu0 %v1369
        %v1371 = vpop.xlane.xlu0 %1370
        %v1372 = vadd.f32 %v1364, %v1368
        %v1373 = vadd.f32 %v1365, %v1371
        %1374 = vst.msk [vmem:[%s1361] sm:$0xff] %vm589, %v1372
        %1375 = vst.msk [vmem:[%s1361 + $0x8] sm:$0xff] %vm589, %v1373
        %v1376 = vld [vmem:[#allocation4] sm:$0xff]
        %v1377 = vld [vmem:[#allocation4 + $0x8] sm:$0xff]
        %1379 = vset.pattern.permute.xlu0 0
        %1380 = vperm.xlu0 %1379, %v1342
        %v1381 = vpop.permute.xlu0 %1380
        %1384 = vset.pattern.permute.xlu0 0
        %1385 = vperm.xlu0 %1384, %v1344
        %v1386 = vpop.permute.xlu0 %1385
        %v1388 = vmul.f32 %v1381, %v1376
        %v1389 = vmul.f32 %v1386, %v1377
        %1392 = vrot.lane.b32.xlu0 %v1231, 32
        %v1393 = vpop.permute.xlu0 %1392
        %1394 = vrot.lane.b32.xlu0 %v1232, 32
        %v1395 = vpop.permute.xlu0 %1394
        %v1399 = vsel %vm546, %v1358, 0
        %v1402 = vsel %vm546, %v1360, 0
        %1404 = vmatprep.subr.mxu0 0.0
        %1405 = vmatpush1.msra.mxu0 %v1393
        %1406 = vmatprep.subr.mxu0 0.0
        %1407 = vmatpush1.msra.mxu0 %v1395
        %1408 = vmatprep.subr.mxu0 0.0
        %1409 = vmatpush1.msra.mxu0 0.0
        %1410 = vmatprep.subr.mxu0 0.0
        %1411 = vmatpush1.msra.mxu0 0.0
        %1412 = vmatprep.subr.mxu0 0.0
        %1413 = vmatpush1.msra.mxu0 0.0
        %1414 = vmatprep.subr.mxu0 0.0
        %1415 = vmatpush1.msra.mxu0 0.0
        %1416 = vmatprep.subr.mxu0 0.0
        %1417 = vmatpush1.msra.mxu0 0.0
        %1418 = vmatprep.subr.mxu0 0.0
        %1419 = vmatpush1.msra.mxu0 0.0
        %1420 = vmatprep.subr.mxu0 0.0
        %1421 = vmatpush1.msra.mxu0 0.0
        %1422 = vmatprep.subr.mxu0 0.0
        %1423 = vmatpush1.msra.mxu0 0.0
        %1424 = vmatprep.subr.mxu0 0.0
        %1425 = vmatpush1.msra.mxu0 0.0
        %1426 = vmatprep.subr.mxu0 0.0
        %1427 = vmatpush1.msra.mxu0 0.0
        %1428 = vmatprep.subr.mxu0 0.0
        %1429 = vmatpush1.msra.mxu0 0.0
        %1430 = vmatprep.subr.mxu0 0.0
        %1431 = vmatpush1.msra.mxu0 0.0
        %1432 = vmatprep.subr.mxu0 0.0
        %1433 = vmatpush1.msra.mxu0 0.0
        %1434 = vmatprep.subr.mxu0 0.0
        %1435 = vmatpush1.msra.mxu0 0.0
        %1436 = vmatprep.subr.mxu0 0.0
        %1437 = vmatpush1.msra.mxu0 0.0
        %1438 = vmatprep.subr.mxu0 0.0
        %1439 = vmatpush1.msra.mxu0 0.0
        %1440 = vmatprep.subr.mxu0 0.0
        %1441 = vmatpush1.msra.mxu0 0.0
        %1442 = vmatprep.subr.mxu0 0.0
        %1443 = vmatpush1.msra.mxu0 0.0
        %1444 = vmatprep.subr.mxu0 0.0
        %1445 = vmatpush1.msra.mxu0 0.0
        %1446 = vmatprep.subr.mxu0 0.0
        %1447 = vmatpush1.msra.mxu0 0.0
        %1448 = vmatprep.subr.mxu0 0.0
        %1449 = vmatpush1.msra.mxu0 0.0
        %1450 = vmatprep.subr.mxu0 0.0
        %1451 = vmatpush1.msra.mxu0 0.0
        %1452 = vmatprep.subr.mxu0 0.0
        %1453 = vmatpush1.msra.mxu0 0.0
        %1454 = vmatprep.subr.mxu0 0.0
        %1455 = vmatpush1.msra.mxu0 0.0
        %1456 = vmatprep.subr.mxu0 0.0
        %1457 = vmatpush1.msra.mxu0 0.0
        %1458 = vmatprep.subr.mxu0 0.0
        %1459 = vmatpush1.msra.mxu0 0.0
        %1460 = vmatprep.subr.mxu0 0.0
        %1461 = vmatpush1.msra.mxu0 0.0
        %1462 = vmatprep.subr.mxu0 0.0
        %1463 = vmatpush1.msra.mxu0 0.0
        %1464 = vmatprep.subr.mxu0 0.0
        %1465 = vmatpush1.msra.mxu0 0.0
        %1466 = vmatprep.subr.mxu0 0.0
        %1467 = vmatpush1.msra.mxu0 0.0
        %1468 = vmatprep.mubr.f32.mxu0 0.0
        %1469 = vmatmul.mubr.f32.gmra.mrb[0].mxu0 %v1399
        %v1470 = vpop.f32.mrb[0].mxu0
        %v1471 = vadd.f32 0.0, %v1470
        %v1472 = vpop.f32.mrb[0].mxu0
        %1473 = vmatprep.mubr.f32.mxu0 0.0
        %1474 = vmatmul.mubr.f32.gmra.mrb[0].mxu0 %v1402
        %v1475 = vpop.f32.mrb[0].mxu0
        %v1476 = vadd.f32 0.0, %v1475
        %v1477 = vpop.f32.mrb[0].mxu0
        %1478 = vdwg.mxu0
        %1481 = vrot.lane.b32.xlu0 %v1471, 96
        %v1482 = vpop.permute.xlu0 %1481
        %1483 = vrot.lane.b32.xlu0 %v1476, 96
        %v1484 = vpop.permute.xlu0 %1483
        %v1487 = vadd.f32 %v1388, %v1482
        %v1488 = vadd.f32 %v1389, %v1484
        %vm1489 = vcmask 1048320
        %1490 = vst.msk [vmem:[#allocation4] sm:$0xff] %vm1489, %v1487
        %1491 = vst.msk [vmem:[#allocation4 + $0x8] sm:$0xff] %vm1489, %v1488
        %1492 = vst.msk [vmem:[%s1328] sm:$0xff] %vm589, %v1337
        %1493 = vst.msk [vmem:[%s1328 + $0x8] sm:$0xff] %vm589, %v1338
      $region52: #{transformer_block_forward.4} parent=43 // pred_fallthru
        _
      // Predicated region
      $region53: #{transformer_block_forward.4} parent=43 // pred_check
        %p1494 = pneg %p408
      $region54: #{transformer_block_forward.4} parent=43 // pred_check_branch
        %1496 = sbr.rel (%p1494) target = $region56
      $region55: #{transformer_block_forward.4} parent=43 // pred_region
        %v1497 = vld [vmem:[#allocation3] sm:$0xff]
        %v1498 = vld [vmem:[#allocation3 + $0x8] sm:$0xff]
        %v1499 = vrcp.pop %v1497
        %v1500 = vrcp.pop %v1498
        %v1501 = vld [vmem:[#allocation4] sm:$0xff]
        %v1502 = vld [vmem:[#allocation4 + $0x8] sm:$0xff]
        %1504 = vset.pattern.permute.xlu0 0
        %1505 = vperm.xlu0 %1504, %v1499
        %v1506 = vpop.permute.xlu0 %1505
        %1509 = vset.pattern.permute.xlu0 0
        %1510 = vperm.xlu0 %1509, %v1500
        %v1511 = vpop.permute.xlu0 %1510
        %v1513 = vmul.f32 %v1501, %v1506
        %v1514 = vmul.f32 %v1502, %v1511
        %s1515 = scalar_lea.vmem [#allocation3], 16
        %v1516 = vld [vmem:[%s1515] sm:$0xff]
        %v1517 = vld [vmem:[%s1515 + $0x8] sm:$0xff]
        %v1518 = vrcp.pop %v1516
        %v1519 = vrcp.pop %v1517
        %1521 = vset.pattern.permute.xlu0 0
        %1522 = vperm.xlu0 %1521, %v1518
        %v1523 = vpop.permute.xlu0 %1522
        %1526 = vset.pattern.permute.xlu0 0
        %1527 = vperm.xlu0 %1526, %v1519
        %v1528 = vpop.permute.xlu0 %1527
        %v1530 = vmul.f32 %v1501, %v1523
        %v1531 = vmul.f32 %v1502, %v1528
        %s1532 = scalar_lea.vmem [#allocation3], 32
        %v1533 = vld [vmem:[%s1532] sm:$0xff]
        %v1534 = vld [vmem:[%s1532 + $0x8] sm:$0xff]
        %v1535 = vrcp.pop %v1533
        %v1536 = vrcp.pop %v1534
        %1538 = vset.pattern.permute.xlu0 0
        %1539 = vperm.xlu0 %1538, %v1535
        %v1540 = vpop.permute.xlu0 %1539
        %1543 = vset.pattern.permute.xlu0 0
        %1544 = vperm.xlu0 %1543, %v1536
        %v1545 = vpop.permute.xlu0 %1544
        %v1547 = vmul.f32 %v1501, %v1540
        %v1548 = vmul.f32 %v1502, %v1545
        %s1549 = scalar_lea.vmem [#allocation3], 48
        %v1550 = vld [vmem:[%s1549] sm:$0xff]
        %v1551 = vld [vmem:[%s1549 + $0x8] sm:$0xff]
        %v1552 = vrcp.pop %v1550
        %v1553 = vrcp.pop %v1551
        %1555 = vset.pattern.permute.xlu0 0
        %1556 = vperm.xlu0 %1555, %v1552
        %v1557 = vpop.permute.xlu0 %1556
        %1560 = vset.pattern.permute.xlu0 0
        %1561 = vperm.xlu0 %1560, %v1553
        %v1562 = vpop.permute.xlu0 %1561
        %v1564 = vmul.f32 %v1501, %v1557
        %v1565 = vmul.f32 %v1502, %v1562
        %vm1566 = vcmask 261120
        %v1567 = vsel %vm1566, %v1513, %v1530
        %v1568 = vsel %vm1566, %v1514, %v1531
        %vm1569 = vcmask 523264
        %v1570 = vsel %vm1569, %v1567, %v1547
        %v1571 = vsel %vm1569, %v1568, %v1548
        %vm1572 = vcmask 785408
        %v1573 = vsel %vm1572, %v1570, %v1564
        %v1574 = vsel %vm1572, %v1571, %v1565
        %v1575 = vld [vmem:[%s4] sm:$0xff]
        %v1576 = vld [vmem:[%s4 + $0x8] sm:$0xff]
        %v1577 = vld [vmem:[%s4 + $0x10] sm:$0xff]
        %v1578 = vld [vmem:[%s4 + $0x18] sm:$0xff]
        %v1579 = vld [vmem:[%s4 + $0x20] sm:$0xff]
        %v1580 = vld [vmem:[%s4 + $0x28] sm:$0xff]
        %v1581 = vld [vmem:[%s4 + $0x30] sm:$0xff]
        %v1582 = vld [vmem:[%s4 + $0x38] sm:$0xff]
        %v1583 = vld [vmem:[%s4 + $0x40] sm:$0xff]
        %v1584 = vld [vmem:[%s4 + $0x48] sm:$0xff]
        %v1585 = vld [vmem:[%s4 + $0x50] sm:$0xff]
        %v1586 = vld [vmem:[%s4 + $0x58] sm:$0xff]
        %v1587 = vld [vmem:[%s4 + $0x60] sm:$0xff]
        %v1588 = vld [vmem:[%s4 + $0x68] sm:$0xff]
        %v1589 = vld [vmem:[%s4 + $0x70] sm:$0xff]
        %v1590 = vld [vmem:[%s4 + $0x78] sm:$0xff]
        %v1591 = vld [vmem:[%s5] sm:$0x1]
        %v1593 = vlaneseq
        %v1594 = vshrl.u32 %v1593, 7
        %v1595 = vsub.s32 0, %v1594
        %v1596 = vrot.slane %v1591, %v1595
        %1598 = vmatprep.subr.mxu0 0.0
        %1599 = vmatpush1.msra.mxu0 %v1575
        %1600 = vmatprep.subr.mxu0 0.0
        %1601 = vmatpush1.msra.mxu0 %v1576
        %1602 = vmatprep.subr.mxu0 0.0
        %1603 = vmatpush1.msra.mxu0 %v1577
        %1604 = vmatprep.subr.mxu0 0.0
        %1605 = vmatpush1.msra.mxu0 %v1578
        %1606 = vmatprep.subr.mxu0 0.0
        %1607 = vmatpush1.msra.mxu0 %v1579
        %1608 = vmatprep.subr.mxu0 0.0
        %1609 = vmatpush1.msra.mxu0 %v1580
        %1610 = vmatprep.subr.mxu0 0.0
        %1611 = vmatpush1.msra.mxu0 %v1581
        %1612 = vmatprep.subr.mxu0 0.0
        %1613 = vmatpush1.msra.mxu0 %v1582
        %1614 = vmatprep.subr.mxu0 0.0
        %1615 = vmatpush1.msra.mxu0 %v1583
        %1616 = vmatprep.subr.mxu0 0.0
        %1617 = vmatpush1.msra.mxu0 %v1584
        %1618 = vmatprep.subr.mxu0 0.0
        %1619 = vmatpush1.msra.mxu0 %v1585
        %1620 = vmatprep.subr.mxu0 0.0
        %1621 = vmatpush1.msra.mxu0 %v1586
        %1622 = vmatprep.subr.mxu0 0.0
        %1623 = vmatpush1.msra.mxu0 %v1587
        %1624 = vmatprep.subr.mxu0 0.0
        %1625 = vmatpush1.msra.mxu0 %v1588
        %1626 = vmatprep.subr.mxu0 0.0
        %1627 = vmatpush1.msra.mxu0 %v1589
        %1628 = vmatprep.subr.mxu0 0.0
        %1629 = vmatpush1.msra.mxu0 %v1590
        %1630 = vmatprep.subr.mxu0 0.0
        %1631 = vmatpush1.msra.mxu0 0.0
        %1632 = vmatprep.subr.mxu0 0.0
        %1633 = vmatpush1.msra.mxu0 0.0
        %1634 = vmatprep.subr.mxu0 0.0
        %1635 = vmatpush1.msra.mxu0 0.0
        %1636 = vmatprep.subr.mxu0 0.0
        %1637 = vmatpush1.msra.mxu0 0.0
        %1638 = vmatprep.subr.mxu0 0.0
        %1639 = vmatpush1.msra.mxu0 0.0
        %1640 = vmatprep.subr.mxu0 0.0
        %1641 = vmatpush1.msra.mxu0 0.0
        %1642 = vmatprep.subr.mxu0 0.0
        %1643 = vmatpush1.msra.mxu0 0.0
        %1644 = vmatprep.subr.mxu0 0.0
        %1645 = vmatpush1.msra.mxu0 0.0
        %1646 = vmatprep.subr.mxu0 0.0
        %1647 = vmatpush1.msra.mxu0 0.0
        %1648 = vmatprep.subr.mxu0 0.0
        %1649 = vmatpush1.msra.mxu0 0.0
        %1650 = vmatprep.subr.mxu0 0.0
        %1651 = vmatpush1.msra.mxu0 0.0
        %1652 = vmatprep.subr.mxu0 0.0
        %1653 = vmatpush1.msra.mxu0 0.0
        %1654 = vmatprep.subr.mxu0 0.0
        %1655 = vmatpush1.msra.mxu0 0.0
        %1656 = vmatprep.subr.mxu0 0.0
        %1657 = vmatpush1.msra.mxu0 0.0
        %1658 = vmatprep.subr.mxu0 0.0
        %1659 = vmatpush1.msra.mxu0 0.0
        %1660 = vmatprep.subr.mxu0 0.0
        %1661 = vmatpush1.msra.mxu0 0.0
        %1662 = vmatprep.mubr.f32.mxu0 0.0
        %1663 = vmatmul.mubr.f32.gmra.mrb[0].mxu0 %v1573
        %v1664 = vpop.f32.mrb[0].mxu0
        %v1665 = vadd.f32 %v1596, %v1664
        %v1666 = vpop.f32.mrb[0].mxu0
        %1667 = vmatprep.mubr.f32.mxu0 0.0
        %1668 = vmatmul.mubr.f32.gmra.mrb[0].mxu0 %v1574
        %v1669 = vpop.f32.mrb[0].mxu0
        %v1670 = vadd.f32 %v1596, %v1669
        %v1671 = vpop.f32.mrb[0].mxu0
        %1672 = vdwg.mxu0
        %v1673 = vld [vmem:[%s394] sm:$0xff]
        %v1674 = vld [vmem:[%s394 + $0x8] sm:$0xff]
        %v1675 = vadd.f32 %v1665, %v1673
        %v1676 = vadd.f32 %v1670, %v1674
        %1677 = vst [vmem:[%s404] sm:$0xff] %v1675
        %1678 = vst [vmem:[%s404 + $0x8] sm:$0xff] %v1676
      $region56: #{transformer_block_forward.4} parent=43 // pred_fallthru
        _
      %s1679 = smul.u32 2, %s23
      %p1680 = scmp.lt.s32.totalorder %s22, 1
      %s1681 = scalar_select %p1680, %s22, 1
      %p1682 = scmp.lt.s32.totalorder %s1679, 1
      %s1683 = scalar_select %p1682, %s1679, 1
      %s1684 = smul.addr %s1681, 2
      %s1685 = sadd.s32 %s1683, %s1684
      %s1686 = smul.addr %s1685, 8
      %s1687 = scalar_lea.vmem %s6, %s1686
      // Predicated region
      $region57: #{transformer_block_forward.4} parent=43 // pred_check
        %p1688 = pneg %p210
      $region58: #{transformer_block_forward.4} parent=43 // pred_check_branch
        %1690 = sbr.rel (%p1688) target = $region60
      $region59: #{transformer_block_forward.4} parent=43 // pred_region
        %s1691 = smul.u32 2, %s23
      $region60: #{transformer_block_forward.4} parent=43 // pred_fallthru
        _
    $region44: #{transformer_block_forward.4} parent=5 // pred_fallthru
      _
    %p1692 = scmp.le.s32.totalorder 2, %s12
    // Predicated region
    $region61: #{transformer_block_forward.4} parent=5 // pred_check
      %p1693 = pneg %p1692
    $region62: #{transformer_block_forward.4} parent=5 // pred_check_branch
      %1695 = sbr.rel (%p1693) target = $region64
    $region63: #{transformer_block_forward.4} parent=5 // pred_region
      %s1696 = ssub.s32 %s12, 2
      // Predicated region
      $region65: #{transformer_block_forward.4} parent=63 // pred_check
        %p1697 = pneg %p216
      $region66: #{transformer_block_forward.4} parent=63 // pred_check_branch
        %1699 = sbr.rel (%p1697) target = $region68
      $region67: #{transformer_block_forward.4} parent=63 // pred_region
        %s1700 = smul.u32 2, %s26
        %p1701 = scmp.lt.s32.totalorder %s25, 1
        %s1702 = scalar_select %p1701, %s25, 1
        %p1703 = scmp.lt.s32.totalorder %s1700, 1
        %s1704 = scalar_select %p1703, %s1700, 1
        %s1705 = smul.addr %s1702, 2
        %s1706 = sadd.s32 %s1704, %s1705
        %s1707 = smul.addr %s1706, 8
        %s1708 = scalar_lea.vmem %s6, %s1707
      $region68: #{transformer_block_forward.4} parent=63 // pred_fallthru
        _
    $region64: #{transformer_block_forward.4} parent=5 // pred_fallthru
      _
  $region6: #{transformer_block_forward.4} parent=0 // loop_footer
    %s16 = sadd.s32 1, %s12
  $region7: #{transformer_block_forward.4} parent=0 // loop_footer_branch
    %11 = sbr.rel target = $region3
  $region8: #{transformer_block_forward.4} parent=0 // loop_exit
    _

</llo_original>
